<compile_context>
chip_gen: v7x
topology: tpu7x:2x2x1
jax: 0.10.0
libtpu: 0.0.40
codegen_flags: <defaults>
</compile_context>

<pallas_src>
import functools

import jax
import jax.numpy as jnp
from jax.experimental import pallas as pl
from jax.experimental.pallas import tpu as pltpu

_BN_EPS = 1e-5
_LRELU_SLOPE = 0.2


# ------------------------------------------------------------------ helpers

def _pick_tile(n, max_tile, mult=16):
    """Largest divisor of n that is <= max_tile and a multiple of `mult`
    (falls back to multiples of 8, then to the full extent)."""
    if n <= max_tile:
        return n
    for m in (mult, 8):
        t = (max_tile // m) * m
        while t >= m:
            if n % t == 0:
                return t
            t -= m
    return n


@functools.lru_cache(maxsize=None)
def _vmem_limit_bytes():
    """Per-generation scoped VMEM limit: ~48 MiB on v7x (64 MiB physical),
    ~96 MiB on v5e/v6e (128 MiB physical); conservative fallback otherwise."""
    try:
        info = pltpu.get_tpu_info()
        cap = getattr(info, "vmem_capacity_bytes", None)
        if cap:
            return int(min(cap * 3 // 4, 100 * 1024 * 1024))
    except Exception:
        pass
    return 32 * 1024 * 1024


def _compiler_params(semantics):
    return pltpu.CompilerParams(
        dimension_semantics=semantics,
        vmem_limit_bytes=_vmem_limit_bytes(),
    )


def _leaky(y):
    return jnp.where(y > 0, y, _LRELU_SLOPE * y)


def _sigmoid(y):
    # numerically stable, single EUP tanh
    return 0.5 * (jnp.tanh(0.5 * y) + 1.0)


# ------------------------------------------------------------------ kernels

def _matmul_lrelu_kernel(a_ref, b_ref, o_ref):
    """bf16 [TM,K] @ bf16 [K,C] -> f32, fused LeakyReLU(0.2), bf16 store."""
    y = jnp.dot(a_ref[...], b_ref[...], preferred_element_type=jnp.float32)
    o_ref[...] = _leaky(y).astype(o_ref.dtype)


def _fused_conv_bn_lrelu_kernel(a_ref, b_ref, o_ref, y_ref, s_ref, q_ref, *,
                                tm, m_total):
    """One pallas_call per layer.  Grid (2, T), phase outermost:
       phase 0: matmul tile j -> f32 VMEM scratch y_ref, accumulate per-channel
                sum / sum-of-squares in resident (1,C) scratches.
       phase 1: BatchNorm (train stats, biased var, identity affine) +
                LeakyReLU(0.2) on scratch tile j, single bf16 store to HBM."""
    p = pl.program_id(0)
    j = pl.program_id(1)

    @pl.when(p == 0)
    def _matmul_phase():
        @pl.when(j == 0)
        def _init():
            s_ref[...] = jnp.zeros_like(s_ref)
            q_ref[...] = jnp.zeros_like(q_ref)

        y = jnp.dot(a_ref[...], b_ref[...], preferred_element_type=jnp.float32)
        r0 = pl.multiple_of(j * tm, tm)
        y_ref[pl.ds(r0, tm), :] = y
        s_ref[...] += jnp.sum(y, axis=0, keepdims=True)
        q_ref[...] += jnp.sum(y * y, axis=0, keepdims=True)

    @pl.when(p == 1)
    def _norm_phase():
        r0 = pl.multiple_of(j * tm, tm)
        y = y_ref[pl.ds(r0, tm), :]
        inv_m = 1.0 / float(m_total)
        mean = s_ref[...] * inv_m
        var = q_ref[...] * inv_m - mean * mean
        inv = jax.lax.rsqrt(var + _BN_EPS)
        o_ref[...] = _leaky((y - mean) * inv).astype(o_ref.dtype)


def _conv_bn_head_kernel(a_ref, b_ref, w5_ref, sel_ref, o_ref, *, m_total):
    """Fused tail: layer-4 matmul, BN(train stats) + LeakyReLU, final 2x2 conv
    (fold via per-row weights + selector matmul) and sigmoid.
       a: (M4,K) bf16, b: (K,C) bf16, w5: (M4,C) f32 row-tiled final weights,
       sel: (N,M4) f32 per-sample group selector, o: (N,1) f32."""
    y = jnp.dot(a_ref[...], b_ref[...], preferred_element_type=jnp.float32)  # (M4,C)
    inv_m = 1.0 / float(m_total)
    mean = jnp.sum(y, axis=0, keepdims=True) * inv_m
    var = jnp.sum(y * y, axis=0, keepdims=True) * inv_m - mean * mean
    yn = _leaky((y - mean) * jax.lax.rsqrt(var + _BN_EPS))                   # (M4,C)
    g = jnp.dot(sel_ref[...], yn * w5_ref[...],
                preferred_element_type=jnp.float32)                          # (N,C)
    s = jnp.sum(g, axis=1, keepdims=True)                                    # (N,1)
    o_ref[...] = _sigmoid(s).astype(o_ref.dtype)


# ------------------------------------------------------------------ wrappers

def conv_lrelu(a, b):
    """Layer 1: a [M,K] bf16 im2col, b [K,C] bf16 -> LeakyReLU(a@b) bf16 [M,C]."""
    M, K = a.shape
    _, C = b.shape
    tm = _pick_tile(M, 1024)
    return pl.pallas_call(
        _matmul_lrelu_kernel,
        grid=(M // tm,),
        in_specs=[pl.BlockSpec((tm, K), lambda i: (i, 0)),
                  pl.BlockSpec((K, C), lambda i: (0, 0))],      # weight resident
        out_specs=pl.BlockSpec((tm, C), lambda i: (i, 0)),
        out_shape=jax.ShapeDtypeStruct((M, C), jnp.bfloat16),
        compiler_params=_compiler_params(("parallel",)),
        cost_estimate=pl.CostEstimate(flops=2 * M * K * C, transcendentals=0,
                                      bytes_accessed=2 * (M * K + K * C + M * C)),
    )(a, b)


def fused_conv_bn_lrelu(cols, w):
    """Layers 2/3: cols [M,K] bf16, w [K,C] bf16 -> BN+LeakyReLU(cols@w) bf16.
    Whole layer's f32 pre-BN activation lives only in a VMEM scratch."""
    M, K = cols.shape
    _, C = w.shape
    # whole-layer f32 scratch + double-buffered tiles must fit VMEM
    assert M * C * 4 <= 16 * 1024 * 1024, \
        "activation too large for fused VMEM scratch; reduce batch"
    tm = _pick_tile(M, 1024)
    T = M // tm
    kernel = functools.partial(_fused_conv_bn_lrelu_kernel, tm=tm, m_total=M)
    return pl.pallas_call(
        kernel,
        grid=(2, T),   # phase outermost: all matmul tiles, then all normalizes
        in_specs=[pl.BlockSpec((tm, K), lambda p, j: ((1 - p) * j, 0)),
                  pl.BlockSpec((K, C), lambda p, j: (0, 0))],   # weight resident
        # phase 0 parks on block 0 (never written there); phase 1 writes block j
        out_specs=pl.BlockSpec((tm, C), lambda p, j: (p * j, 0)),
        out_shape=jax.ShapeDtypeStruct((M, C), jnp.bfloat16),
        scratch_shapes=[pltpu.VMEM((M, C), jnp.float32),   # whole-layer f32 y
                        pltpu.VMEM((1, C), jnp.float32),   # sum
                        pltpu.VMEM((1, C), jnp.float32)],  # sum of squares
        compiler_params=_compiler_params(("arbitrary", "arbitrary")),
        cost_estimate=pl.CostEstimate(flops=2 * M * K * C, transcendentals=0,
                                      bytes_accessed=2 * (M * K + K * C) + M * C),
    )(cols, w)


def conv_bn_head(cols, w4, w5_rows, sel):
    """Layer 4 + BN + LeakyReLU + final 2x2 conv + sigmoid in one call.
    cols [M4,K] bf16, w4 [K,C] bf16, w5_rows [M4,C] f32, sel [N,M4] f32 -> [N,1]."""
    M4, K = cols.shape
    _, C = w4.shape
    N = sel.shape[0]
    kernel = functools.partial(_conv_bn_head_kernel, m_total=M4)
    return pl.pallas_call(
        kernel,
        grid=(1,),
        in_specs=[pl.BlockSpec((M4, K), lambda i: (0, 0)),
                  pl.BlockSpec((K, C), lambda i: (0, 0)),
                  pl.BlockSpec((M4, C), lambda i: (0, 0)),
                  pl.BlockSpec((N, M4), lambda i: (0, 0))],
        out_specs=pl.BlockSpec((N, 1), lambda i: (0, 0)),
        out_shape=jax.ShapeDtypeStruct((N, 1), jnp.float32),
        compiler_params=_compiler_params(("arbitrary",)),
    )(cols, w4, w5_rows, sel)


# ------------------------------------------------------------------ glue

def im2col(x, k, stride, pad):
    """x: [N, H, W, C] -> ([N*Ho*Wo, k*k*C], N, Ho, Wo); K-order (kh, kw, C)."""
    N, H, W, C = x.shape
    xp = jnp.pad(x, ((0, 0), (pad, pad), (pad, pad), (0, 0)))
    Ho = (H + 2 * pad - k) // stride + 1
    Wo = (W + 2 * pad - k) // stride + 1
    cols = []
    for i in range(k):
        for j in range(k):
            cols.append(
                xp[:, i:i + (Ho - 1) * stride + 1:stride,
                      j:j + (Wo - 1) * stride + 1:stride, :]
            )
    patches = jnp.stack(cols, axis=3)          # [N, Ho, Wo, k*k, C]
    return patches.reshape(N * Ho * Wo, k * k * C), N, Ho, Wo


# ------------------------------------------------------------------ model

def init_params(key, ndf=8, nc=3):
    """Deterministic DCGAN-style init (normal, std=0.02), weights [kh,kw,Cin,Cout]."""
    ks = jax.random.split(key, 5)
    std = 0.02
    return {
        "w1": std * jax.random.normal(ks[0], (4, 4, nc,       ndf),     jnp.float32),
        "w2": std * jax.random.normal(ks[1], (4, 4, ndf,      ndf * 2), jnp.float32),
        "w3": std * jax.random.normal(ks[2], (4, 4, ndf * 2,  ndf * 4), jnp.float32),
        "w4": std * jax.random.normal(ks[3], (4, 4, ndf * 4,  ndf * 8), jnp.float32),
        "w5": std * jax.random.normal(ks[4], (2, 2, ndf * 8,  1),       jnp.float32),
    }


@jax.jit
def discriminator_forward(x_nchw, params):
    # NCHW (PyTorch convention) -> NHWC, bf16 for the MXU / halved HBM traffic.
    x = jnp.transpose(x_nchw, (0, 2, 3, 1)).astype(jnp.bfloat16)
    wbf = {k: v.astype(jnp.bfloat16) for k, v in params.items()}

    # Conv(nc->ndf, 4, 2, 1) + LeakyReLU(0.2)   (fused, parallel M grid)
    cols, N, Ho, Wo = im2col(x, 4, 2, 1)
    y = conv_lrelu(cols, wbf["w1"].reshape(-1, wbf["w1"].shape[-1]))
    x = y.reshape(N, Ho, Wo, -1)

    # Conv + BatchNorm + LeakyReLU, layers 2 and 3: single fused pallas_call
    for name in ("w2", "w3"):
        cols, N, Ho, Wo = im2col(x, 4, 2, 1)
        y = fused_conv_bn_lrelu(cols, wbf[name].reshape(-1, wbf[name].shape[-1]))
        x = y.reshape(N, Ho, Wo, -1)

    # Layer 4 conv + BN + LeakyReLU + final 2x2 conv + sigmoid: one fused call
    cols, N, Ho, Wo = im2col(x, 4, 2, 1)
    assert (Ho, Wo) == (2, 2), "final 2x2 conv expects a 2x2 map (32x32 input)"
    C4 = params["w4"].shape[-1]
    R = Ho * Wo                                               # 4 rows per sample
    # final-conv weight broadcast to one row per (sample, spatial) position
    w5_rows = jnp.tile(params["w5"].reshape(R, C4), (N, 1)).astype(jnp.float32)
    # selector: sel[n, n*R + r] = 1 -> per-sample sum over the 2x2 positions
    sel = jnp.repeat(jnp.eye(N, dtype=jnp.float32), R, axis=1)
    out = conv_bn_head(cols, wbf["w4"].reshape(-1, C4), w5_rows, sel)   # [N,1]

    # .view(-1, 1).squeeze(1)  ->  [N]
    return out.reshape(-1)


if __name__ == "__main__":
    key = jax.random.PRNGKey(0)
    k_inp, k_par = jax.random.split(key)

    ndf, nc = 8, 3
    batch, H, W = 2, 32, 32   # 32 -> 16 -> 8 -> 4 -> 2 -> (2x2 conv) -> 1

    x = jax.random.normal(k_inp, (batch, nc, H, W), jnp.float32)
    params = init_params(k_par, ndf=ndf, nc=nc)

    out = discriminator_forward(x, params)
    out = jax.block_until_ready(out)

    assert out.shape == (batch,), out.shape
    assert bool(jnp.all(jnp.isfinite(out)))
    print("KERNEL_OK")
</pallas_src>

<mosaic_0001>
module attributes {stable_mosaic.version = 11 : i64} {
  func.func @_matmul_lrelu_kernel(%arg0: i32, %arg1: memref<512x48xbf16, #tpu.memory_space<vmem>>, %arg2: memref<48x8xbf16, #tpu.memory_space<vmem>>, %arg3: memref<512x8xbf16, #tpu.memory_space<vmem>>) attributes {dimension_semantics = [#tpu.dimension_semantics<parallel>], iteration_bounds = array<i64: 1>, scalar_prefetch = 0 : i64, scratch_operands = 0 : i64, tpu.core_type = #tpu.core_type<tc>, window_params = [{transform_indices = @transform_0, window_bounds = array<i64: 512, 48>}, {pipeline_mode = #tpu.pipeline_mode<synchronous>, transform_indices = @transform_1, window_bounds = array<i64: 48, 8>}, {transform_indices = @transform_2, window_bounds = array<i64: 512, 8>}]} {
    %c0 = arith.constant 0 : index
    %c0_0 = arith.constant 0 : index
    %0 = vector.load %arg1[%c0, %c0_0] : memref<512x48xbf16, #tpu.memory_space<vmem>>, vector<512x48xbf16>
    %c0_1 = arith.constant 0 : index
    %c0_2 = arith.constant 0 : index
    %1 = vector.load %arg2[%c0_1, %c0_2] : memref<48x8xbf16, #tpu.memory_space<vmem>>, vector<48x8xbf16>
    %cst = arith.constant dense<0.000000e+00> : vector<512x8xf32>
    %2 = tpu.matmul %0, %1, %cst {dimension_numbers = #tpu.dot_dimension_numbers<[1], [0], [0], [1], [0, 0, 1, 1], [], []>} : vector<512x48xbf16>, vector<48x8xbf16>, vector<512x8xf32> -> vector<512x8xf32>
    %cst_3 = arith.constant 0.000000e+00 : f32
    %3 = vector.broadcast %cst_3 : f32 to vector<512x8xf32>
    %4 = arith.cmpf ogt, %2, %3 : vector<512x8xf32>
    %cst_4 = arith.constant 2.000000e-01 : f32
    %5 = vector.broadcast %cst_4 : f32 to vector<512x8xf32>
    %6 = arith.mulf %5, %2 : vector<512x8xf32>
    %7 = arith.select %4, %2, %6 : vector<512x8xi1>, vector<512x8xf32>
    %8 = arith.truncf %7 : vector<512x8xf32> to vector<512x8xbf16>
    %c0_5 = arith.constant 0 : index
    %c0_6 = arith.constant 0 : index
    %9 = vector.load %arg3[%c0_5, %c0_6] : memref<512x8xbf16, #tpu.memory_space<vmem>>, vector<512x8xbf16>
    tpu.vector_store %arg3[%c0_5, %c0_6], %8 {strides = array<i32>} : memref<512x8xbf16, #tpu.memory_space<vmem>>, vector<512x8xbf16>,
    return
  }
  func.func @transform_0(%arg0: i32) -> (i32, i32) {
    %c0_i32 = arith.constant 0 : i32
    %c0_i32_0 = arith.constant 0 : i32
    return %arg0, %c0_i32 : i32, i32
  }
  func.func @transform_1(%arg0: i32) -> (i32, i32) {
    %c0_i32 = arith.constant 0 : i32
    %c0_i32_0 = arith.constant 0 : i32
    %c0_i32_1 = arith.constant 0 : i32
    return %c0_i32, %c0_i32_0 : i32, i32
  }
  func.func @transform_2(%arg0: i32) -> (i32, i32) {
    %c0_i32 = arith.constant 0 : i32
    %c0_i32_0 = arith.constant 0 : i32
    return %arg0, %c0_i32 : i32, i32
  }
}

module attributes {stable_mosaic.version = 11 : i64} {
  func.func @_fused_conv_bn_lrelu_kernel(%arg0: i32, %arg1: i32, %arg2: memref<128x128xbf16, #tpu.memory_space<vmem>>, %arg3: memref<128x16xbf16, #tpu.memory_space<vmem>>, %arg4: memref<128x16xbf16, #tpu.memory_space<vmem>>, %arg5: memref<128x16xf32, #tpu.memory_space<vmem>>, %arg6: memref<1x16xf32, #tpu.memory_space<vmem>>, %arg7: memref<1x16xf32, #tpu.memory_space<vmem>>) attributes {dimension_semantics = [#tpu.dimension_semantics<arbitrary>, #tpu.dimension_semantics<arbitrary>], iteration_bounds = array<i64: 2, 1>, scalar_prefetch = 0 : i64, scratch_operands = 3 : i64, tpu.core_type = #tpu.core_type<tc>, window_params = [{transform_indices = @transform_0, window_bounds = array<i64: 128, 128>}, {pipeline_mode = #tpu.pipeline_mode<synchronous>, transform_indices = @transform_1, window_bounds = array<i64: 128, 16>}, {transform_indices = @transform_2, window_bounds = array<i64: 128, 16>}]} {
    %c0_i32 = arith.constant 0 : i32
    %0 = arith.cmpi eq, %arg0, %c0_i32 : i32
    %1 = arith.extui %0 : i1 to i32
    %c0_i32_0 = arith.constant 0 : i32
    %2 = arith.cmpi ne, %1, %c0_i32_0 : i32
    scf.if %2 {
      %c0_i32_2 = arith.constant 0 : i32
      %6 = arith.cmpi eq, %arg1, %c0_i32_2 : i32
      %7 = arith.extui %6 : i1 to i32
      %c0_i32_3 = arith.constant 0 : i32
      %8 = arith.cmpi ne, %7, %c0_i32_3 : i32
      scf.if %8 {
        %cst_18 = arith.constant 0.000000e+00 : f32
        %27 = vector.broadcast %cst_18 : f32 to vector<1x16xf32>
        %c0_19 = arith.constant 0 : index
        %c0_20 = arith.constant 0 : index
        %28 = vector.load %arg6[%c0_19, %c0_20] : memref<1x16xf32, #tpu.memory_space<vmem>>, vector<1x16xf32>
        tpu.vector_store %arg6[%c0_19, %c0_20], %27 {strides = array<i32>} : memref<1x16xf32, #tpu.memory_space<vmem>>, vector<1x16xf32>,
        %cst_21 = arith.constant 0.000000e+00 : f32
        %29 = vector.broadcast %cst_21 : f32 to vector<1x16xf32>
        %c0_22 = arith.constant 0 : index
        %c0_23 = arith.constant 0 : index
        %30 = vector.load %arg7[%c0_22, %c0_23] : memref<1x16xf32, #tpu.memory_space<vmem>>, vector<1x16xf32>
        tpu.vector_store %arg7[%c0_22, %c0_23], %29 {strides = array<i32>} : memref<1x16xf32, #tpu.memory_space<vmem>>, vector<1x16xf32>,
      } else {
      }
      %c0 = arith.constant 0 : index
      %c0_4 = arith.constant 0 : index
      %9 = vector.load %arg2[%c0, %c0_4] : memref<128x128xbf16, #tpu.memory_space<vmem>>, vector<128x128xbf16>
      %c0_5 = arith.constant 0 : index
      %c0_6 = arith.constant 0 : index
      %10 = vector.load %arg3[%c0_5, %c0_6] : memref<128x16xbf16, #tpu.memory_space<vmem>>, vector<128x16xbf16>
      %cst = arith.constant dense<0.000000e+00> : vector<128x16xf32>
      %11 = tpu.matmul %9, %10, %cst {dimension_numbers = #tpu.dot_dimension_numbers<[1], [0], [0], [1], [0, 0, 1, 1], [], []>} : vector<128x128xbf16>, vector<128x16xbf16>, vector<128x16xf32> -> vector<128x16xf32>
      %c128_i32 = arith.constant 128 : i32
      %12 = arith.muli %arg1, %c128_i32 : i32
      %13 = tpu.assume_multiple %12, 128 : i32
      %14 = arith.index_cast %13 : i32 to index
      %c0_7 = arith.constant 0 : index
      %15 = vector.load %arg5[%14, %c0_7] : memref<128x16xf32, #tpu.memory_space<vmem>>, vector<128x16xf32>
      tpu.vector_store %arg5[%14, %c0_7], %11 {strides = array<i32>} : memref<128x16xf32, #tpu.memory_space<vmem>>, vector<128x16xf32>,
      %c0_8 = arith.constant 0 : index
      %c0_9 = arith.constant 0 : index
      %16 = vector.load %arg6[%c0_8, %c0_9] : memref<1x16xf32, #tpu.memory_space<vmem>>, vector<1x16xf32>
      %cst_10 = arith.constant dense<0.000000e+00> : vector<16xf32>
      %17 = vector.multi_reduction <add>, %11, %cst_10 [0] : vector<128x16xf32> to vector<16xf32>
      %18 = vector.shape_cast %17 : vector<16xf32> to vector<1x16xf32>
      %19 = arith.addf %16, %18 : vector<1x16xf32>
      %c0_11 = arith.constant 0 : index
      %c0_12 = arith.constant 0 : index
      %20 = vector.load %arg6[%c0_11, %c0_12] : memref<1x16xf32, #tpu.memory_space<vmem>>, vector<1x16xf32>
      tpu.vector_store %arg6[%c0_11, %c0_12], %19 {strides = array<i32>} : memref<1x16xf32, #tpu.memory_space<vmem>>, vector<1x16xf32>,
      %c0_13 = arith.constant 0 : index
      %c0_14 = arith.constant 0 : index
      %21 = vector.load %arg7[%c0_13, %c0_14] : memref<1x16xf32, #tpu.memory_space<vmem>>, vector<1x16xf32>
      %22 = arith.mulf %11, %11 : vector<128x16xf32>
      %cst_15 = arith.constant dense<0.000000e+00> : vector<16xf32>
      %23 = vector.multi_reduction <add>, %22, %cst_15 [0] : vector<128x16xf32> to vector<16xf32>
      %24 = vector.shape_cast %23 : vector<16xf32> to vector<1x16xf32>
      %25 = arith.addf %21, %24 : vector<1x16xf32>
      %c0_16 = arith.constant 0 : index
      %c0_17 = arith.constant 0 : index
      %26 = vector.load %arg7[%c0_16, %c0_17] : memref<1x16xf32, #tpu.memory_space<vmem>>, vector<1x16xf32>
      tpu.vector_store %arg7[%c0_16, %c0_17], %25 {strides = array<i32>} : memref<1x16xf32, #tpu.memory_space<vmem>>, vector<1x16xf32>,
    } else {
    }
    %c1_i32 = arith.constant 1 : i32
    %3 = arith.cmpi eq, %arg0, %c1_i32 : i32
    %4 = arith.extui %3 : i1 to i32
    %c0_i32_1 = arith.constant 0 : i32
    %5 = arith.cmpi ne, %4, %c0_i32_1 : i32
    scf.if %5 {
      %c128_i32 = arith.constant 128 : i32
      %6 = arith.muli %arg1, %c128_i32 : i32
      %7 = tpu.assume_multiple %6, 128 : i32
      %8 = arith.index_cast %7 : i32 to index
      %c0 = arith.constant 0 : index
      %9 = vector.load %arg5[%8, %c0] : memref<128x16xf32, #tpu.memory_space<vmem>>, vector<128x16xf32>
      %c0_2 = arith.constant 0 : index
      %c0_3 = arith.constant 0 : index
      %10 = vector.load %arg6[%c0_2, %c0_3] : memref<1x16xf32, #tpu.memory_space<vmem>>, vector<1x16xf32>
      %cst = arith.constant 7.812500e-03 : f32
      %11 = vector.broadcast %cst : f32 to vector<1x16xf32>
      %12 = arith.mulf %10, %11 : vector<1x16xf32>
      %c0_4 = arith.constant 0 : index
      %c0_5 = arith.constant 0 : index
      %13 = vector.load %arg7[%c0_4, %c0_5] : memref<1x16xf32, #tpu.memory_space<vmem>>, vector<1x16xf32>
      %cst_6 = arith.constant 7.812500e-03 : f32
      %14 = vector.broadcast %cst_6 : f32 to vector<1x16xf32>
      %15 = arith.mulf %13, %14 : vector<1x16xf32>
      %16 = arith.mulf %12, %12 : vector<1x16xf32>
      %17 = arith.subf %15, %16 : vector<1x16xf32>
      %cst_7 = arith.constant 9.99999974E-6 : f32
      %18 = vector.broadcast %cst_7 : f32 to vector<1x16xf32>
      %19 = arith.addf %17, %18 : vector<1x16xf32>
      %20 = math.rsqrt %19 : vector<1x16xf32>
      %21 = vector.broadcast %12 : vector<1x16xf32> to vector<128x16xf32>
      %22 = arith.subf %9, %21 : vector<128x16xf32>
      %23 = vector.broadcast %20 : vector<1x16xf32> to vector<128x16xf32>
      %24 = arith.mulf %22, %23 : vector<128x16xf32>
      %cst_8 = arith.constant 0.000000e+00 : f32
      %25 = vector.broadcast %cst_8 : f32 to vector<128x16xf32>
      %26 = arith.cmpf ogt, %24, %25 : vector<128x16xf32>
      %cst_9 = arith.constant 2.000000e-01 : f32
      %27 = vector.broadcast %cst_9 : f32 to vector<128x16xf32>
      %28 = arith.mulf %27, %24 : vector<128x16xf32>
      %29 = arith.select %26, %24, %28 : vector<128x16xi1>, vector<128x16xf32>
      %30 = arith.truncf %29 : vector<128x16xf32> to vector<128x16xbf16>
      %c0_10 = arith.constant 0 : index
      %c0_11 = arith.constant 0 : index
      %31 = vector.load %arg4[%c0_10, %c0_11] : memref<128x16xbf16, #tpu.memory_space<vmem>>, vector<128x16xbf16>
      tpu.vector_store %arg4[%c0_10, %c0_11], %30 {strides = array<i32>} : memref<128x16xbf16, #tpu.memory_space<vmem>>, vector<128x16xbf16>,
    } else {
    }
    return
  }
  func.func @transform_0(%arg0: i32, %arg1: i32) -> (i32, i32) {
    %c1_i32 = arith.constant 1 : i32
    %0 = arith.subi %c1_i32, %arg0 : i32
    %1 = arith.muli %0, %arg1 : i32
    %c0_i32 = arith.constant 0 : i32
    %c0_i32_0 = arith.constant 0 : i32
    return %1, %c0_i32 : i32, i32
  }
  func.func @transform_1(%arg0: i32, %arg1: i32) -> (i32, i32) {
    %c0_i32 = arith.constant 0 : i32
    %c0_i32_0 = arith.constant 0 : i32
    %c0_i32_1 = arith.constant 0 : i32
    return %c0_i32, %c0_i32_0 : i32, i32
  }
  func.func @transform_2(%arg0: i32, %arg1: i32) -> (i32, i32) {
    %0 = arith.muli %arg0, %arg1 : i32
    %c0_i32 = arith.constant 0 : i32
    %c0_i32_0 = arith.constant 0 : i32
    return %0, %c0_i32 : i32, i32
  }
}

module attributes {stable_mosaic.version = 11 : i64} {
  func.func @_fused_conv_bn_lrelu_kernel(%arg0: i32, %arg1: i32, %arg2: memref<32x256xbf16, #tpu.memory_space<vmem>>, %arg3: memref<256x32xbf16, #tpu.memory_space<vmem>>, %arg4: memref<32x32xbf16, #tpu.memory_space<vmem>>, %arg5: memref<32x32xf32, #tpu.memory_space<vmem>>, %arg6: memref<1x32xf32, #tpu.memory_space<vmem>>, %arg7: memref<1x32xf32, #tpu.memory_space<vmem>>) attributes {dimension_semantics = [#tpu.dimension_semantics<arbitrary>, #tpu.dimension_semantics<arbitrary>], iteration_bounds = array<i64: 2, 1>, scalar_prefetch = 0 : i64, scratch_operands = 3 : i64, tpu.core_type = #tpu.core_type<tc>, window_params = [{transform_indices = @transform_0, window_bounds = array<i64: 32, 256>}, {pipeline_mode = #tpu.pipeline_mode<synchronous>, transform_indices = @transform_1, window_bounds = array<i64: 256, 32>}, {transform_indices = @transform_2, window_bounds = array<i64: 32, 32>}]} {
    %c0_i32 = arith.constant 0 : i32
    %0 = arith.cmpi eq, %arg0, %c0_i32 : i32
    %1 = arith.extui %0 : i1 to i32
    %c0_i32_0 = arith.constant 0 : i32
    %2 = arith.cmpi ne, %1, %c0_i32_0 : i32
    scf.if %2 {
      %c0_i32_2 = arith.constant 0 : i32
      %6 = arith.cmpi eq, %arg1, %c0_i32_2 : i32
      %7 = arith.extui %6 : i1 to i32
      %c0_i32_3 = arith.constant 0 : i32
      %8 = arith.cmpi ne, %7, %c0_i32_3 : i32
      scf.if %8 {
        %cst_18 = arith.constant 0.000000e+00 : f32
        %27 = vector.broadcast %cst_18 : f32 to vector<1x32xf32>
        %c0_19 = arith.constant 0 : index
        %c0_20 = arith.constant 0 : index
        %28 = vector.load %arg6[%c0_19, %c0_20] : memref<1x32xf32, #tpu.memory_space<vmem>>, vector<1x32xf32>
        tpu.vector_store %arg6[%c0_19, %c0_20], %27 {strides = array<i32>} : memref<1x32xf32, #tpu.memory_space<vmem>>, vector<1x32xf32>,
        %cst_21 = arith.constant 0.000000e+00 : f32
        %29 = vector.broadcast %cst_21 : f32 to vector<1x32xf32>
        %c0_22 = arith.constant 0 : index
        %c0_23 = arith.constant 0 : index
        %30 = vector.load %arg7[%c0_22, %c0_23] : memref<1x32xf32, #tpu.memory_space<vmem>>, vector<1x32xf32>
        tpu.vector_store %arg7[%c0_22, %c0_23], %29 {strides = array<i32>} : memref<1x32xf32, #tpu.memory_space<vmem>>, vector<1x32xf32>,
      } else {
      }
      %c0 = arith.constant 0 : index
      %c0_4 = arith.constant 0 : index
      %9 = vector.load %arg2[%c0, %c0_4] : memref<32x256xbf16, #tpu.memory_space<vmem>>, vector<32x256xbf16>
      %c0_5 = arith.constant 0 : index
      %c0_6 = arith.constant 0 : index
      %10 = vector.load %arg3[%c0_5, %c0_6] : memref<256x32xbf16, #tpu.memory_space<vmem>>, vector<256x32xbf16>
      %cst = arith.constant dense<0.000000e+00> : vector<32x32xf32>
      %11 = tpu.matmul %9, %10, %cst {dimension_numbers = #tpu.dot_dimension_numbers<[1], [0], [0], [1], [0, 0, 1, 1], [], []>} : vector<32x256xbf16>, vector<256x32xbf16>, vector<32x32xf32> -> vector<32x32xf32>
      %c32_i32 = arith.constant 32 : i32
      %12 = arith.muli %arg1, %c32_i32 : i32
      %13 = tpu.assume_multiple %12, 32 : i32
      %14 = arith.index_cast %13 : i32 to index
      %c0_7 = arith.constant 0 : index
      %15 = vector.load %arg5[%14, %c0_7] : memref<32x32xf32, #tpu.memory_space<vmem>>, vector<32x32xf32>
      tpu.vector_store %arg5[%14, %c0_7], %11 {strides = array<i32>} : memref<32x32xf32, #tpu.memory_space<vmem>>, vector<32x32xf32>,
      %c0_8 = arith.constant 0 : index
      %c0_9 = arith.constant 0 : index
      %16 = vector.load %arg6[%c0_8, %c0_9] : memref<1x32xf32, #tpu.memory_space<vmem>>, vector<1x32xf32>
      %cst_10 = arith.constant dense<0.000000e+00> : vector<32xf32>
      %17 = vector.multi_reduction <add>, %11, %cst_10 [0] : vector<32x32xf32> to vector<32xf32>
      %18 = vector.shape_cast %17 : vector<32xf32> to vector<1x32xf32>
      %19 = arith.addf %16, %18 : vector<1x32xf32>
      %c0_11 = arith.constant 0 : index
      %c0_12 = arith.constant 0 : index
      %20 = vector.load %arg6[%c0_11, %c0_12] : memref<1x32xf32, #tpu.memory_space<vmem>>, vector<1x32xf32>
      tpu.vector_store %arg6[%c0_11, %c0_12], %19 {strides = array<i32>} : memref<1x32xf32, #tpu.memory_space<vmem>>, vector<1x32xf32>,
      %c0_13 = arith.constant 0 : index
      %c0_14 = arith.constant 0 : index
      %21 = vector.load %arg7[%c0_13, %c0_14] : memref<1x32xf32, #tpu.memory_space<vmem>>, vector<1x32xf32>
      %22 = arith.mulf %11, %11 : vector<32x32xf32>
      %cst_15 = arith.constant dense<0.000000e+00> : vector<32xf32>
      %23 = vector.multi_reduction <add>, %22, %cst_15 [0] : vector<32x32xf32> to vector<32xf32>
      %24 = vector.shape_cast %23 : vector<32xf32> to vector<1x32xf32>
      %25 = arith.addf %21, %24 : vector<1x32xf32>
      %c0_16 = arith.constant 0 : index
      %c0_17 = arith.constant 0 : index
      %26 = vector.load %arg7[%c0_16, %c0_17] : memref<1x32xf32, #tpu.memory_space<vmem>>, vector<1x32xf32>
      tpu.vector_store %arg7[%c0_16, %c0_17], %25 {strides = array<i32>} : memref<1x32xf32, #tpu.memory_space<vmem>>, vector<1x32xf32>,
    } else {
    }
    %c1_i32 = arith.constant 1 : i32
    %3 = arith.cmpi eq, %arg0, %c1_i32 : i32
    %4 = arith.extui %3 : i1 to i32
    %c0_i32_1 = arith.constant 0 : i32
    %5 = arith.cmpi ne, %4, %c0_i32_1 : i32
    scf.if %5 {
      %c32_i32 = arith.constant 32 : i32
      %6 = arith.muli %arg1, %c32_i32 : i32
      %7 = tpu.assume_multiple %6, 32 : i32
      %8 = arith.index_cast %7 : i32 to index
      %c0 = arith.constant 0 : index
      %9 = vector.load %arg5[%8, %c0] : memref<32x32xf32, #tpu.memory_space<vmem>>, vector<32x32xf32>
      %c0_2 = arith.constant 0 : index
      %c0_3 = arith.constant 0 : index
      %10 = vector.load %arg6[%c0_2, %c0_3] : memref<1x32xf32, #tpu.memory_space<vmem>>, vector<1x32xf32>
      %cst = arith.constant 3.125000e-02 : f32
      %11 = vector.broadcast %cst : f32 to vector<1x32xf32>
      %12 = arith.mulf %10, %11 : vector<1x32xf32>
      %c0_4 = arith.constant 0 : index
      %c0_5 = arith.constant 0 : index
      %13 = vector.load %arg7[%c0_4, %c0_5] : memref<1x32xf32, #tpu.memory_space<vmem>>, vector<1x32xf32>
      %cst_6 = arith.constant 3.125000e-02 : f32
      %14 = vector.broadcast %cst_6 : f32 to vector<1x32xf32>
      %15 = arith.mulf %13, %14 : vector<1x32xf32>
      %16 = arith.mulf %12, %12 : vector<1x32xf32>
      %17 = arith.subf %15, %16 : vector<1x32xf32>
      %cst_7 = arith.constant 9.99999974E-6 : f32
      %18 = vector.broadcast %cst_7 : f32 to vector<1x32xf32>
      %19 = arith.addf %17, %18 : vector<1x32xf32>
      %20 = math.rsqrt %19 : vector<1x32xf32>
      %21 = vector.broadcast %12 : vector<1x32xf32> to vector<32x32xf32>
      %22 = arith.subf %9, %21 : vector<32x32xf32>
      %23 = vector.broadcast %20 : vector<1x32xf32> to vector<32x32xf32>
      %24 = arith.mulf %22, %23 : vector<32x32xf32>
      %cst_8 = arith.constant 0.000000e+00 : f32
      %25 = vector.broadcast %cst_8 : f32 to vector<32x32xf32>
      %26 = arith.cmpf ogt, %24, %25 : vector<32x32xf32>
      %cst_9 = arith.constant 2.000000e-01 : f32
      %27 = vector.broadcast %cst_9 : f32 to vector<32x32xf32>
      %28 = arith.mulf %27, %24 : vector<32x32xf32>
      %29 = arith.select %26, %24, %28 : vector<32x32xi1>, vector<32x32xf32>
      %30 = arith.truncf %29 : vector<32x32xf32> to vector<32x32xbf16>
      %c0_10 = arith.constant 0 : index
      %c0_11 = arith.constant 0 : index
      %31 = vector.load %arg4[%c0_10, %c0_11] : memref<32x32xbf16, #tpu.memory_space<vmem>>, vector<32x32xbf16>
      tpu.vector_store %arg4[%c0_10, %c0_11], %30 {strides = array<i32>} : memref<32x32xbf16, #tpu.memory_space<vmem>>, vector<32x32xbf16>,
    } else {
    }
    return
  }
  func.func @transform_0(%arg0: i32, %arg1: i32) -> (i32, i32) {
    %c1_i32 = arith.constant 1 : i32
    %0 = arith.subi %c1_i32, %arg0 : i32
    %1 = arith.muli %0, %arg1 : i32
    %c0_i32 = arith.constant 0 : i32
    %c0_i32_0 = arith.constant 0 : i32
    return %1, %c0_i32 : i32, i32
  }
  func.func @transform_1(%arg0: i32, %arg1: i32) -> (i32, i32) {
    %c0_i32 = arith.constant 0 : i32
    %c0_i32_0 = arith.constant 0 : i32
    %c0_i32_1 = arith.constant 0 : i32
    return %c0_i32, %c0_i32_0 : i32, i32
  }
  func.func @transform_2(%arg0: i32, %arg1: i32) -> (i32, i32) {
    %0 = arith.muli %arg0, %arg1 : i32
    %c0_i32 = arith.constant 0 : i32
    %c0_i32_0 = arith.constant 0 : i32
    return %0, %c0_i32 : i32, i32
  }
}

module attributes {stable_mosaic.version = 11 : i64} {
  func.func @_conv_bn_head_kernel(%arg0: i32, %arg1: memref<8x512xbf16, #tpu.memory_space<vmem>>, %arg2: memref<512x64xbf16, #tpu.memory_space<vmem>>, %arg3: memref<8x64xf32, #tpu.memory_space<vmem>>, %arg4: memref<2x8xf32, #tpu.memory_space<vmem>>, %arg5: memref<2x1xf32, #tpu.memory_space<vmem>>) attributes {dimension_semantics = [#tpu.dimension_semantics<arbitrary>], iteration_bounds = array<i64: 1>, scalar_prefetch = 0 : i64, scratch_operands = 0 : i64, tpu.core_type = #tpu.core_type<tc>, window_params = [{pipeline_mode = #tpu.pipeline_mode<synchronous>, transform_indices = @transform_0, window_bounds = array<i64: 8, 512>}, {pipeline_mode = #tpu.pipeline_mode<synchronous>, transform_indices = @transform_1, window_bounds = array<i64: 512, 64>}, {pipeline_mode = #tpu.pipeline_mode<synchronous>, transform_indices = @transform_2, window_bounds = array<i64: 8, 64>}, {pipeline_mode = #tpu.pipeline_mode<synchronous>, transform_indices = @transform_3, window_bounds = array<i64: 2, 8>}, {pipeline_mode = #tpu.pipeline_mode<synchronous>, transform_indices = @transform_4, window_bounds = array<i64: 2, 1>}]} {
    %c0 = arith.constant 0 : index
    %c0_0 = arith.constant 0 : index
    %0 = vector.load %arg1[%c0, %c0_0] : memref<8x512xbf16, #tpu.memory_space<vmem>>, vector<8x512xbf16>
    %c0_1 = arith.constant 0 : index
    %c0_2 = arith.constant 0 : index
    %1 = vector.load %arg2[%c0_1, %c0_2] : memref<512x64xbf16, #tpu.memory_space<vmem>>, vector<512x64xbf16>
    %cst = arith.constant dense<0.000000e+00> : vector<8x64xf32>
    %2 = tpu.matmul %0, %1, %cst {dimension_numbers = #tpu.dot_dimension_numbers<[1], [0], [0], [1], [0, 0, 1, 1], [], []>} : vector<8x512xbf16>, vector<512x64xbf16>, vector<8x64xf32> -> vector<8x64xf32>
    %cst_3 = arith.constant dense<0.000000e+00> : vector<64xf32>
    %3 = vector.multi_reduction <add>, %2, %cst_3 [0] : vector<8x64xf32> to vector<64xf32>
    %4 = vector.shape_cast %3 : vector<64xf32> to vector<1x64xf32>
    %cst_4 = arith.constant 1.250000e-01 : f32
    %5 = vector.broadcast %cst_4 : f32 to vector<1x64xf32>
    %6 = arith.mulf %4, %5 : vector<1x64xf32>
    %7 = arith.mulf %2, %2 : vector<8x64xf32>
    %cst_5 = arith.constant dense<0.000000e+00> : vector<64xf32>
    %8 = vector.multi_reduction <add>, %7, %cst_5 [0] : vector<8x64xf32> to vector<64xf32>
    %9 = vector.shape_cast %8 : vector<64xf32> to vector<1x64xf32>
    %cst_6 = arith.constant 1.250000e-01 : f32
    %10 = vector.broadcast %cst_6 : f32 to vector<1x64xf32>
    %11 = arith.mulf %9, %10 : vector<1x64xf32>
    %12 = arith.mulf %6, %6 : vector<1x64xf32>
    %13 = arith.subf %11, %12 : vector<1x64xf32>
    %14 = vector.broadcast %6 : vector<1x64xf32> to vector<8x64xf32>
    %15 = arith.subf %2, %14 : vector<8x64xf32>
    %cst_7 = arith.constant 9.99999974E-6 : f32
    %16 = vector.broadcast %cst_7 : f32 to vector<1x64xf32>
    %17 = arith.addf %13, %16 : vector<1x64xf32>
    %18 = math.rsqrt %17 : vector<1x64xf32>
    %19 = vector.broadcast %18 : vector<1x64xf32> to vector<8x64xf32>
    %20 = arith.mulf %15, %19 : vector<8x64xf32>
    %cst_8 = arith.constant 0.000000e+00 : f32
    %21 = vector.broadcast %cst_8 : f32 to vector<8x64xf32>
    %22 = arith.cmpf ogt, %20, %21 : vector<8x64xf32>
    %cst_9 = arith.constant 2.000000e-01 : f32
    %23 = vector.broadcast %cst_9 : f32 to vector<8x64xf32>
    %24 = arith.mulf %23, %20 : vector<8x64xf32>
    %25 = arith.select %22, %20, %24 : vector<8x64xi1>, vector<8x64xf32>
    %c0_10 = arith.constant 0 : index
    %c0_11 = arith.constant 0 : index
    %26 = vector.load %arg4[%c0_10, %c0_11] : memref<2x8xf32, #tpu.memory_space<vmem>>, vector<2x8xf32>
    %c0_12 = arith.constant 0 : index
    %c0_13 = arith.constant 0 : index
    %27 = vector.load %arg3[%c0_12, %c0_13] : memref<8x64xf32, #tpu.memory_space<vmem>>, vector<8x64xf32>
    %28 = arith.mulf %25, %27 : vector<8x64xf32>
    %cst_14 = arith.constant dense<0.000000e+00> : vector<2x64xf32>
    %29 = tpu.matmul %26, %28, %cst_14 {dimension_numbers = #tpu.dot_dimension_numbers<[1], [0], [0], [1], [0, 0, 1, 1], [], []>} : vector<2x8xf32>, vector<8x64xf32>, vector<2x64xf32> -> vector<2x64xf32>
    %cst_15 = arith.constant dense<0.000000e+00> : vector<2xf32>
    %30 = vector.multi_reduction <add>, %29, %cst_15 [1] : vector<2x64xf32> to vector<2xf32>
    %31 = vector.shape_cast %30 : vector<2xf32> to vector<2x1xf32>
    %cst_16 = arith.constant 5.000000e-01 : f32
    %32 = vector.broadcast %cst_16 : f32 to vector<2x1xf32>
    %33 = arith.mulf %32, %31 : vector<2x1xf32>
    %34 = math.tanh %33 : vector<2x1xf32>
    %cst_17 = arith.constant 1.000000e+00 : f32
    %35 = vector.broadcast %cst_17 : f32 to vector<2x1xf32>
    %36 = arith.addf %34, %35 : vector<2x1xf32>
    %cst_18 = arith.constant 5.000000e-01 : f32
    %37 = vector.broadcast %cst_18 : f32 to vector<2x1xf32>
    %38 = arith.mulf %37, %36 : vector<2x1xf32>
    %c0_19 = arith.constant 0 : index
    %c0_20 = arith.constant 0 : index
    %39 = vector.load %arg5[%c0_19, %c0_20] : memref<2x1xf32, #tpu.memory_space<vmem>>, vector<2x1xf32>
    tpu.vector_store %arg5[%c0_19, %c0_20], %38 {strides = array<i32>} : memref<2x1xf32, #tpu.memory_space<vmem>>, vector<2x1xf32>,
    return
  }
  func.func @transform_0(%arg0: i32) -> (i32, i32) {
    %c0_i32 = arith.constant 0 : i32
    %c0_i32_0 = arith.constant 0 : i32
    %c0_i32_1 = arith.constant 0 : i32
    return %c0_i32, %c0_i32_0 : i32, i32
  }
  func.func @transform_1(%arg0: i32) -> (i32, i32) {
    %c0_i32 = arith.constant 0 : i32
    %c0_i32_0 = arith.constant 0 : i32
    %c0_i32_1 = arith.constant 0 : i32
    return %c0_i32, %c0_i32_0 : i32, i32
  }
  func.func @transform_2(%arg0: i32) -> (i32, i32) {
    %c0_i32 = arith.constant 0 : i32
    %c0_i32_0 = arith.constant 0 : i32
    %c0_i32_1 = arith.constant 0 : i32
    return %c0_i32, %c0_i32_0 : i32, i32
  }
  func.func @transform_3(%arg0: i32) -> (i32, i32) {
    %c0_i32 = arith.constant 0 : i32
    %c0_i32_0 = arith.constant 0 : i32
    %c0_i32_1 = arith.constant 0 : i32
    return %c0_i32, %c0_i32_0 : i32, i32
  }
  func.func @transform_4(%arg0: i32) -> (i32, i32) {
    %c0_i32 = arith.constant 0 : i32
    %c0_i32_0 = arith.constant 0 : i32
    %c0_i32_1 = arith.constant 0 : i32
    return %c0_i32, %c0_i32_0 : i32, i32
  }
}

</mosaic_0001>

<llo_original>
// kernel: discriminator_forward.4
$region0: #{discriminator_forward.4}
  #allocation0 [shape = 'u32[]', space=smem, size = 0x4, offset = 0x4, fixed_abs, tag = 'smem constant byte address 0x4 - core index']
  #allocation1 [shape = 'u32[144,128]{1,0:T(1,128)}', space=vmem, size = 0x12000, scoped, tag = 'internal scratch']
  %s0 = inlined_call_operand.vmem [shape: bf16[512,48], index: 0, kind: input, shape index: {}]
  %s1 = inlined_call_operand.vmem [shape: bf16[48,8], index: 1, kind: input, shape index: {}]
  %s2 = inlined_call_operand.vmem [shape: bf16[512,8], index: 2, kind: output, shape index: {}]
  %s3 = sld [smem:[#allocation0]]
  $region18: #{discriminator_forward.4} parent=0
    _
  %s5 = ssub.s32 1, %s3
  %s6 = scalar_select 0, %s5, %s3
  // Predicated region
  $region2: #{discriminator_forward.4} parent=0 // pred_check
    _
  $region3: #{discriminator_forward.4} parent=0 // pred_check_branch
    %8 = sbr.rel (0) target = $region5
  $region4: #{discriminator_forward.4} parent=0 // pred_region
    _
  $region5: #{discriminator_forward.4} parent=0 // pred_fallthru
    _
  // Predicated region
  $region6: #{discriminator_forward.4} parent=0 // pred_check
    _
  $region7: #{discriminator_forward.4} parent=0 // pred_check_branch
    %10 = sbr.rel (0) target = $region9
  $region8: #{discriminator_forward.4} parent=0 // pred_region
    _
  $region9: #{discriminator_forward.4} parent=0 // pred_fallthru
    _
  %v12 = vld [vmem:[%s0] sm:$0xf]
  %v13 = vld [vmem:[%s0 + $0x4] sm:$0xf]
  %v14 = vld [vmem:[%s0 + $0x8] sm:$0xf]
  %v15 = vld [vmem:[%s0 + $0xc] sm:$0xf]
  %v16 = vld [vmem:[%s0 + $0x10] sm:$0xf]
  %v17 = vld [vmem:[%s0 + $0x14] sm:$0xf]
  %v18 = vld [vmem:[%s0 + $0x18] sm:$0xf]
  %v19 = vld [vmem:[%s0 + $0x1c] sm:$0xf]
  %v20 = vld [vmem:[%s0 + $0x20] sm:$0xf]
  %v21 = vld [vmem:[%s0 + $0x24] sm:$0xf]
  %v22 = vld [vmem:[%s0 + $0x28] sm:$0xf]
  %v23 = vld [vmem:[%s0 + $0x2c] sm:$0xf]
  %v24 = vld [vmem:[%s0 + $0x30] sm:$0xf]
  %v25 = vld [vmem:[%s0 + $0x34] sm:$0xf]
  %v26 = vld [vmem:[%s0 + $0x38] sm:$0xf]
  %v27 = vld [vmem:[%s0 + $0x3c] sm:$0xf]
  %v28 = vld [vmem:[%s0 + $0x40] sm:$0xf]
  %v29 = vld [vmem:[%s0 + $0x44] sm:$0xf]
  %v30 = vld [vmem:[%s0 + $0x48] sm:$0xf]
  %v31 = vld [vmem:[%s0 + $0x4c] sm:$0xf]
  %v32 = vld [vmem:[%s0 + $0x50] sm:$0xf]
  %v33 = vld [vmem:[%s0 + $0x54] sm:$0xf]
  %v34 = vld [vmem:[%s0 + $0x58] sm:$0xf]
  %v35 = vld [vmem:[%s0 + $0x5c] sm:$0xf]
  %v36 = vld [vmem:[%s0 + $0x60] sm:$0xf]
  %v37 = vld [vmem:[%s0 + $0x64] sm:$0xf]
  %v38 = vld [vmem:[%s0 + $0x68] sm:$0xf]
  %v39 = vld [vmem:[%s0 + $0x6c] sm:$0xf]
  %v40 = vld [vmem:[%s0 + $0x70] sm:$0xf]
  %v41 = vld [vmem:[%s0 + $0x74] sm:$0xf]
  %v42 = vld [vmem:[%s0 + $0x78] sm:$0xf]
  %v43 = vld [vmem:[%s0 + $0x7c] sm:$0xf]
  %v44 = vld [vmem:[%s0 + $0x80] sm:$0xf]
  %v45 = vld [vmem:[%s0 + $0x84] sm:$0xf]
  %v46 = vld [vmem:[%s0 + $0x88] sm:$0xf]
  %v47 = vld [vmem:[%s0 + $0x8c] sm:$0xf]
  %v48 = vld [vmem:[%s0 + $0x90] sm:$0xf]
  %v49 = vld [vmem:[%s0 + $0x94] sm:$0xf]
  %v50 = vld [vmem:[%s0 + $0x98] sm:$0xf]
  %v51 = vld [vmem:[%s0 + $0x9c] sm:$0xf]
  %v52 = vld [vmem:[%s0 + $0xa0] sm:$0xf]
  %v53 = vld [vmem:[%s0 + $0xa4] sm:$0xf]
  %v54 = vld [vmem:[%s0 + $0xa8] sm:$0xf]
  %v55 = vld [vmem:[%s0 + $0xac] sm:$0xf]
  %v56 = vld [vmem:[%s0 + $0xb0] sm:$0xf]
  %v57 = vld [vmem:[%s0 + $0xb4] sm:$0xf]
  %v58 = vld [vmem:[%s0 + $0xb8] sm:$0xf]
  %v59 = vld [vmem:[%s0 + $0xbc] sm:$0xf]
  %v60 = vld [vmem:[%s0 + $0xc0] sm:$0xf]
  %v61 = vld [vmem:[%s0 + $0xc4] sm:$0xf]
  %v62 = vld [vmem:[%s0 + $0xc8] sm:$0xf]
  %v63 = vld [vmem:[%s0 + $0xcc] sm:$0xf]
  %v64 = vld [vmem:[%s0 + $0xd0] sm:$0xf]
  %v65 = vld [vmem:[%s0 + $0xd4] sm:$0xf]
  %v66 = vld [vmem:[%s0 + $0xd8] sm:$0xf]
  %v67 = vld [vmem:[%s0 + $0xdc] sm:$0xf]
  %v68 = vld [vmem:[%s0 + $0xe0] sm:$0xf]
  %v69 = vld [vmem:[%s0 + $0xe4] sm:$0xf]
  %v70 = vld [vmem:[%s0 + $0xe8] sm:$0xf]
  %v71 = vld [vmem:[%s0 + $0xec] sm:$0xf]
  %v72 = vld [vmem:[%s0 + $0xf0] sm:$0xf]
  %v73 = vld [vmem:[%s0 + $0xf4] sm:$0xf]
  %v74 = vld [vmem:[%s0 + $0xf8] sm:$0xf]
  %v75 = vld [vmem:[%s0 + $0xfc] sm:$0xf]
  %v76 = vld [vmem:[%s1] sm:$0xf]
  %v77 = vld [vmem:[%s1 + $0x4] sm:$0xf]
  %v78 = vld [vmem:[%s1 + $0x8] sm:$0xf]
  %v79 = vld [vmem:[%s1 + $0xc] sm:$0xf]
  %v80 = vld [vmem:[%s1 + $0x10] sm:$0xf]
  %v81 = vld [vmem:[%s1 + $0x14] sm:$0xf]
  %v146 = vunpack.c.l.b16 %v12
  %v147 = vunpack.c.l.b16 %v13
  %v148 = vunpack.c.l.b16 %v14
  %v149 = vunpack.c.l.b16 %v15
  %v150 = vunpack.c.l.b16 %v16
  %v151 = vunpack.c.l.b16 %v17
  %v152 = vunpack.c.l.b16 %v18
  %v153 = vunpack.c.l.b16 %v19
  %v154 = vunpack.c.l.b16 %v20
  %v155 = vunpack.c.l.b16 %v21
  %v156 = vunpack.c.l.b16 %v22
  %v157 = vunpack.c.l.b16 %v23
  %v158 = vunpack.c.l.b16 %v24
  %v159 = vunpack.c.l.b16 %v25
  %v160 = vunpack.c.l.b16 %v26
  %v161 = vunpack.c.l.b16 %v27
  %v162 = vunpack.c.l.b16 %v28
  %v163 = vunpack.c.l.b16 %v29
  %v164 = vunpack.c.l.b16 %v30
  %v165 = vunpack.c.l.b16 %v31
  %v166 = vunpack.c.l.b16 %v32
  %v167 = vunpack.c.l.b16 %v33
  %v168 = vunpack.c.l.b16 %v34
  %v169 = vunpack.c.l.b16 %v35
  %v170 = vunpack.c.l.b16 %v36
  %v171 = vunpack.c.l.b16 %v37
  %v172 = vunpack.c.l.b16 %v38
  %v173 = vunpack.c.l.b16 %v39
  %v174 = vunpack.c.l.b16 %v40
  %v175 = vunpack.c.l.b16 %v41
  %v176 = vunpack.c.l.b16 %v42
  %v177 = vunpack.c.l.b16 %v43
  %v178 = vunpack.c.l.b16 %v44
  %v179 = vunpack.c.l.b16 %v45
  %v180 = vunpack.c.l.b16 %v46
  %v181 = vunpack.c.l.b16 %v47
  %v182 = vunpack.c.l.b16 %v48
  %v183 = vunpack.c.l.b16 %v49
  %v184 = vunpack.c.l.b16 %v50
  %v185 = vunpack.c.l.b16 %v51
  %v186 = vunpack.c.l.b16 %v52
  %v187 = vunpack.c.l.b16 %v53
  %v188 = vunpack.c.l.b16 %v54
  %v189 = vunpack.c.l.b16 %v55
  %v190 = vunpack.c.l.b16 %v56
  %v191 = vunpack.c.l.b16 %v57
  %v192 = vunpack.c.l.b16 %v58
  %v193 = vunpack.c.l.b16 %v59
  %v194 = vunpack.c.l.b16 %v60
  %v195 = vunpack.c.l.b16 %v61
  %v196 = vunpack.c.l.b16 %v62
  %v197 = vunpack.c.l.b16 %v63
  %v198 = vunpack.c.l.b16 %v64
  %v199 = vunpack.c.l.b16 %v65
  %v200 = vunpack.c.l.b16 %v66
  %v201 = vunpack.c.l.b16 %v67
  %v202 = vunpack.c.l.b16 %v68
  %v203 = vunpack.c.l.b16 %v69
  %v204 = vunpack.c.l.b16 %v70
  %v205 = vunpack.c.l.b16 %v71
  %v206 = vunpack.c.l.b16 %v72
  %v207 = vunpack.c.l.b16 %v73
  %v208 = vunpack.c.l.b16 %v74
  %v209 = vunpack.c.l.b16 %v75
  %v210 = vpack.c.b16 %v147, %v146
  %v211 = vpack.c.b16 %v149, %v148
  %v212 = vpack.c.b16 %v151, %v150
  %v213 = vpack.c.b16 %v153, %v152
  %v214 = vpack.c.b16 %v155, %v154
  %v215 = vpack.c.b16 %v157, %v156
  %v216 = vpack.c.b16 %v159, %v158
  %v217 = vpack.c.b16 %v161, %v160
  %v218 = vpack.c.b16 %v163, %v162
  %v219 = vpack.c.b16 %v165, %v164
  %v220 = vpack.c.b16 %v167, %v166
  %v221 = vpack.c.b16 %v169, %v168
  %v222 = vpack.c.b16 %v171, %v170
  %v223 = vpack.c.b16 %v173, %v172
  %v224 = vpack.c.b16 %v175, %v174
  %v225 = vpack.c.b16 %v177, %v176
  %v226 = vpack.c.b16 %v179, %v178
  %v227 = vpack.c.b16 %v181, %v180
  %v228 = vpack.c.b16 %v183, %v182
  %v229 = vpack.c.b16 %v185, %v184
  %v230 = vpack.c.b16 %v187, %v186
  %v231 = vpack.c.b16 %v189, %v188
  %v232 = vpack.c.b16 %v191, %v190
  %v233 = vpack.c.b16 %v193, %v192
  %v234 = vpack.c.b16 %v195, %v194
  %v235 = vpack.c.b16 %v197, %v196
  %v236 = vpack.c.b16 %v199, %v198
  %v237 = vpack.c.b16 %v201, %v200
  %v238 = vpack.c.b16 %v203, %v202
  %v239 = vpack.c.b16 %v205, %v204
  %v240 = vpack.c.b16 %v207, %v206
  %v241 = vpack.c.b16 %v209, %v208
  %v248 = vunpack.c.l.b16 %v76
  %v249 = vunpack.c.l.b16 %v77
  %v250 = vunpack.c.l.b16 %v78
  %v251 = vunpack.c.l.b16 %v79
  %v252 = vunpack.c.l.b16 %v80
  %v253 = vunpack.c.l.b16 %v81
  %v254 = vpack.c.b16 %v249, %v248
  %v255 = vpack.c.b16 %v251, %v250
  %v256 = vpack.c.b16 %v253, %v252
  %vm260 = vcmask 392192
  %v262 = vsel %vm260, %v210, 0
  %v265 = vsel %vm260, %v211, 0
  %v268 = vsel %vm260, %v212, 0
  %v271 = vsel %vm260, %v213, 0
  %v274 = vsel %vm260, %v214, 0
  %v277 = vsel %vm260, %v215, 0
  %v280 = vsel %vm260, %v216, 0
  %v283 = vsel %vm260, %v217, 0
  %v286 = vsel %vm260, %v218, 0
  %v289 = vsel %vm260, %v219, 0
  %v292 = vsel %vm260, %v220, 0
  %v295 = vsel %vm260, %v221, 0
  %v298 = vsel %vm260, %v222, 0
  %v301 = vsel %vm260, %v223, 0
  %v304 = vsel %vm260, %v224, 0
  %v307 = vsel %vm260, %v225, 0
  %v310 = vsel %vm260, %v226, 0
  %v313 = vsel %vm260, %v227, 0
  %v316 = vsel %vm260, %v228, 0
  %v319 = vsel %vm260, %v229, 0
  %v322 = vsel %vm260, %v230, 0
  %v325 = vsel %vm260, %v231, 0
  %v328 = vsel %vm260, %v232, 0
  %v331 = vsel %vm260, %v233, 0
  %v334 = vsel %vm260, %v234, 0
  %v337 = vsel %vm260, %v235, 0
  %v340 = vsel %vm260, %v236, 0
  %v343 = vsel %vm260, %v237, 0
  %v346 = vsel %vm260, %v238, 0
  %v349 = vsel %vm260, %v239, 0
  %v352 = vsel %vm260, %v240, 0
  %v355 = vsel %vm260, %v241, 0
  %357 = vmatprep.subr.bf16.mxu0 0
  %358 = vmatpush1.bf16.msra.mxu0 %v254
  %359 = vmatprep.subr.bf16.mxu0 0
  %360 = vmatpush1.bf16.msra.mxu0 %v255
  %361 = vmatprep.subr.bf16.mxu0 0
  %362 = vmatpush1.bf16.msra.mxu0 %v256
  %363 = vmatprep.subr.bf16.mxu0 0
  %364 = vmatpush1.bf16.msra.mxu0 0
  %365 = vmatprep.subr.bf16.mxu0 0
  %366 = vmatpush1.bf16.msra.mxu0 0
  %367 = vmatprep.subr.bf16.mxu0 0
  %368 = vmatpush1.bf16.msra.mxu0 0
  %369 = vmatprep.subr.bf16.mxu0 0
  %370 = vmatpush1.bf16.msra.mxu0 0
  %371 = vmatprep.subr.bf16.mxu0 0
  %372 = vmatpush1.bf16.msra.mxu0 0
  %373 = vmatprep.subr.bf16.mxu0 0
  %374 = vmatpush1.bf16.msra.mxu0 0
  %375 = vmatprep.subr.bf16.mxu0 0
  %376 = vmatpush1.bf16.msra.mxu0 0
  %377 = vmatprep.subr.bf16.mxu0 0
  %378 = vmatpush1.bf16.msra.mxu0 0
  %379 = vmatprep.subr.bf16.mxu0 0
  %380 = vmatpush1.bf16.msra.mxu0 0
  %381 = vmatprep.subr.bf16.mxu0 0
  %382 = vmatpush1.bf16.msra.mxu0 0
  %383 = vmatprep.subr.bf16.mxu0 0
  %384 = vmatpush1.bf16.msra.mxu0 0
  %385 = vmatprep.subr.bf16.mxu0 0
  %386 = vmatpush1.bf16.msra.mxu0 0
  %387 = vmatprep.subr.bf16.mxu0 0
  %388 = vmatpush1.bf16.msra.mxu0 0
  %389 = vmatprep.mubr.bf16.mxu0 0
  %390 = vmatmul.mubr.bf16.gmra.mrb[0].mxu0 %v262
  %v391 = vpop.f32.mrb[0].mxu0
  %v392 = vadd.f32 0.0, %v391
  %v393 = vpop.f32.mrb[0].mxu0
  %v394 = vpop.f32.mrb[0].mxu0
  %v395 = vadd.f32 0.0, %v394
  %v396 = vpop.f32.mrb[0].mxu0
  %397 = vmatprep.mubr.bf16.mxu0 0
  %398 = vmatmul.mubr.bf16.gmra.mrb[0].mxu0 %v265
  %v399 = vpop.f32.mrb[0].mxu0
  %v400 = vadd.f32 0.0, %v399
  %v401 = vpop.f32.mrb[0].mxu0
  %v402 = vpop.f32.mrb[0].mxu0
  %v403 = vadd.f32 0.0, %v402
  %v404 = vpop.f32.mrb[0].mxu0
  %405 = vmatprep.mubr.bf16.mxu0 0
  %406 = vmatmul.mubr.bf16.gmra.mrb[0].mxu0 %v268
  %v407 = vpop.f32.mrb[0].mxu0
  %v408 = vadd.f32 0.0, %v407
  %v409 = vpop.f32.mrb[0].mxu0
  %v410 = vpop.f32.mrb[0].mxu0
  %v411 = vadd.f32 0.0, %v410
  %v412 = vpop.f32.mrb[0].mxu0
  %413 = vmatprep.mubr.bf16.mxu0 0
  %414 = vmatmul.mubr.bf16.gmra.mrb[0].mxu0 %v271
  %v415 = vpop.f32.mrb[0].mxu0
  %v416 = vadd.f32 0.0, %v415
  %v417 = vpop.f32.mrb[0].mxu0
  %v418 = vpop.f32.mrb[0].mxu0
  %v419 = vadd.f32 0.0, %v418
  %v420 = vpop.f32.mrb[0].mxu0
  %421 = vmatprep.mubr.bf16.mxu0 0
  %422 = vmatmul.mubr.bf16.gmra.mrb[0].mxu0 %v274
  %v423 = vpop.f32.mrb[0].mxu0
  %v424 = vadd.f32 0.0, %v423
  %v425 = vpop.f32.mrb[0].mxu0
  %v426 = vpop.f32.mrb[0].mxu0
  %v427 = vadd.f32 0.0, %v426
  %v428 = vpop.f32.mrb[0].mxu0
  %429 = vmatprep.mubr.bf16.mxu0 0
  %430 = vmatmul.mubr.bf16.gmra.mrb[0].mxu0 %v277
  %v431 = vpop.f32.mrb[0].mxu0
  %v432 = vadd.f32 0.0, %v431
  %v433 = vpop.f32.mrb[0].mxu0
  %v434 = vpop.f32.mrb[0].mxu0
  %v435 = vadd.f32 0.0, %v434
  %v436 = vpop.f32.mrb[0].mxu0
  %437 = vmatprep.mubr.bf16.mxu0 0
  %438 = vmatmul.mubr.bf16.gmra.mrb[0].mxu0 %v280
  %v439 = vpop.f32.mrb[0].mxu0
  %v440 = vadd.f32 0.0, %v439
  %v441 = vpop.f32.mrb[0].mxu0
  %v442 = vpop.f32.mrb[0].mxu0
  %v443 = vadd.f32 0.0, %v442
  %v444 = vpop.f32.mrb[0].mxu0
  %445 = vmatprep.mubr.bf16.mxu0 0
  %446 = vmatmul.mubr.bf16.gmra.mrb[0].mxu0 %v283
  %v447 = vpop.f32.mrb[0].mxu0
  %v448 = vadd.f32 0.0, %v447
  %v449 = vpop.f32.mrb[0].mxu0
  %v450 = vpop.f32.mrb[0].mxu0
  %v451 = vadd.f32 0.0, %v450
  %v452 = vpop.f32.mrb[0].mxu0
  %453 = vmatprep.mubr.bf16.mxu0 0
  %454 = vmatmul.mubr.bf16.gmra.mrb[0].mxu0 %v286
  %v455 = vpop.f32.mrb[0].mxu0
  %v456 = vadd.f32 0.0, %v455
  %v457 = vpop.f32.mrb[0].mxu0
  %v458 = vpop.f32.mrb[0].mxu0
  %v459 = vadd.f32 0.0, %v458
  %v460 = vpop.f32.mrb[0].mxu0
  %461 = vmatprep.mubr.bf16.mxu0 0
  %462 = vmatmul.mubr.bf16.gmra.mrb[0].mxu0 %v289
  %v463 = vpop.f32.mrb[0].mxu0
  %v464 = vadd.f32 0.0, %v463
  %v465 = vpop.f32.mrb[0].mxu0
  %v466 = vpop.f32.mrb[0].mxu0
  %v467 = vadd.f32 0.0, %v466
  %v468 = vpop.f32.mrb[0].mxu0
  %469 = vmatprep.mubr.bf16.mxu0 0
  %470 = vmatmul.mubr.bf16.gmra.mrb[0].mxu0 %v292
  %v471 = vpop.f32.mrb[0].mxu0
  %v472 = vadd.f32 0.0, %v471
  %v473 = vpop.f32.mrb[0].mxu0
  %v474 = vpop.f32.mrb[0].mxu0
  %v475 = vadd.f32 0.0, %v474
  %v476 = vpop.f32.mrb[0].mxu0
  %477 = vmatprep.mubr.bf16.mxu0 0
  %478 = vmatmul.mubr.bf16.gmra.mrb[0].mxu0 %v295
  %v479 = vpop.f32.mrb[0].mxu0
  %v480 = vadd.f32 0.0, %v479
  %v481 = vpop.f32.mrb[0].mxu0
  %v482 = vpop.f32.mrb[0].mxu0
  %v483 = vadd.f32 0.0, %v482
  %v484 = vpop.f32.mrb[0].mxu0
  %485 = vmatprep.mubr.bf16.mxu0 0
  %486 = vmatmul.mubr.bf16.gmra.mrb[0].mxu0 %v298
  %v487 = vpop.f32.mrb[0].mxu0
  %v488 = vadd.f32 0.0, %v487
  %v489 = vpop.f32.mrb[0].mxu0
  %v490 = vpop.f32.mrb[0].mxu0
  %v491 = vadd.f32 0.0, %v490
  %v492 = vpop.f32.mrb[0].mxu0
  %493 = vmatprep.mubr.bf16.mxu0 0
  %494 = vmatmul.mubr.bf16.gmra.mrb[0].mxu0 %v301
  %v495 = vpop.f32.mrb[0].mxu0
  %v496 = vadd.f32 0.0, %v495
  %v497 = vpop.f32.mrb[0].mxu0
  %v498 = vpop.f32.mrb[0].mxu0
  %v499 = vadd.f32 0.0, %v498
  %v500 = vpop.f32.mrb[0].mxu0
  %501 = vmatprep.mubr.bf16.mxu0 0
  %502 = vmatmul.mubr.bf16.gmra.mrb[0].mxu0 %v304
  %v503 = vpop.f32.mrb[0].mxu0
  %v504 = vadd.f32 0.0, %v503
  %v505 = vpop.f32.mrb[0].mxu0
  %v506 = vpop.f32.mrb[0].mxu0
  %v507 = vadd.f32 0.0, %v506
  %v508 = vpop.f32.mrb[0].mxu0
  %509 = vmatprep.mubr.bf16.mxu0 0
  %510 = vmatmul.mubr.bf16.gmra.mrb[0].mxu0 %v307
  %v511 = vpop.f32.mrb[0].mxu0
  %v512 = vadd.f32 0.0, %v511
  %v513 = vpop.f32.mrb[0].mxu0
  %v514 = vpop.f32.mrb[0].mxu0
  %v515 = vadd.f32 0.0, %v514
  %v516 = vpop.f32.mrb[0].mxu0
  %517 = vmatprep.mubr.bf16.mxu0 0
  %518 = vmatmul.mubr.bf16.gmra.mrb[0].mxu0 %v310
  %v519 = vpop.f32.mrb[0].mxu0
  %v520 = vadd.f32 0.0, %v519
  %v521 = vpop.f32.mrb[0].mxu0
  %v522 = vpop.f32.mrb[0].mxu0
  %v523 = vadd.f32 0.0, %v522
  %v524 = vpop.f32.mrb[0].mxu0
  %525 = vmatprep.mubr.bf16.mxu0 0
  %526 = vmatmul.mubr.bf16.gmra.mrb[0].mxu0 %v313
  %v527 = vpop.f32.mrb[0].mxu0
  %v528 = vadd.f32 0.0, %v527
  %v529 = vpop.f32.mrb[0].mxu0
  %v530 = vpop.f32.mrb[0].mxu0
  %v531 = vadd.f32 0.0, %v530
  %v532 = vpop.f32.mrb[0].mxu0
  %533 = vmatprep.mubr.bf16.mxu0 0
  %534 = vmatmul.mubr.bf16.gmra.mrb[0].mxu0 %v316
  %v535 = vpop.f32.mrb[0].mxu0
  %v536 = vadd.f32 0.0, %v535
  %v537 = vpop.f32.mrb[0].mxu0
  %v538 = vpop.f32.mrb[0].mxu0
  %v539 = vadd.f32 0.0, %v538
  %v540 = vpop.f32.mrb[0].mxu0
  %541 = vmatprep.mubr.bf16.mxu0 0
  %542 = vmatmul.mubr.bf16.gmra.mrb[0].mxu0 %v319
  %v543 = vpop.f32.mrb[0].mxu0
  %v544 = vadd.f32 0.0, %v543
  %v545 = vpop.f32.mrb[0].mxu0
  %v546 = vpop.f32.mrb[0].mxu0
  %v547 = vadd.f32 0.0, %v546
  %v548 = vpop.f32.mrb[0].mxu0
  %549 = vmatprep.mubr.bf16.mxu0 0
  %550 = vmatmul.mubr.bf16.gmra.mrb[0].mxu0 %v322
  %v551 = vpop.f32.mrb[0].mxu0
  %v552 = vadd.f32 0.0, %v551
  %v553 = vpop.f32.mrb[0].mxu0
  %v554 = vpop.f32.mrb[0].mxu0
  %v555 = vadd.f32 0.0, %v554
  %v556 = vpop.f32.mrb[0].mxu0
  %557 = vmatprep.mubr.bf16.mxu0 0
  %558 = vmatmul.mubr.bf16.gmra.mrb[0].mxu0 %v325
  %v559 = vpop.f32.mrb[0].mxu0
  %v560 = vadd.f32 0.0, %v559
  %v561 = vpop.f32.mrb[0].mxu0
  %v562 = vpop.f32.mrb[0].mxu0
  %v563 = vadd.f32 0.0, %v562
  %v564 = vpop.f32.mrb[0].mxu0
  %565 = vmatprep.mubr.bf16.mxu0 0
  %566 = vmatmul.mubr.bf16.gmra.mrb[0].mxu0 %v328
  %v567 = vpop.f32.mrb[0].mxu0
  %v568 = vadd.f32 0.0, %v567
  %v569 = vpop.f32.mrb[0].mxu0
  %v570 = vpop.f32.mrb[0].mxu0
  %v571 = vadd.f32 0.0, %v570
  %v572 = vpop.f32.mrb[0].mxu0
  %573 = vmatprep.mubr.bf16.mxu0 0
  %574 = vmatmul.mubr.bf16.gmra.mrb[0].mxu0 %v331
  %v575 = vpop.f32.mrb[0].mxu0
  %v576 = vadd.f32 0.0, %v575
  %v577 = vpop.f32.mrb[0].mxu0
  %v578 = vpop.f32.mrb[0].mxu0
  %v579 = vadd.f32 0.0, %v578
  %v580 = vpop.f32.mrb[0].mxu0
  %581 = vmatprep.mubr.bf16.mxu0 0
  %582 = vmatmul.mubr.bf16.gmra.mrb[0].mxu0 %v334
  %v583 = vpop.f32.mrb[0].mxu0
  %v584 = vadd.f32 0.0, %v583
  %v585 = vpop.f32.mrb[0].mxu0
  %v586 = vpop.f32.mrb[0].mxu0
  %v587 = vadd.f32 0.0, %v586
  %v588 = vpop.f32.mrb[0].mxu0
  %589 = vmatprep.mubr.bf16.mxu0 0
  %590 = vmatmul.mubr.bf16.gmra.mrb[0].mxu0 %v337
  %v591 = vpop.f32.mrb[0].mxu0
  %v592 = vadd.f32 0.0, %v591
  %v593 = vpop.f32.mrb[0].mxu0
  %v594 = vpop.f32.mrb[0].mxu0
  %v595 = vadd.f32 0.0, %v594
  %v596 = vpop.f32.mrb[0].mxu0
  %597 = vmatprep.mubr.bf16.mxu0 0
  %598 = vmatmul.mubr.bf16.gmra.mrb[0].mxu0 %v340
  %v599 = vpop.f32.mrb[0].mxu0
  %v600 = vadd.f32 0.0, %v599
  %v601 = vpop.f32.mrb[0].mxu0
  %v602 = vpop.f32.mrb[0].mxu0
  %v603 = vadd.f32 0.0, %v602
  %v604 = vpop.f32.mrb[0].mxu0
  %605 = vmatprep.mubr.bf16.mxu0 0
  %606 = vmatmul.mubr.bf16.gmra.mrb[0].mxu0 %v343
  %v607 = vpop.f32.mrb[0].mxu0
  %v608 = vadd.f32 0.0, %v607
  %v609 = vpop.f32.mrb[0].mxu0
  %v610 = vpop.f32.mrb[0].mxu0
  %v611 = vadd.f32 0.0, %v610
  %v612 = vpop.f32.mrb[0].mxu0
  %613 = vmatprep.mubr.bf16.mxu0 0
  %614 = vmatmul.mubr.bf16.gmra.mrb[0].mxu0 %v346
  %v615 = vpop.f32.mrb[0].mxu0
  %v616 = vadd.f32 0.0, %v615
  %v617 = vpop.f32.mrb[0].mxu0
  %v618 = vpop.f32.mrb[0].mxu0
  %v619 = vadd.f32 0.0, %v618
  %v620 = vpop.f32.mrb[0].mxu0
  %621 = vmatprep.mubr.bf16.mxu0 0
  %622 = vmatmul.mubr.bf16.gmra.mrb[0].mxu0 %v349
  %v623 = vpop.f32.mrb[0].mxu0
  %v624 = vadd.f32 0.0, %v623
  %v625 = vpop.f32.mrb[0].mxu0
  %v626 = vpop.f32.mrb[0].mxu0
  %v627 = vadd.f32 0.0, %v626
  %v628 = vpop.f32.mrb[0].mxu0
  %629 = vmatprep.mubr.bf16.mxu0 0
  %630 = vmatmul.mubr.bf16.gmra.mrb[0].mxu0 %v352
  %v631 = vpop.f32.mrb[0].mxu0
  %v632 = vadd.f32 0.0, %v631
  %v633 = vpop.f32.mrb[0].mxu0
  %v634 = vpop.f32.mrb[0].mxu0
  %v635 = vadd.f32 0.0, %v634
  %v636 = vpop.f32.mrb[0].mxu0
  %637 = vmatprep.mubr.bf16.mxu0 0
  %638 = vmatmul.mubr.bf16.gmra.mrb[0].mxu0 %v355
  %v639 = vpop.f32.mrb[0].mxu0
  %v640 = vadd.f32 0.0, %v639
  %v641 = vpop.f32.mrb[0].mxu0
  %v642 = vpop.f32.mrb[0].mxu0
  %v643 = vadd.f32 0.0, %v642
  %v644 = vpop.f32.mrb[0].mxu0
  %645 = vdwg.mxu0
  %vm646 = vcmp.gt.f32.partialorder %v392, 0.0
  %vm647 = vcmp.gt.f32.partialorder %v395, 0.0
  %vm648 = vcmp.gt.f32.partialorder %v400, 0.0
  %vm649 = vcmp.gt.f32.partialorder %v403, 0.0
  %vm650 = vcmp.gt.f32.partialorder %v408, 0.0
  %vm651 = vcmp.gt.f32.partialorder %v411, 0.0
  %vm652 = vcmp.gt.f32.partialorder %v416, 0.0
  %vm653 = vcmp.gt.f32.partialorder %v419, 0.0
  %vm654 = vcmp.gt.f32.partialorder %v424, 0.0
  %vm655 = vcmp.gt.f32.partialorder %v427, 0.0
  %vm656 = vcmp.gt.f32.partialorder %v432, 0.0
  %vm657 = vcmp.gt.f32.partialorder %v435, 0.0
  %vm658 = vcmp.gt.f32.partialorder %v440, 0.0
  %vm659 = vcmp.gt.f32.partialorder %v443, 0.0
  %vm660 = vcmp.gt.f32.partialorder %v448, 0.0
  %vm661 = vcmp.gt.f32.partialorder %v451, 0.0
  %vm662 = vcmp.gt.f32.partialorder %v456, 0.0
  %vm663 = vcmp.gt.f32.partialorder %v459, 0.0
  %vm664 = vcmp.gt.f32.partialorder %v464, 0.0
  %vm665 = vcmp.gt.f32.partialorder %v467, 0.0
  %vm666 = vcmp.gt.f32.partialorder %v472, 0.0
  %vm667 = vcmp.gt.f32.partialorder %v475, 0.0
  %vm668 = vcmp.gt.f32.partialorder %v480, 0.0
  %vm669 = vcmp.gt.f32.partialorder %v483, 0.0
  %vm670 = vcmp.gt.f32.partialorder %v488, 0.0
  %vm671 = vcmp.gt.f32.partialorder %v491, 0.0
  %vm672 = vcmp.gt.f32.partialorder %v496, 0.0
  %vm673 = vcmp.gt.f32.partialorder %v499, 0.0
  %vm674 = vcmp.gt.f32.partialorder %v504, 0.0
  %vm675 = vcmp.gt.f32.partialorder %v507, 0.0
  %vm676 = vcmp.gt.f32.partialorder %v512, 0.0
  %vm677 = vcmp.gt.f32.partialorder %v515, 0.0
  %vm678 = vcmp.gt.f32.partialorder %v520, 0.0
  %vm679 = vcmp.gt.f32.partialorder %v523, 0.0
  %vm680 = vcmp.gt.f32.partialorder %v528, 0.0
  %vm681 = vcmp.gt.f32.partialorder %v531, 0.0
  %vm682 = vcmp.gt.f32.partialorder %v536, 0.0
  %vm683 = vcmp.gt.f32.partialorder %v539, 0.0
  %vm684 = vcmp.gt.f32.partialorder %v544, 0.0
  %vm685 = vcmp.gt.f32.partialorder %v547, 0.0
  %vm686 = vcmp.gt.f32.partialorder %v552, 0.0
  %vm687 = vcmp.gt.f32.partialorder %v555, 0.0
  %vm688 = vcmp.gt.f32.partialorder %v560, 0.0
  %vm689 = vcmp.gt.f32.partialorder %v563, 0.0
  %vm690 = vcmp.gt.f32.partialorder %v568, 0.0
  %vm691 = vcmp.gt.f32.partialorder %v571, 0.0
  %vm692 = vcmp.gt.f32.partialorder %v576, 0.0
  %vm693 = vcmp.gt.f32.partialorder %v579, 0.0
  %vm694 = vcmp.gt.f32.partialorder %v584, 0.0
  %vm695 = vcmp.gt.f32.partialorder %v587, 0.0
  %vm696 = vcmp.gt.f32.partialorder %v592, 0.0
  %vm697 = vcmp.gt.f32.partialorder %v595, 0.0
  %vm698 = vcmp.gt.f32.partialorder %v600, 0.0
  %vm699 = vcmp.gt.f32.partialorder %v603, 0.0
  %vm700 = vcmp.gt.f32.partialorder %v608, 0.0
  %vm701 = vcmp.gt.f32.partialorder %v611, 0.0
  %vm702 = vcmp.gt.f32.partialorder %v616, 0.0
  %vm703 = vcmp.gt.f32.partialorder %v619, 0.0
  %vm704 = vcmp.gt.f32.partialorder %v624, 0.0
  %vm705 = vcmp.gt.f32.partialorder %v627, 0.0
  %vm706 = vcmp.gt.f32.partialorder %v632, 0.0
  %vm707 = vcmp.gt.f32.partialorder %v635, 0.0
  %vm708 = vcmp.gt.f32.partialorder %v640, 0.0
  %vm709 = vcmp.gt.f32.partialorder %v643, 0.0
  %v710 = vmul.f32 %v392, 0.2
  %v711 = vmul.f32 %v395, 0.2
  %v712 = vmul.f32 %v400, 0.2
  %v713 = vmul.f32 %v403, 0.2
  %v714 = vmul.f32 %v408, 0.2
  %v715 = vmul.f32 %v411, 0.2
  %v716 = vmul.f32 %v416, 0.2
  %v717 = vmul.f32 %v419, 0.2
  %v718 = vmul.f32 %v424, 0.2
  %v719 = vmul.f32 %v427, 0.2
  %v720 = vmul.f32 %v432, 0.2
  %v721 = vmul.f32 %v435, 0.2
  %v722 = vmul.f32 %v440, 0.2
  %v723 = vmul.f32 %v443, 0.2
  %v724 = vmul.f32 %v448, 0.2
  %v725 = vmul.f32 %v451, 0.2
  %v726 = vmul.f32 %v456, 0.2
  %v727 = vmul.f32 %v459, 0.2
  %v728 = vmul.f32 %v464, 0.2
  %v729 = vmul.f32 %v467, 0.2
  %v730 = vmul.f32 %v472, 0.2
  %v731 = vmul.f32 %v475, 0.2
  %v732 = vmul.f32 %v480, 0.2
  %v733 = vmul.f32 %v483, 0.2
  %v734 = vmul.f32 %v488, 0.2
  %v735 = vmul.f32 %v491, 0.2
  %v736 = vmul.f32 %v496, 0.2
  %v737 = vmul.f32 %v499, 0.2
  %v738 = vmul.f32 %v504, 0.2
  %v739 = vmul.f32 %v507, 0.2
  %v740 = vmul.f32 %v512, 0.2
  %v741 = vmul.f32 %v515, 0.2
  %v742 = vmul.f32 %v520, 0.2
  %v743 = vmul.f32 %v523, 0.2
  %v744 = vmul.f32 %v528, 0.2
  %v745 = vmul.f32 %v531, 0.2
  %v746 = vmul.f32 %v536, 0.2
  %v747 = vmul.f32 %v539, 0.2
  %v748 = vmul.f32 %v544, 0.2
  %v749 = vmul.f32 %v547, 0.2
  %v750 = vmul.f32 %v552, 0.2
  %v751 = vmul.f32 %v555, 0.2
  %v752 = vmul.f32 %v560, 0.2
  %v753 = vmul.f32 %v563, 0.2
  %v754 = vmul.f32 %v568, 0.2
  %v755 = vmul.f32 %v571, 0.2
  %v756 = vmul.f32 %v576, 0.2
  %v757 = vmul.f32 %v579, 0.2
  %v758 = vmul.f32 %v584, 0.2
  %v759 = vmul.f32 %v587, 0.2
  %v760 = vmul.f32 %v592, 0.2
  %v761 = vmul.f32 %v595, 0.2
  %v762 = vmul.f32 %v600, 0.2
  %v763 = vmul.f32 %v603, 0.2
  %v764 = vmul.f32 %v608, 0.2
  %v765 = vmul.f32 %v611, 0.2
  %v766 = vmul.f32 %v616, 0.2
  %v767 = vmul.f32 %v619, 0.2
  %v768 = vmul.f32 %v624, 0.2
  %v769 = vmul.f32 %v627, 0.2
  %v770 = vmul.f32 %v632, 0.2
  %v771 = vmul.f32 %v635, 0.2
  %v772 = vmul.f32 %v640, 0.2
  %v773 = vmul.f32 %v643, 0.2
  %v774 = vsel %vm646, %v392, %v710
  %v775 = vsel %vm647, %v395, %v711
  %v776 = vsel %vm648, %v400, %v712
  %v777 = vsel %vm649, %v403, %v713
  %v778 = vsel %vm650, %v408, %v714
  %v779 = vsel %vm651, %v411, %v715
  %v780 = vsel %vm652, %v416, %v716
  %v781 = vsel %vm653, %v419, %v717
  %v782 = vsel %vm654, %v424, %v718
  %v783 = vsel %vm655, %v427, %v719
  %v784 = vsel %vm656, %v432, %v720
  %v785 = vsel %vm657, %v435, %v721
  %v786 = vsel %vm658, %v440, %v722
  %v787 = vsel %vm659, %v443, %v723
  %v788 = vsel %vm660, %v448, %v724
  %v789 = vsel %vm661, %v451, %v725
  %v790 = vsel %vm662, %v456, %v726
  %v791 = vsel %vm663, %v459, %v727
  %v792 = vsel %vm664, %v464, %v728
  %v793 = vsel %vm665, %v467, %v729
  %v794 = vsel %vm666, %v472, %v730
  %v795 = vsel %vm667, %v475, %v731
  %v796 = vsel %vm668, %v480, %v732
  %v797 = vsel %vm669, %v483, %v733
  %v798 = vsel %vm670, %v488, %v734
  %v799 = vsel %vm671, %v491, %v735
  %v800 = vsel %vm672, %v496, %v736
  %v801 = vsel %vm673, %v499, %v737
  %v802 = vsel %vm674, %v504, %v738
  %v803 = vsel %vm675, %v507, %v739
  %v804 = vsel %vm676, %v512, %v740
  %v805 = vsel %vm677, %v515, %v741
  %v806 = vsel %vm678, %v520, %v742
  %v807 = vsel %vm679, %v523, %v743
  %v808 = vsel %vm680, %v528, %v744
  %v809 = vsel %vm681, %v531, %v745
  %v810 = vsel %vm682, %v536, %v746
  %v811 = vsel %vm683, %v539, %v747
  %v812 = vsel %vm684, %v544, %v748
  %v813 = vsel %vm685, %v547, %v749
  %v814 = vsel %vm686, %v552, %v750
  %v815 = vsel %vm687, %v555, %v751
  %v816 = vsel %vm688, %v560, %v752
  %v817 = vsel %vm689, %v563, %v753
  %v818 = vsel %vm690, %v568, %v754
  %v819 = vsel %vm691, %v571, %v755
  %v820 = vsel %vm692, %v576, %v756
  %v821 = vsel %vm693, %v579, %v757
  %v822 = vsel %vm694, %v584, %v758
  %v823 = vsel %vm695, %v587, %v759
  %v824 = vsel %vm696, %v592, %v760
  %v825 = vsel %vm697, %v595, %v761
  %v826 = vsel %vm698, %v600, %v762
  %v827 = vsel %vm699, %v603, %v763
  %v828 = vsel %vm700, %v608, %v764
  %v829 = vsel %vm701, %v611, %v765
  %v830 = vsel %vm702, %v616, %v766
  %v831 = vsel %vm703, %v619, %v767
  %v832 = vsel %vm704, %v624, %v768
  %v833 = vsel %vm705, %v627, %v769
  %v834 = vsel %vm706, %v632, %v770
  %v835 = vsel %vm707, %v635, %v771
  %v836 = vsel %vm708, %v640, %v772
  %v837 = vsel %vm709, %v643, %v773
  %v838 = vpack.c.bf16 %v775, %v774
  %v839 = vpack.c.bf16 %v777, %v776
  %v840 = vpack.c.bf16 %v779, %v778
  %v841 = vpack.c.bf16 %v781, %v780
  %v842 = vpack.c.bf16 %v783, %v782
  %v843 = vpack.c.bf16 %v785, %v784
  %v844 = vpack.c.bf16 %v787, %v786
  %v845 = vpack.c.bf16 %v789, %v788
  %v846 = vpack.c.bf16 %v791, %v790
  %v847 = vpack.c.bf16 %v793, %v792
  %v848 = vpack.c.bf16 %v795, %v794
  %v849 = vpack.c.bf16 %v797, %v796
  %v850 = vpack.c.bf16 %v799, %v798
  %v851 = vpack.c.bf16 %v801, %v800
  %v852 = vpack.c.bf16 %v803, %v802
  %v853 = vpack.c.bf16 %v805, %v804
  %v854 = vpack.c.bf16 %v807, %v806
  %v855 = vpack.c.bf16 %v809, %v808
  %v856 = vpack.c.bf16 %v811, %v810
  %v857 = vpack.c.bf16 %v813, %v812
  %v858 = vpack.c.bf16 %v815, %v814
  %v859 = vpack.c.bf16 %v817, %v816
  %v860 = vpack.c.bf16 %v819, %v818
  %v861 = vpack.c.bf16 %v821, %v820
  %v862 = vpack.c.bf16 %v823, %v822
  %v863 = vpack.c.bf16 %v825, %v824
  %v864 = vpack.c.bf16 %v827, %v826
  %v865 = vpack.c.bf16 %v829, %v828
  %v866 = vpack.c.bf16 %v831, %v830
  %v867 = vpack.c.bf16 %v833, %v832
  %v868 = vpack.c.bf16 %v835, %v834
  %v869 = vpack.c.bf16 %v837, %v836
  %v902 = vunpack.c.l.b16 %v838
  %v903 = vunpack.c.h.b16 %v838
  %v904 = vunpack.c.l.b16 %v839
  %v905 = vunpack.c.h.b16 %v839
  %v906 = vunpack.c.l.b16 %v840
  %v907 = vunpack.c.h.b16 %v840
  %v908 = vunpack.c.l.b16 %v841
  %v909 = vunpack.c.h.b16 %v841
  %v910 = vunpack.c.l.b16 %v842
  %v911 = vunpack.c.h.b16 %v842
  %v912 = vunpack.c.l.b16 %v843
  %v913 = vunpack.c.h.b16 %v843
  %v914 = vunpack.c.l.b16 %v844
  %v915 = vunpack.c.h.b16 %v844
  %v916 = vunpack.c.l.b16 %v845
  %v917 = vunpack.c.h.b16 %v845
  %v918 = vunpack.c.l.b16 %v846
  %v919 = vunpack.c.h.b16 %v846
  %v920 = vunpack.c.l.b16 %v847
  %v921 = vunpack.c.h.b16 %v847
  %v922 = vunpack.c.l.b16 %v848
  %v923 = vunpack.c.h.b16 %v848
  %v924 = vunpack.c.l.b16 %v849
  %v925 = vunpack.c.h.b16 %v849
  %v926 = vunpack.c.l.b16 %v850
  %v927 = vunpack.c.h.b16 %v850
  %v928 = vunpack.c.l.b16 %v851
  %v929 = vunpack.c.h.b16 %v851
  %v930 = vunpack.c.l.b16 %v852
  %v931 = vunpack.c.h.b16 %v852
  %v932 = vunpack.c.l.b16 %v853
  %v933 = vunpack.c.h.b16 %v853
  %v934 = vunpack.c.l.b16 %v854
  %v935 = vunpack.c.h.b16 %v854
  %v936 = vunpack.c.l.b16 %v855
  %v937 = vunpack.c.h.b16 %v855
  %v938 = vunpack.c.l.b16 %v856
  %v939 = vunpack.c.h.b16 %v856
  %v940 = vunpack.c.l.b16 %v857
  %v941 = vunpack.c.h.b16 %v857
  %v942 = vunpack.c.l.b16 %v858
  %v943 = vunpack.c.h.b16 %v858
  %v944 = vunpack.c.l.b16 %v859
  %v945 = vunpack.c.h.b16 %v859
  %v946 = vunpack.c.l.b16 %v860
  %v947 = vunpack.c.h.b16 %v860
  %v948 = vunpack.c.l.b16 %v861
  %v949 = vunpack.c.h.b16 %v861
  %v950 = vunpack.c.l.b16 %v862
  %v951 = vunpack.c.h.b16 %v862
  %v952 = vunpack.c.l.b16 %v863
  %v953 = vunpack.c.h.b16 %v863
  %v954 = vunpack.c.l.b16 %v864
  %v955 = vunpack.c.h.b16 %v864
  %v956 = vunpack.c.l.b16 %v865
  %v957 = vunpack.c.h.b16 %v865
  %v958 = vunpack.c.l.b16 %v866
  %v959 = vunpack.c.h.b16 %v866
  %v960 = vunpack.c.l.b16 %v867
  %v961 = vunpack.c.h.b16 %v867
  %v962 = vunpack.c.l.b16 %v868
  %v963 = vunpack.c.h.b16 %v868
  %v964 = vunpack.c.l.b16 %v869
  %v965 = vunpack.c.h.b16 %v869
  %v966 = vpack.c.b16 %v902, %v902
  %v967 = vpack.c.b16 %v903, %v903
  %v968 = vpack.c.b16 %v904, %v904
  %v969 = vpack.c.b16 %v905, %v905
  %v970 = vpack.c.b16 %v906, %v906
  %v971 = vpack.c.b16 %v907, %v907
  %v972 = vpack.c.b16 %v908, %v908
  %v973 = vpack.c.b16 %v909, %v909
  %v974 = vpack.c.b16 %v910, %v910
  %v975 = vpack.c.b16 %v911, %v911
  %v976 = vpack.c.b16 %v912, %v912
  %v977 = vpack.c.b16 %v913, %v913
  %v978 = vpack.c.b16 %v914, %v914
  %v979 = vpack.c.b16 %v915, %v915
  %v980 = vpack.c.b16 %v916, %v916
  %v981 = vpack.c.b16 %v917, %v917
  %v982 = vpack.c.b16 %v918, %v918
  %v983 = vpack.c.b16 %v919, %v919
  %v984 = vpack.c.b16 %v920, %v920
  %v985 = vpack.c.b16 %v921, %v921
  %v986 = vpack.c.b16 %v922, %v922
  %v987 = vpack.c.b16 %v923, %v923
  %v988 = vpack.c.b16 %v924, %v924
  %v989 = vpack.c.b16 %v925, %v925
  %v990 = vpack.c.b16 %v926, %v926
  %v991 = vpack.c.b16 %v927, %v927
  %v992 = vpack.c.b16 %v928, %v928
  %v993 = vpack.c.b16 %v929, %v929
  %v994 = vpack.c.b16 %v930, %v930
  %v995 = vpack.c.b16 %v931, %v931
  %v996 = vpack.c.b16 %v932, %v932
  %v997 = vpack.c.b16 %v933, %v933
  %v998 = vpack.c.b16 %v934, %v934
  %v999 = vpack.c.b16 %v935, %v935
  %v1000 = vpack.c.b16 %v936, %v936
  %v1001 = vpack.c.b16 %v937, %v937
  %v1002 = vpack.c.b16 %v938, %v938
  %v1003 = vpack.c.b16 %v939, %v939
  %v1004 = vpack.c.b16 %v940, %v940
  %v1005 = vpack.c.b16 %v941, %v941
  %v1006 = vpack.c.b16 %v942, %v942
  %v1007 = vpack.c.b16 %v943, %v943
  %v1008 = vpack.c.b16 %v944, %v944
  %v1009 = vpack.c.b16 %v945, %v945
  %v1010 = vpack.c.b16 %v946, %v946
  %v1011 = vpack.c.b16 %v947, %v947
  %v1012 = vpack.c.b16 %v948, %v948
  %v1013 = vpack.c.b16 %v949, %v949
  %v1014 = vpack.c.b16 %v950, %v950
  %v1015 = vpack.c.b16 %v951, %v951
  %v1016 = vpack.c.b16 %v952, %v952
  %v1017 = vpack.c.b16 %v953, %v953
  %v1018 = vpack.c.b16 %v954, %v954
  %v1019 = vpack.c.b16 %v955, %v955
  %v1020 = vpack.c.b16 %v956, %v956
  %v1021 = vpack.c.b16 %v957, %v957
  %v1022 = vpack.c.b16 %v958, %v958
  %v1023 = vpack.c.b16 %v959, %v959
  %v1024 = vpack.c.b16 %v960, %v960
  %v1025 = vpack.c.b16 %v961, %v961
  %v1026 = vpack.c.b16 %v962, %v962
  %v1027 = vpack.c.b16 %v963, %v963
  %v1028 = vpack.c.b16 %v964, %v964
  %v1029 = vpack.c.b16 %v965, %v965
  %vm1094 = vcmask 60416
  %1095 = vst.msk [vmem:[%s2] sm:$0xf] %vm1094, %v966
  %1096 = vst.msk [vmem:[%s2 + $0x4] sm:$0xf] %vm1094, %v967
  %1097 = vst.msk [vmem:[%s2 + $0x8] sm:$0xf] %vm1094, %v968
  %1098 = vst.msk [vmem:[%s2 + $0xc] sm:$0xf] %vm1094, %v969
  %1099 = vst.msk [vmem:[%s2 + $0x10] sm:$0xf] %vm1094, %v970
  %1100 = vst.msk [vmem:[%s2 + $0x14] sm:$0xf] %vm1094, %v971
  %1101 = vst.msk [vmem:[%s2 + $0x18] sm:$0xf] %vm1094, %v972
  %1102 = vst.msk [vmem:[%s2 + $0x1c] sm:$0xf] %vm1094, %v973
  %1103 = vst.msk [vmem:[%s2 + $0x20] sm:$0xf] %vm1094, %v974
  %1104 = vst.msk [vmem:[%s2 + $0x24] sm:$0xf] %vm1094, %v975
  %1105 = vst.msk [vmem:[%s2 + $0x28] sm:$0xf] %vm1094, %v976
  %1106 = vst.msk [vmem:[%s2 + $0x2c] sm:$0xf] %vm1094, %v977
  %1107 = vst.msk [vmem:[%s2 + $0x30] sm:$0xf] %vm1094, %v978
  %1108 = vst.msk [vmem:[%s2 + $0x34] sm:$0xf] %vm1094, %v979
  %1109 = vst.msk [vmem:[%s2 + $0x38] sm:$0xf] %vm1094, %v980
  %1110 = vst.msk [vmem:[%s2 + $0x3c] sm:$0xf] %vm1094, %v981
  %1111 = vst.msk [vmem:[%s2 + $0x40] sm:$0xf] %vm1094, %v982
  %1112 = vst.msk [vmem:[%s2 + $0x44] sm:$0xf] %vm1094, %v983
  %1113 = vst.msk [vmem:[%s2 + $0x48] sm:$0xf] %vm1094, %v984
  %1114 = vst.msk [vmem:[%s2 + $0x4c] sm:$0xf] %vm1094, %v985
  %1115 = vst.msk [vmem:[%s2 + $0x50] sm:$0xf] %vm1094, %v986
  %1116 = vst.msk [vmem:[%s2 + $0x54] sm:$0xf] %vm1094, %v987
  %1117 = vst.msk [vmem:[%s2 + $0x58] sm:$0xf] %vm1094, %v988
  %1118 = vst.msk [vmem:[%s2 + $0x5c] sm:$0xf] %vm1094, %v989
  %1119 = vst.msk [vmem:[%s2 + $0x60] sm:$0xf] %vm1094, %v990
  %1120 = vst.msk [vmem:[%s2 + $0x64] sm:$0xf] %vm1094, %v991
  %1121 = vst.msk [vmem:[%s2 + $0x68] sm:$0xf] %vm1094, %v992
  %1122 = vst.msk [vmem:[%s2 + $0x6c] sm:$0xf] %vm1094, %v993
  %1123 = vst.msk [vmem:[%s2 + $0x70] sm:$0xf] %vm1094, %v994
  %1124 = vst.msk [vmem:[%s2 + $0x74] sm:$0xf] %vm1094, %v995
  %1125 = vst.msk [vmem:[%s2 + $0x78] sm:$0xf] %vm1094, %v996
  %1126 = vst.msk [vmem:[%s2 + $0x7c] sm:$0xf] %vm1094, %v997
  %1127 = vst.msk [vmem:[%s2 + $0x80] sm:$0xf] %vm1094, %v998
  %1128 = vst.msk [vmem:[%s2 + $0x84] sm:$0xf] %vm1094, %v999
  %1129 = vst.msk [vmem:[%s2 + $0x88] sm:$0xf] %vm1094, %v1000
  %1130 = vst.msk [vmem:[%s2 + $0x8c] sm:$0xf] %vm1094, %v1001
  %1131 = vst.msk [vmem:[%s2 + $0x90] sm:$0xf] %vm1094, %v1002
  %1132 = vst.msk [vmem:[%s2 + $0x94] sm:$0xf] %vm1094, %v1003
  %1133 = vst.msk [vmem:[%s2 + $0x98] sm:$0xf] %vm1094, %v1004
  %1134 = vst.msk [vmem:[%s2 + $0x9c] sm:$0xf] %vm1094, %v1005
  %1135 = vst.msk [vmem:[%s2 + $0xa0] sm:$0xf] %vm1094, %v1006
  %1136 = vst.msk [vmem:[%s2 + $0xa4] sm:$0xf] %vm1094, %v1007
  %1137 = vst.msk [vmem:[%s2 + $0xa8] sm:$0xf] %vm1094, %v1008
  %1138 = vst.msk [vmem:[%s2 + $0xac] sm:$0xf] %vm1094, %v1009
  %1139 = vst.msk [vmem:[%s2 + $0xb0] sm:$0xf] %vm1094, %v1010
  %1140 = vst.msk [vmem:[%s2 + $0xb4] sm:$0xf] %vm1094, %v1011
  %1141 = vst.msk [vmem:[%s2 + $0xb8] sm:$0xf] %vm1094, %v1012
  %1142 = vst.msk [vmem:[%s2 + $0xbc] sm:$0xf] %vm1094, %v1013
  %1143 = vst.msk [vmem:[%s2 + $0xc0] sm:$0xf] %vm1094, %v1014
  %1144 = vst.msk [vmem:[%s2 + $0xc4] sm:$0xf] %vm1094, %v1015
  %1145 = vst.msk [vmem:[%s2 + $0xc8] sm:$0xf] %vm1094, %v1016
  %1146 = vst.msk [vmem:[%s2 + $0xcc] sm:$0xf] %vm1094, %v1017
  %1147 = vst.msk [vmem:[%s2 + $0xd0] sm:$0xf] %vm1094, %v1018
  %1148 = vst.msk [vmem:[%s2 + $0xd4] sm:$0xf] %vm1094, %v1019
  %1149 = vst.msk [vmem:[%s2 + $0xd8] sm:$0xf] %vm1094, %v1020
  %1150 = vst.msk [vmem:[%s2 + $0xdc] sm:$0xf] %vm1094, %v1021
  %1151 = vst.msk [vmem:[%s2 + $0xe0] sm:$0xf] %vm1094, %v1022
  %1152 = vst.msk [vmem:[%s2 + $0xe4] sm:$0xf] %vm1094, %v1023
  %1153 = vst.msk [vmem:[%s2 + $0xe8] sm:$0xf] %vm1094, %v1024
  %1154 = vst.msk [vmem:[%s2 + $0xec] sm:$0xf] %vm1094, %v1025
  %1155 = vst.msk [vmem:[%s2 + $0xf0] sm:$0xf] %vm1094, %v1026
  %1156 = vst.msk [vmem:[%s2 + $0xf4] sm:$0xf] %vm1094, %v1027
  %1157 = vst.msk [vmem:[%s2 + $0xf8] sm:$0xf] %vm1094, %v1028
  %1158 = vst.msk [vmem:[%s2 + $0xfc] sm:$0xf] %vm1094, %v1029
  // Predicated region
  $region10: #{discriminator_forward.4} parent=0 // pred_check
    _
  $region11: #{discriminator_forward.4} parent=0 // pred_check_branch
    %1160 = sbr.rel (0) target = $region13
  $region12: #{discriminator_forward.4} parent=0 // pred_region
    _
  $region13: #{discriminator_forward.4} parent=0 // pred_fallthru
    _
  // Predicated region
  $region14: #{discriminator_forward.4} parent=0 // pred_check
    _
  $region15: #{discriminator_forward.4} parent=0 // pred_check_branch
    %1162 = sbr.rel (0) target = $region17
  $region16: #{discriminator_forward.4} parent=0 // pred_region
    _
  $region17: #{discriminator_forward.4} parent=0 // pred_fallthru
    _

// kernel: discriminator_forward.5
$region0: #{discriminator_forward.5}
  #allocation0 [shape = 'u32[]', space=smem, size = 0x4, offset = 0x4, fixed_abs, tag = 'smem constant byte address 0x4 - core index']
  #allocation1 [shape = 'u32[144,128]{1,0:T(1,128)}', space=vmem, size = 0x12000, scoped, tag = 'internal scratch']
  #allocation2 [shape = 'f32[128,16]{1,0:T(8,128)}', space=vmem, size = 0x10000, scoped, tag = 'scratch operand']
  #allocation3 [shape = 'f32[1,16]{1,0:T(1,128)}', space=vmem, size = 0x200, scoped, tag = 'scratch operand']
  #allocation4 [shape = 'f32[1,16]{1,0:T(1,128)}', space=vmem, size = 0x200, scoped, tag = 'scratch operand']
  %s0 = inlined_call_operand.vmem [shape: bf16[128,128], index: 0, kind: input, shape index: {}]
  %s1 = inlined_call_operand.vmem [shape: bf16[128,16], index: 1, kind: input, shape index: {}]
  %s2 = inlined_call_operand.vmem [shape: bf16[128,16], index: 2, kind: output, shape index: {}]
  %s3 = sld [smem:[#allocation0]]
  $region53: #{discriminator_forward.5} parent=0
    _
  %s5 = ssub.s32 1, %s3
  %s6 = scalar_select 0, %s5, %s3
  loop: start=0, step=1, limit=4
  $region2: #{discriminator_forward.5} parent=0 // loop_pre_header
    _
  $region3: #{discriminator_forward.5} parent=0 // loop_header
    %s8 = sphi 0, %s12
    %p9 = scmp.ge.s32.totalorder %s8, 4
    %s15 = sphi 0, %s27
    %s16 = sphi 0, %s23
    %s17 = sphi 0, %s15
    %s18 = sphi 0, %s16
    %s19 = sphi 0, %s17
    %s20 = sphi 0, %s18
    %s34 = sphi 0, %s36
    %s37 = sphi 0, %s34
    %s38 = sphi 0, %s37
    %s54 = sphi 0, %s38
    %s58 = sphi 0, %s58
    %s60 = sphi 0, %s58
    %s61 = sphi 0, %s60
    %s75 = sphi 0, %s61
    %s83 = sphi 0, %s85
    %s86 = sphi 0, %s83
    %s87 = sphi 0, %s86
    %s103 = sphi 0, %s87
  $region4: #{discriminator_forward.5} parent=0 // loop_header_branch
    %11 = sbr.rel (%p9) target = $region8
  $region5: #{discriminator_forward.5} parent=0 // loop_body
    %s13 = ssub.s32 %s8, 1
    %s14 = ssub.s32 %s8, 2
    %s21 = sadd.s32 1, %s16
    %p22 = scmp.ge.s32.totalorder %s21, 1
    %s23 = scalar_select %p22, 0, %s21
    %s24 = sadd.s32 1, %s15
    %s25 = scalar_select %p22, %s24, %s15
    %p26 = scmp.ge.s32.totalorder %s25, 2
    %s27 = scalar_select %p26, 0, %s25
    %s28 = ssub.s32 1, %s15
    %s29 = smul.u32 %s28, %s16
    %s30 = ssub.s32 1, %s27
    %s31 = smul.u32 %s30, %s23
    %s32 = ssub.s32 %s29, %s31
    %p33 = scmp.eq.s32.totalorder %s32, 0
    %s35 = sadd.s32 %s34, 1
    %s36 = scalar_select %p33, %s34, %s35
    %p39 = pneg %p33
    %p40 = scmp.eq.s32.totalorder %s8, 1
    %p41 = por %p39, %p40
    %p42 = scmp.ne.s32.totalorder %s34, %s37
    %p43 = scmp.eq.s32.totalorder %s8, 0
    %p44 = por %p42, %p43
    %p45 = scmp.ne.s32.totalorder %s34, %s37
    %p46 = scmp.eq.s32.totalorder %s13, 1
    %p47 = por %p45, %p46
    %p48 = scmp.ne.s32.totalorder %s37, %s38
    %p49 = scmp.eq.s32.totalorder %s13, 0
    %p50 = por %p48, %p49
    %p51 = scmp.ne.s32.totalorder %s37, %s38
    %p52 = scmp.eq.s32.totalorder %s14, 1
    %p53 = por %p51, %p52
    %p55 = scmp.ne.s32.totalorder %s38, %s54
    %p56 = scmp.eq.s32.totalorder %s14, 0
    %p57 = por %p55, %p56
    %s59 = sadd.s32 %s58, 1
    %p62 = scmp.eq.s32.totalorder %s8, 1
    %p63 = scmp.ne.s32.totalorder %s58, %s60
    %p64 = scmp.eq.s32.totalorder %s8, 0
    %p65 = por %p63, %p64
    %p66 = scmp.ne.s32.totalorder %s58, %s60
    %p67 = scmp.eq.s32.totalorder %s13, 1
    %p68 = por %p66, %p67
    %p69 = scmp.ne.s32.totalorder %s60, %s61
    %p70 = scmp.eq.s32.totalorder %s13, 0
    %p71 = por %p69, %p70
    %p72 = scmp.ne.s32.totalorder %s60, %s61
    %p73 = scmp.eq.s32.totalorder %s14, 1
    %p74 = por %p72, %p73
    %p76 = scmp.ne.s32.totalorder %s61, %s75
    %p77 = scmp.eq.s32.totalorder %s14, 0
    %p78 = por %p76, %p77
    %s79 = smul.u32 %s15, %s16
    %s80 = smul.u32 %s27, %s23
    %s81 = ssub.s32 %s79, %s80
    %p82 = scmp.eq.s32.totalorder %s81, 0
    %s84 = sadd.s32 %s83, 1
    %s85 = scalar_select %p82, %s83, %s84
    %p88 = pneg %p82
    %p89 = scmp.eq.s32.totalorder %s8, 1
    %p90 = por %p88, %p89
    %p91 = scmp.ne.s32.totalorder %s83, %s86
    %p92 = scmp.eq.s32.totalorder %s8, 0
    %p93 = por %p91, %p92
    %p94 = scmp.ne.s32.totalorder %s83, %s86
    %p95 = scmp.eq.s32.totalorder %s13, 1
    %p96 = por %p94, %p95
    %p97 = scmp.ne.s32.totalorder %s86, %s87
    %p98 = scmp.eq.s32.totalorder %s13, 0
    %p99 = por %p97, %p98
    %p100 = scmp.ne.s32.totalorder %s86, %s87
    %p101 = scmp.eq.s32.totalorder %s14, 1
    %p102 = por %p100, %p101
    %p104 = scmp.ne.s32.totalorder %s87, %s103
    %p105 = scmp.eq.s32.totalorder %s14, 0
    %p106 = por %p104, %p105
    %p107 = scmp.le.s32.totalorder 1, %s8
    %p108 = scmp.lt.s32.totalorder %s8, 3
    %p109 = pnand %p107, %p108
    %p110 = pneg %p109
    // Predicated region
    $region9: #{discriminator_forward.5} parent=5 // pred_check
      _
    $region10: #{discriminator_forward.5} parent=5 // pred_check_branch
      %112 = sbr.rel (%p109) target = $region12
    $region11: #{discriminator_forward.5} parent=5 // pred_region
      %s113 = ssub.s32 %s8, 1
      // Predicated region
      $region13: #{discriminator_forward.5} parent=11 // pred_check
        %p114 = pneg %p71
      $region14: #{discriminator_forward.5} parent=11 // pred_check_branch
        %116 = sbr.rel (%p114) target = $region16
      $region15: #{discriminator_forward.5} parent=11 // pred_region
        _
      $region16: #{discriminator_forward.5} parent=11 // pred_fallthru
        _
    $region12: #{discriminator_forward.5} parent=5 // pred_fallthru
      _
    %p117 = scmp.lt.s32.totalorder %s8, 2
    // Predicated region
    $region17: #{discriminator_forward.5} parent=5 // pred_check
      %p118 = pneg %p117
    $region18: #{discriminator_forward.5} parent=5 // pred_check_branch
      %120 = sbr.rel (%p118) target = $region20
    $region19: #{discriminator_forward.5} parent=5 // pred_region
      // Predicated region
      $region21: #{discriminator_forward.5} parent=19 // pred_check
        %p121 = pneg %p44
      $region22: #{discriminator_forward.5} parent=19 // pred_check_branch
        %123 = sbr.rel (%p121) target = $region24
      $region23: #{discriminator_forward.5} parent=19 // pred_region
        %s124 = ssub.s32 1, %s15
        %s125 = smul.u32 %s124, %s16
        %s126 = smul.u32 16, %s125
        %p127 = scmp.lt.s32.totalorder %s126, 15
        %s128 = scalar_select %p127, %s126, 15
        %s129 = smul.addr %s128, 4
        %s130 = scalar_lea.vmem %s0, %s129
        %s131 = ssub.s32 1, %s15
        %s132 = smul.u32 %s131, %s16
        %s133 = smul.u32 16, %s132
      $region24: #{discriminator_forward.5} parent=19 // pred_fallthru
        _
    $region20: #{discriminator_forward.5} parent=5 // pred_fallthru
      _
    %p134 = scmp.le.s32.totalorder 1, %s8
    %p135 = scmp.lt.s32.totalorder %s8, 3
    %p136 = pnand %p134, %p135
    %p137 = pneg %p136
    // Predicated region
    $region25: #{discriminator_forward.5} parent=5 // pred_check
      _
    $region26: #{discriminator_forward.5} parent=5 // pred_check_branch
      %139 = sbr.rel (%p136) target = $region28
    $region27: #{discriminator_forward.5} parent=5 // pred_region
      %s140 = ssub.s32 %s8, 1
      %s141 = ssub.s32 1, %s17
      %s142 = smul.u32 %s141, %s18
      %s143 = smul.u32 16, %s142
      %p144 = scmp.lt.s32.totalorder %s143, 15
      %s145 = scalar_select %p144, %s143, 15
      %s146 = smul.addr %s145, 4
      %s147 = scalar_lea.vmem %s0, %s146
      %p148 = pneg %p50
      %p149 = pneg %p47
      %p150 = pneg %p71
      %p151 = pneg %p68
      %p152 = pneg %p99
      %p153 = pneg %p96
      %s154 = smul.u32 %s17, %s18
      %s155 = smul.u32 16, %s154
      %p156 = scmp.lt.s32.totalorder %s155, 15
      %s157 = scalar_select %p156, %s155, 15
      %s158 = smul.addr %s157, 4
      %s159 = scalar_lea.vmem %s2, %s158
      %s160 = ssub.s32 1, %s17
      %s161 = smul.u32 %s160, %s18
      %s162 = smul.u32 16, %s161
      %p163 = scmp.lt.s32.totalorder %s162, 15
      %s164 = scalar_select %p163, %s162, 15
      %s165 = smul.addr %s164, 4
      %s166 = scalar_lea.vmem %s0, %s165
      %s167 = ssub.s32 1, %s17
      %s168 = smul.u32 %s167, %s18
      %s169 = smul.u32 16, %s168
      %s170 = smul.u32 %s17, %s18
      %s171 = smul.u32 16, %s170
      %p172 = scmp.lt.s32.totalorder %s171, 15
      %s173 = scalar_select %p172, %s171, 15
      %s174 = smul.addr %s173, 4
      %s175 = scalar_lea.vmem %s2, %s174
      %s176 = smul.u32 %s17, %s18
      %s177 = smul.u32 16, %s176
      %p179 = scmp.eq.s32.totalorder %s17, 0
      // Predicated region
      $region29: #{discriminator_forward.5} parent=27 // pred_check
        %p180 = pneg %p179
      $region30: #{discriminator_forward.5} parent=27 // pred_check_branch
        %182 = sbr.rel (%p180) target = $region32
      $region31: #{discriminator_forward.5} parent=27 // pred_region
        %p183 = scmp.eq.s32.totalorder %s18, 0
        // Predicated region
        $region33: #{discriminator_forward.5} parent=31 // pred_check
          %p184 = pneg %p183
        $region34: #{discriminator_forward.5} parent=31 // pred_check_branch
          %186 = sbr.rel (%p184) target = $region36
        $region35: #{discriminator_forward.5} parent=31 // pred_region
          %vm187 = vcmask 122880
          %188 = vst.msk [vmem:[#allocation3] sm:$0x1] %vm187, 0.0
          %189 = vst.msk [vmem:[#allocation4] sm:$0x1] %vm187, 0.0
        $region36: #{discriminator_forward.5} parent=31 // pred_fallthru
          _
        %v190 = vld [vmem:[%s166] sm:$0xf]
        %v191 = vld [vmem:[%s166 + $0x4] sm:$0xf]
        %v192 = vld [vmem:[%s166 + $0x8] sm:$0xf]
        %v193 = vld [vmem:[%s166 + $0xc] sm:$0xf]
        %v194 = vld [vmem:[%s166 + $0x10] sm:$0xf]
        %v195 = vld [vmem:[%s166 + $0x14] sm:$0xf]
        %v196 = vld [vmem:[%s166 + $0x18] sm:$0xf]
        %v197 = vld [vmem:[%s166 + $0x1c] sm:$0xf]
        %v198 = vld [vmem:[%s166 + $0x20] sm:$0xf]
        %v199 = vld [vmem:[%s166 + $0x24] sm:$0xf]
        %v200 = vld [vmem:[%s166 + $0x28] sm:$0xf]
        %v201 = vld [vmem:[%s166 + $0x2c] sm:$0xf]
        %v202 = vld [vmem:[%s166 + $0x30] sm:$0xf]
        %v203 = vld [vmem:[%s166 + $0x34] sm:$0xf]
        %v204 = vld [vmem:[%s166 + $0x38] sm:$0xf]
        %v205 = vld [vmem:[%s166 + $0x3c] sm:$0xf]
        %v206 = vld [vmem:[%s1] sm:$0xf]
        %v207 = vld [vmem:[%s1 + $0x4] sm:$0xf]
        %v208 = vld [vmem:[%s1 + $0x8] sm:$0xf]
        %v209 = vld [vmem:[%s1 + $0xc] sm:$0xf]
        %v210 = vld [vmem:[%s1 + $0x10] sm:$0xf]
        %v211 = vld [vmem:[%s1 + $0x14] sm:$0xf]
        %v212 = vld [vmem:[%s1 + $0x18] sm:$0xf]
        %v213 = vld [vmem:[%s1 + $0x1c] sm:$0xf]
        %v214 = vld [vmem:[%s1 + $0x20] sm:$0xf]
        %v215 = vld [vmem:[%s1 + $0x24] sm:$0xf]
        %v216 = vld [vmem:[%s1 + $0x28] sm:$0xf]
        %v217 = vld [vmem:[%s1 + $0x2c] sm:$0xf]
        %v218 = vld [vmem:[%s1 + $0x30] sm:$0xf]
        %v219 = vld [vmem:[%s1 + $0x34] sm:$0xf]
        %v220 = vld [vmem:[%s1 + $0x38] sm:$0xf]
        %v221 = vld [vmem:[%s1 + $0x3c] sm:$0xf]
        %v238 = vunpack.c.l.b16 %v190
        %v239 = vunpack.c.l.b16 %v191
        %v240 = vunpack.c.l.b16 %v192
        %v241 = vunpack.c.l.b16 %v193
        %v242 = vunpack.c.l.b16 %v194
        %v243 = vunpack.c.l.b16 %v195
        %v244 = vunpack.c.l.b16 %v196
        %v245 = vunpack.c.l.b16 %v197
        %v246 = vunpack.c.l.b16 %v198
        %v247 = vunpack.c.l.b16 %v199
        %v248 = vunpack.c.l.b16 %v200
        %v249 = vunpack.c.l.b16 %v201
        %v250 = vunpack.c.l.b16 %v202
        %v251 = vunpack.c.l.b16 %v203
        %v252 = vunpack.c.l.b16 %v204
        %v253 = vunpack.c.l.b16 %v205
        %v254 = vpack.c.b16 %v239, %v238
        %v255 = vpack.c.b16 %v241, %v240
        %v256 = vpack.c.b16 %v243, %v242
        %v257 = vpack.c.b16 %v245, %v244
        %v258 = vpack.c.b16 %v247, %v246
        %v259 = vpack.c.b16 %v249, %v248
        %v260 = vpack.c.b16 %v251, %v250
        %v261 = vpack.c.b16 %v253, %v252
        %v286 = vunpack.c.l.b16 %v206
        %v287 = vunpack.c.l.b16 %v207
        %v288 = vunpack.c.l.b16 %v208
        %v289 = vunpack.c.l.b16 %v209
        %v290 = vunpack.c.l.b16 %v210
        %v291 = vunpack.c.l.b16 %v211
        %v292 = vunpack.c.l.b16 %v212
        %v293 = vunpack.c.l.b16 %v213
        %v294 = vunpack.c.l.b16 %v214
        %v295 = vunpack.c.l.b16 %v215
        %v296 = vunpack.c.l.b16 %v216
        %v297 = vunpack.c.l.b16 %v217
        %v298 = vunpack.c.l.b16 %v218
        %v299 = vunpack.c.l.b16 %v219
        %v300 = vunpack.c.l.b16 %v220
        %v301 = vunpack.c.l.b16 %v221
        %v302 = vpack.c.b16 %v287, %v286
        %v303 = vpack.c.b16 %v289, %v288
        %v304 = vpack.c.b16 %v291, %v290
        %v305 = vpack.c.b16 %v293, %v292
        %v306 = vpack.c.b16 %v295, %v294
        %v307 = vpack.c.b16 %v297, %v296
        %v308 = vpack.c.b16 %v299, %v298
        %v309 = vpack.c.b16 %v301, %v300
        %318 = vmatprep.subr.bf16.mxu0 0
        %319 = vmatpush1.bf16.msra.mxu0 %v302
        %320 = vmatprep.subr.bf16.mxu0 0
        %321 = vmatpush1.bf16.msra.mxu0 %v303
        %322 = vmatprep.subr.bf16.mxu0 0
        %323 = vmatpush1.bf16.msra.mxu0 %v304
        %324 = vmatprep.subr.bf16.mxu0 0
        %325 = vmatpush1.bf16.msra.mxu0 %v305
        %326 = vmatprep.subr.bf16.mxu0 0
        %327 = vmatpush1.bf16.msra.mxu0 %v306
        %328 = vmatprep.subr.bf16.mxu0 0
        %329 = vmatpush1.bf16.msra.mxu0 %v307
        %330 = vmatprep.subr.bf16.mxu0 0
        %331 = vmatpush1.bf16.msra.mxu0 %v308
        %332 = vmatprep.subr.bf16.mxu0 0
        %333 = vmatpush1.bf16.msra.mxu0 %v309
        %334 = vmatprep.subr.bf16.mxu0 0
        %335 = vmatpush1.bf16.msra.mxu0 0
        %336 = vmatprep.subr.bf16.mxu0 0
        %337 = vmatpush1.bf16.msra.mxu0 0
        %338 = vmatprep.subr.bf16.mxu0 0
        %339 = vmatpush1.bf16.msra.mxu0 0
        %340 = vmatprep.subr.bf16.mxu0 0
        %341 = vmatpush1.bf16.msra.mxu0 0
        %342 = vmatprep.subr.bf16.mxu0 0
        %343 = vmatpush1.bf16.msra.mxu0 0
        %344 = vmatprep.subr.bf16.mxu0 0
        %345 = vmatpush1.bf16.msra.mxu0 0
        %346 = vmatprep.subr.bf16.mxu0 0
        %347 = vmatpush1.bf16.msra.mxu0 0
        %348 = vmatprep.subr.bf16.mxu0 0
        %349 = vmatpush1.bf16.msra.mxu0 0
        %350 = vmatprep.mubr.bf16.mxu0 0
        %351 = vmatmul.mubr.bf16.gmra.mrb[0].mxu0 %v254
        %v352 = vpop.f32.mrb[0].mxu0
        %v353 = vadd.f32 0.0, %v352
        %v354 = vpop.f32.mrb[0].mxu0
        %v355 = vpop.f32.mrb[0].mxu0
        %v356 = vadd.f32 0.0, %v355
        %v357 = vpop.f32.mrb[0].mxu0
        %358 = vmatprep.mubr.bf16.mxu0 0
        %359 = vmatmul.mubr.bf16.gmra.mrb[0].mxu0 %v255
        %v360 = vpop.f32.mrb[0].mxu0
        %v361 = vadd.f32 0.0, %v360
        %v362 = vpop.f32.mrb[0].mxu0
        %v363 = vpop.f32.mrb[0].mxu0
        %v364 = vadd.f32 0.0, %v363
        %v365 = vpop.f32.mrb[0].mxu0
        %366 = vmatprep.mubr.bf16.mxu0 0
        %367 = vmatmul.mubr.bf16.gmra.mrb[0].mxu0 %v256
        %v368 = vpop.f32.mrb[0].mxu0
        %v369 = vadd.f32 0.0, %v368
        %v370 = vpop.f32.mrb[0].mxu0
        %v371 = vpop.f32.mrb[0].mxu0
        %v372 = vadd.f32 0.0, %v371
        %v373 = vpop.f32.mrb[0].mxu0
        %374 = vmatprep.mubr.bf16.mxu0 0
        %375 = vmatmul.mubr.bf16.gmra.mrb[0].mxu0 %v257
        %v376 = vpop.f32.mrb[0].mxu0
        %v377 = vadd.f32 0.0, %v376
        %v378 = vpop.f32.mrb[0].mxu0
        %v379 = vpop.f32.mrb[0].mxu0
        %v380 = vadd.f32 0.0, %v379
        %v381 = vpop.f32.mrb[0].mxu0
        %382 = vmatprep.mubr.bf16.mxu0 0
        %383 = vmatmul.mubr.bf16.gmra.mrb[0].mxu0 %v258
        %v384 = vpop.f32.mrb[0].mxu0
        %v385 = vadd.f32 0.0, %v384
        %v386 = vpop.f32.mrb[0].mxu0
        %v387 = vpop.f32.mrb[0].mxu0
        %v388 = vadd.f32 0.0, %v387
        %v389 = vpop.f32.mrb[0].mxu0
        %390 = vmatprep.mubr.bf16.mxu0 0
        %391 = vmatmul.mubr.bf16.gmra.mrb[0].mxu0 %v259
        %v392 = vpop.f32.mrb[0].mxu0
        %v393 = vadd.f32 0.0, %v392
        %v394 = vpop.f32.mrb[0].mxu0
        %v395 = vpop.f32.mrb[0].mxu0
        %v396 = vadd.f32 0.0, %v395
        %v397 = vpop.f32.mrb[0].mxu0
        %398 = vmatprep.mubr.bf16.mxu0 0
        %399 = vmatmul.mubr.bf16.gmra.mrb[0].mxu0 %v260
        %v400 = vpop.f32.mrb[0].mxu0
        %v401 = vadd.f32 0.0, %v400
        %v402 = vpop.f32.mrb[0].mxu0
        %v403 = vpop.f32.mrb[0].mxu0
        %v404 = vadd.f32 0.0, %v403
        %v405 = vpop.f32.mrb[0].mxu0
        %406 = vmatprep.mubr.bf16.mxu0 0
        %407 = vmatmul.mubr.bf16.gmra.mrb[0].mxu0 %v261
        %v408 = vpop.f32.mrb[0].mxu0
        %v409 = vadd.f32 0.0, %v408
        %v410 = vpop.f32.mrb[0].mxu0
        %v411 = vpop.f32.mrb[0].mxu0
        %v412 = vadd.f32 0.0, %v411
        %v413 = vpop.f32.mrb[0].mxu0
        %414 = vdwg.mxu0
        %s415 = smul.u32 %s18, 128
        %s416 = scalar_lea.vmem [#allocation2], %s415
        %vm417 = vcmask 130048
        %418 = vst.msk [vmem:[%s416] sm:$0xff] %vm417, %v353
        %419 = vst.msk [vmem:[%s416 + $0x8] sm:$0xff] %vm417, %v356
        %420 = vst.msk [vmem:[%s416 + $0x10] sm:$0xff] %vm417, %v361
        %421 = vst.msk [vmem:[%s416 + $0x18] sm:$0xff] %vm417, %v364
        %422 = vst.msk [vmem:[%s416 + $0x20] sm:$0xff] %vm417, %v369
        %423 = vst.msk [vmem:[%s416 + $0x28] sm:$0xff] %vm417, %v372
        %424 = vst.msk [vmem:[%s416 + $0x30] sm:$0xff] %vm417, %v377
        %425 = vst.msk [vmem:[%s416 + $0x38] sm:$0xff] %vm417, %v380
        %426 = vst.msk [vmem:[%s416 + $0x40] sm:$0xff] %vm417, %v385
        %427 = vst.msk [vmem:[%s416 + $0x48] sm:$0xff] %vm417, %v388
        %428 = vst.msk [vmem:[%s416 + $0x50] sm:$0xff] %vm417, %v393
        %429 = vst.msk [vmem:[%s416 + $0x58] sm:$0xff] %vm417, %v396
        %430 = vst.msk [vmem:[%s416 + $0x60] sm:$0xff] %vm417, %v401
        %431 = vst.msk [vmem:[%s416 + $0x68] sm:$0xff] %vm417, %v404
        %432 = vst.msk [vmem:[%s416 + $0x70] sm:$0xff] %vm417, %v409
        %433 = vst.msk [vmem:[%s416 + $0x78] sm:$0xff] %vm417, %v412
        %v434 = vld [vmem:[#allocation3] sm:$0x1]
        %v435 = vsel %vm417, %v353, 0.0
        %v436 = vsel %vm417, %v356, 0.0
        %v437 = vadd.f32 %v435, %v436
        %v438 = vsel %vm417, %v361, 0.0
        %v439 = vadd.f32 %v437, %v438
        %v440 = vsel %vm417, %v364, 0.0
        %v441 = vadd.f32 %v439, %v440
        %v442 = vsel %vm417, %v369, 0.0
        %v443 = vadd.f32 %v441, %v442
        %v444 = vsel %vm417, %v372, 0.0
        %v445 = vadd.f32 %v443, %v444
        %v446 = vsel %vm417, %v377, 0.0
        %v447 = vadd.f32 %v445, %v446
        %v448 = vsel %vm417, %v380, 0.0
        %v449 = vadd.f32 %v447, %v448
        %v450 = vsel %vm417, %v385, 0.0
        %v451 = vadd.f32 %v449, %v450
        %v452 = vsel %vm417, %v388, 0.0
        %v453 = vadd.f32 %v451, %v452
        %v454 = vsel %vm417, %v393, 0.0
        %v455 = vadd.f32 %v453, %v454
        %v456 = vsel %vm417, %v396, 0.0
        %v457 = vadd.f32 %v455, %v456
        %v458 = vsel %vm417, %v401, 0.0
        %v459 = vadd.f32 %v457, %v458
        %v460 = vsel %vm417, %v404, 0.0
        %v461 = vadd.f32 %v459, %v460
        %v462 = vsel %vm417, %v409, 0.0
        %v463 = vadd.f32 %v461, %v462
        %v464 = vsel %vm417, %v412, 0.0
        %v465 = vadd.f32 %v463, %v464
        %v466 = vrot.slane %v465, 4
        %v467 = vadd.f32 %v465, %v466
        %v468 = vrot.slane %v467, 2
        %v469 = vadd.f32 %v467, %v468
        %v470 = vrot.slane %v469, 1
        %v471 = vadd.f32 %v469, %v470
        %v472 = vadd.f32 %v434, %v471
        %vm473 = vcmask 122880
        %474 = vst.msk [vmem:[#allocation3] sm:$0x1] %vm473, %v472
        %v475 = vld [vmem:[#allocation4] sm:$0x1]
        %v476 = vmul.f32 %v353, %v353
        %v477 = vmul.f32 %v356, %v356
        %v478 = vmul.f32 %v361, %v361
        %v479 = vmul.f32 %v364, %v364
        %v480 = vmul.f32 %v369, %v369
        %v481 = vmul.f32 %v372, %v372
        %v482 = vmul.f32 %v377, %v377
        %v483 = vmul.f32 %v380, %v380
        %v484 = vmul.f32 %v385, %v385
        %v485 = vmul.f32 %v388, %v388
        %v486 = vmul.f32 %v393, %v393
        %v487 = vmul.f32 %v396, %v396
        %v488 = vmul.f32 %v401, %v401
        %v489 = vmul.f32 %v404, %v404
        %v490 = vmul.f32 %v409, %v409
        %v491 = vmul.f32 %v412, %v412
        %v492 = vsel %vm417, %v476, 0.0
        %v493 = vsel %vm417, %v477, 0.0
        %v494 = vadd.f32 %v492, %v493
        %v495 = vsel %vm417, %v478, 0.0
        %v496 = vadd.f32 %v494, %v495
        %v497 = vsel %vm417, %v479, 0.0
        %v498 = vadd.f32 %v496, %v497
        %v499 = vsel %vm417, %v480, 0.0
        %v500 = vadd.f32 %v498, %v499
        %v501 = vsel %vm417, %v481, 0.0
        %v502 = vadd.f32 %v500, %v501
        %v503 = vsel %vm417, %v482, 0.0
        %v504 = vadd.f32 %v502, %v503
        %v505 = vsel %vm417, %v483, 0.0
        %v506 = vadd.f32 %v504, %v505
        %v507 = vsel %vm417, %v484, 0.0
        %v508 = vadd.f32 %v506, %v507
        %v509 = vsel %vm417, %v485, 0.0
        %v510 = vadd.f32 %v508, %v509
        %v511 = vsel %vm417, %v486, 0.0
        %v512 = vadd.f32 %v510, %v511
        %v513 = vsel %vm417, %v487, 0.0
        %v514 = vadd.f32 %v512, %v513
        %v515 = vsel %vm417, %v488, 0.0
        %v516 = vadd.f32 %v514, %v515
        %v517 = vsel %vm417, %v489, 0.0
        %v518 = vadd.f32 %v516, %v517
        %v519 = vsel %vm417, %v490, 0.0
        %v520 = vadd.f32 %v518, %v519
        %v521 = vsel %vm417, %v491, 0.0
        %v522 = vadd.f32 %v520, %v521
        %v523 = vrot.slane %v522, 4
        %v524 = vadd.f32 %v522, %v523
        %v525 = vrot.slane %v524, 2
        %v526 = vadd.f32 %v524, %v525
        %v527 = vrot.slane %v526, 1
        %v528 = vadd.f32 %v526, %v527
        %v529 = vadd.f32 %v475, %v528
        %530 = vst.msk [vmem:[#allocation4] sm:$0x1] %vm473, %v529
      $region32: #{discriminator_forward.5} parent=27 // pred_fallthru
        _
      %p531 = scmp.eq.s32.totalorder %s17, 1
      // Predicated region
      $region37: #{discriminator_forward.5} parent=27 // pred_check
        %p532 = pneg %p531
      $region38: #{discriminator_forward.5} parent=27 // pred_check_branch
        %534 = sbr.rel (%p532) target = $region40
      $region39: #{discriminator_forward.5} parent=27 // pred_region
        %s535 = smul.u32 %s18, 128
        %s536 = scalar_lea.vmem [#allocation2], %s535
        %v537 = vld [vmem:[%s536] sm:$0xff]
        %v538 = vld [vmem:[%s536 + $0x8] sm:$0xff]
        %v539 = vld [vmem:[%s536 + $0x10] sm:$0xff]
        %v540 = vld [vmem:[%s536 + $0x18] sm:$0xff]
        %v541 = vld [vmem:[%s536 + $0x20] sm:$0xff]
        %v542 = vld [vmem:[%s536 + $0x28] sm:$0xff]
        %v543 = vld [vmem:[%s536 + $0x30] sm:$0xff]
        %v544 = vld [vmem:[%s536 + $0x38] sm:$0xff]
        %v545 = vld [vmem:[%s536 + $0x40] sm:$0xff]
        %v546 = vld [vmem:[%s536 + $0x48] sm:$0xff]
        %v547 = vld [vmem:[%s536 + $0x50] sm:$0xff]
        %v548 = vld [vmem:[%s536 + $0x58] sm:$0xff]
        %v549 = vld [vmem:[%s536 + $0x60] sm:$0xff]
        %v550 = vld [vmem:[%s536 + $0x68] sm:$0xff]
        %v551 = vld [vmem:[%s536 + $0x70] sm:$0xff]
        %v552 = vld [vmem:[%s536 + $0x78] sm:$0xff]
        %v553 = vld [vmem:[#allocation3] sm:$0x1]
        %v554 = vmul.f32 %v553, 0.0078125
        %v555 = vld [vmem:[#allocation4] sm:$0x1]
        %v556 = vmul.f32 %v555, 0.0078125
        %v557 = vmul.f32 %v554, %v554
        %v558 = vsub.f32 %v556, %v557
        %v559 = vadd.f32 %v558, 1e-05
        %v560 = vrsqrt.pop %v559
        %v562 = vlaneseq
        %v563 = vshrl.u32 %v562, 7
        %v564 = vsub.s32 0, %v563
        %v565 = vrot.slane %v554, %v564
        %v567 = vsub.f32 %v537, %v565
        %v568 = vsub.f32 %v538, %v565
        %v569 = vsub.f32 %v539, %v565
        %v570 = vsub.f32 %v540, %v565
        %v571 = vsub.f32 %v541, %v565
        %v572 = vsub.f32 %v542, %v565
        %v573 = vsub.f32 %v543, %v565
        %v574 = vsub.f32 %v544, %v565
        %v575 = vsub.f32 %v545, %v565
        %v576 = vsub.f32 %v546, %v565
        %v577 = vsub.f32 %v547, %v565
        %v578 = vsub.f32 %v548, %v565
        %v579 = vsub.f32 %v549, %v565
        %v580 = vsub.f32 %v550, %v565
        %v581 = vsub.f32 %v551, %v565
        %v582 = vsub.f32 %v552, %v565
        %v584 = vlaneseq
        %v585 = vshrl.u32 %v584, 7
        %v586 = vsub.s32 0, %v585
        %v587 = vrot.slane %v560, %v586
        %v589 = vmul.f32 %v567, %v587
        %v590 = vmul.f32 %v568, %v587
        %v591 = vmul.f32 %v569, %v587
        %v592 = vmul.f32 %v570, %v587
        %v593 = vmul.f32 %v571, %v587
        %v594 = vmul.f32 %v572, %v587
        %v595 = vmul.f32 %v573, %v587
        %v596 = vmul.f32 %v574, %v587
        %v597 = vmul.f32 %v575, %v587
        %v598 = vmul.f32 %v576, %v587
        %v599 = vmul.f32 %v577, %v587
        %v600 = vmul.f32 %v578, %v587
        %v601 = vmul.f32 %v579, %v587
        %v602 = vmul.f32 %v580, %v587
        %v603 = vmul.f32 %v581, %v587
        %v604 = vmul.f32 %v582, %v587
        %vm605 = vcmp.gt.f32.partialorder %v589, 0.0
        %vm606 = vcmp.gt.f32.partialorder %v590, 0.0
        %vm607 = vcmp.gt.f32.partialorder %v591, 0.0
        %vm608 = vcmp.gt.f32.partialorder %v592, 0.0
        %vm609 = vcmp.gt.f32.partialorder %v593, 0.0
        %vm610 = vcmp.gt.f32.partialorder %v594, 0.0
        %vm611 = vcmp.gt.f32.partialorder %v595, 0.0
        %vm612 = vcmp.gt.f32.partialorder %v596, 0.0
        %vm613 = vcmp.gt.f32.partialorder %v597, 0.0
        %vm614 = vcmp.gt.f32.partialorder %v598, 0.0
        %vm615 = vcmp.gt.f32.partialorder %v599, 0.0
        %vm616 = vcmp.gt.f32.partialorder %v600, 0.0
        %vm617 = vcmp.gt.f32.partialorder %v601, 0.0
        %vm618 = vcmp.gt.f32.partialorder %v602, 0.0
        %vm619 = vcmp.gt.f32.partialorder %v603, 0.0
        %vm620 = vcmp.gt.f32.partialorder %v604, 0.0
        %v621 = vmul.f32 %v589, 0.2
        %v622 = vmul.f32 %v590, 0.2
        %v623 = vmul.f32 %v591, 0.2
        %v624 = vmul.f32 %v592, 0.2
        %v625 = vmul.f32 %v593, 0.2
        %v626 = vmul.f32 %v594, 0.2
        %v627 = vmul.f32 %v595, 0.2
        %v628 = vmul.f32 %v596, 0.2
        %v629 = vmul.f32 %v597, 0.2
        %v630 = vmul.f32 %v598, 0.2
        %v631 = vmul.f32 %v599, 0.2
        %v632 = vmul.f32 %v600, 0.2
        %v633 = vmul.f32 %v601, 0.2
        %v634 = vmul.f32 %v602, 0.2
        %v635 = vmul.f32 %v603, 0.2
        %v636 = vmul.f32 %v604, 0.2
        %v637 = vsel %vm605, %v589, %v621
        %v638 = vsel %vm606, %v590, %v622
        %v639 = vsel %vm607, %v591, %v623
        %v640 = vsel %vm608, %v592, %v624
        %v641 = vsel %vm609, %v593, %v625
        %v642 = vsel %vm610, %v594, %v626
        %v643 = vsel %vm611, %v595, %v627
        %v644 = vsel %vm612, %v596, %v628
        %v645 = vsel %vm613, %v597, %v629
        %v646 = vsel %vm614, %v598, %v630
        %v647 = vsel %vm615, %v599, %v631
        %v648 = vsel %vm616, %v600, %v632
        %v649 = vsel %vm617, %v601, %v633
        %v650 = vsel %vm618, %v602, %v634
        %v651 = vsel %vm619, %v603, %v635
        %v652 = vsel %vm620, %v604, %v636
        %v653 = vpack.c.bf16 %v638, %v637
        %v654 = vpack.c.bf16 %v640, %v639
        %v655 = vpack.c.bf16 %v642, %v641
        %v656 = vpack.c.bf16 %v644, %v643
        %v657 = vpack.c.bf16 %v646, %v645
        %v658 = vpack.c.bf16 %v648, %v647
        %v659 = vpack.c.bf16 %v650, %v649
        %v660 = vpack.c.bf16 %v652, %v651
        %v669 = vunpack.c.l.b16 %v653
        %v670 = vunpack.c.h.b16 %v653
        %v671 = vunpack.c.l.b16 %v654
        %v672 = vunpack.c.h.b16 %v654
        %v673 = vunpack.c.l.b16 %v655
        %v674 = vunpack.c.h.b16 %v655
        %v675 = vunpack.c.l.b16 %v656
        %v676 = vunpack.c.h.b16 %v656
        %v677 = vunpack.c.l.b16 %v657
        %v678 = vunpack.c.h.b16 %v657
        %v679 = vunpack.c.l.b16 %v658
        %v680 = vunpack.c.h.b16 %v658
        %v681 = vunpack.c.l.b16 %v659
        %v682 = vunpack.c.h.b16 %v659
        %v683 = vunpack.c.l.b16 %v660
        %v684 = vunpack.c.h.b16 %v660
        %v685 = vpack.c.b16 %v669, %v669
        %v686 = vpack.c.b16 %v670, %v670
        %v687 = vpack.c.b16 %v671, %v671
        %v688 = vpack.c.b16 %v672, %v672
        %v689 = vpack.c.b16 %v673, %v673
        %v690 = vpack.c.b16 %v674, %v674
        %v691 = vpack.c.b16 %v675, %v675
        %v692 = vpack.c.b16 %v676, %v676
        %v693 = vpack.c.b16 %v677, %v677
        %v694 = vpack.c.b16 %v678, %v678
        %v695 = vpack.c.b16 %v679, %v679
        %v696 = vpack.c.b16 %v680, %v680
        %v697 = vpack.c.b16 %v681, %v681
        %v698 = vpack.c.b16 %v682, %v682
        %v699 = vpack.c.b16 %v683, %v683
        %v700 = vpack.c.b16 %v684, %v684
        %vm717 = vcmask 125952
        %718 = vst.msk [vmem:[%s175] sm:$0xf] %vm717, %v685
        %719 = vst.msk [vmem:[%s175 + $0x4] sm:$0xf] %vm717, %v686
        %720 = vst.msk [vmem:[%s175 + $0x8] sm:$0xf] %vm717, %v687
        %721 = vst.msk [vmem:[%s175 + $0xc] sm:$0xf] %vm717, %v688
        %722 = vst.msk [vmem:[%s175 + $0x10] sm:$0xf] %vm717, %v689
        %723 = vst.msk [vmem:[%s175 + $0x14] sm:$0xf] %vm717, %v690
        %724 = vst.msk [vmem:[%s175 + $0x18] sm:$0xf] %vm717, %v691
        %725 = vst.msk [vmem:[%s175 + $0x1c] sm:$0xf] %vm717, %v692
        %726 = vst.msk [vmem:[%s175 + $0x20] sm:$0xf] %vm717, %v693
        %727 = vst.msk [vmem:[%s175 + $0x24] sm:$0xf] %vm717, %v694
        %728 = vst.msk [vmem:[%s175 + $0x28] sm:$0xf] %vm717, %v695
        %729 = vst.msk [vmem:[%s175 + $0x2c] sm:$0xf] %vm717, %v696
        %730 = vst.msk [vmem:[%s175 + $0x30] sm:$0xf] %vm717, %v697
        %731 = vst.msk [vmem:[%s175 + $0x34] sm:$0xf] %vm717, %v698
        %732 = vst.msk [vmem:[%s175 + $0x38] sm:$0xf] %vm717, %v699
        %733 = vst.msk [vmem:[%s175 + $0x3c] sm:$0xf] %vm717, %v700
      $region40: #{discriminator_forward.5} parent=27 // pred_fallthru
        _
      %s734 = smul.u32 %s17, %s18
      %s735 = smul.u32 16, %s734
      %p736 = scmp.lt.s32.totalorder %s735, 15
      %s737 = scalar_select %p736, %s735, 15
      %s738 = smul.addr %s737, 4
      %s739 = scalar_lea.vmem %s2, %s738
      // Predicated region
      $region41: #{discriminator_forward.5} parent=27 // pred_check
        %p740 = pneg %p96
      $region42: #{discriminator_forward.5} parent=27 // pred_check_branch
        %742 = sbr.rel (%p740) target = $region44
      $region43: #{discriminator_forward.5} parent=27 // pred_region
        %s743 = smul.u32 %s17, %s18
        %s744 = smul.u32 16, %s743
      $region44: #{discriminator_forward.5} parent=27 // pred_fallthru
        _
    $region28: #{discriminator_forward.5} parent=5 // pred_fallthru
      _
    %p745 = scmp.le.s32.totalorder 2, %s8
    // Predicated region
    $region45: #{discriminator_forward.5} parent=5 // pred_check
      %p746 = pneg %p745
    $region46: #{discriminator_forward.5} parent=5 // pred_check_branch
      %748 = sbr.rel (%p746) target = $region48
    $region47: #{discriminator_forward.5} parent=5 // pred_region
      %s749 = ssub.s32 %s8, 2
      // Predicated region
      $region49: #{discriminator_forward.5} parent=47 // pred_check
        %p750 = pneg %p102
      $region50: #{discriminator_forward.5} parent=47 // pred_check_branch
        %752 = sbr.rel (%p750) target = $region52
      $region51: #{discriminator_forward.5} parent=47 // pred_region
        %s753 = smul.u32 %s19, %s20
        %s754 = smul.u32 16, %s753
        %p755 = scmp.lt.s32.totalorder %s754, 15
        %s756 = scalar_select %p755, %s754, 15
        %s757 = smul.addr %s756, 4
        %s758 = scalar_lea.vmem %s2, %s757
      $region52: #{discriminator_forward.5} parent=47 // pred_fallthru
        _
    $region48: #{discriminator_forward.5} parent=5 // pred_fallthru
      _
  $region6: #{discriminator_forward.5} parent=0 // loop_footer
    %s12 = sadd.s32 1, %s8
  $region7: #{discriminator_forward.5} parent=0 // loop_footer_branch
    %7 = sbr.rel target = $region3
  $region8: #{discriminator_forward.5} parent=0 // loop_exit
    _

// kernel: discriminator_forward.6
$region0: #{discriminator_forward.6}
  #allocation0 [shape = 'u32[]', space=smem, size = 0x4, offset = 0x4, fixed_abs, tag = 'smem constant byte address 0x4 - core index']
  #allocation1 [shape = 'u32[144,128]{1,0:T(1,128)}', space=vmem, size = 0x12000, scoped, tag = 'internal scratch']
  #allocation2 [shape = 'f32[32,32]{1,0:T(8,128)}', space=vmem, size = 0x4000, scoped, tag = 'scratch operand']
  #allocation3 [shape = 'f32[1,32]{1,0:T(1,128)}', space=vmem, size = 0x200, scoped, tag = 'scratch operand']
  #allocation4 [shape = 'f32[1,32]{1,0:T(1,128)}', space=vmem, size = 0x200, scoped, tag = 'scratch operand']
  %s0 = inlined_call_operand.vmem [shape: bf16[32,256], index: 0, kind: input, shape index: {}]
  %s1 = inlined_call_operand.vmem [shape: bf16[256,32], index: 1, kind: input, shape index: {}]
  %s2 = inlined_call_operand.vmem [shape: bf16[32,32], index: 2, kind: output, shape index: {}]
  %s3 = sld [smem:[#allocation0]]
  $region53: #{discriminator_forward.6} parent=0
    _
  %s5 = ssub.s32 1, %s3
  %s6 = scalar_select 0, %s5, %s3
  loop: start=0, step=1, limit=4
  $region2: #{discriminator_forward.6} parent=0 // loop_pre_header
    _
  $region3: #{discriminator_forward.6} parent=0 // loop_header
    %s8 = sphi 0, %s12
    %p9 = scmp.ge.s32.totalorder %s8, 4
    %s15 = sphi 0, %s27
    %s16 = sphi 0, %s23
    %s17 = sphi 0, %s15
    %s18 = sphi 0, %s16
    %s19 = sphi 0, %s17
    %s20 = sphi 0, %s18
    %s34 = sphi 0, %s36
    %s37 = sphi 0, %s34
    %s38 = sphi 0, %s37
    %s54 = sphi 0, %s38
    %s58 = sphi 0, %s58
    %s60 = sphi 0, %s58
    %s61 = sphi 0, %s60
    %s75 = sphi 0, %s61
    %s83 = sphi 0, %s85
    %s86 = sphi 0, %s83
    %s87 = sphi 0, %s86
    %s103 = sphi 0, %s87
  $region4: #{discriminator_forward.6} parent=0 // loop_header_branch
    %11 = sbr.rel (%p9) target = $region8
  $region5: #{discriminator_forward.6} parent=0 // loop_body
    %s13 = ssub.s32 %s8, 1
    %s14 = ssub.s32 %s8, 2
    %s21 = sadd.s32 1, %s16
    %p22 = scmp.ge.s32.totalorder %s21, 1
    %s23 = scalar_select %p22, 0, %s21
    %s24 = sadd.s32 1, %s15
    %s25 = scalar_select %p22, %s24, %s15
    %p26 = scmp.ge.s32.totalorder %s25, 2
    %s27 = scalar_select %p26, 0, %s25
    %s28 = ssub.s32 1, %s15
    %s29 = smul.u32 %s28, %s16
    %s30 = ssub.s32 1, %s27
    %s31 = smul.u32 %s30, %s23
    %s32 = ssub.s32 %s29, %s31
    %p33 = scmp.eq.s32.totalorder %s32, 0
    %s35 = sadd.s32 %s34, 1
    %s36 = scalar_select %p33, %s34, %s35
    %p39 = pneg %p33
    %p40 = scmp.eq.s32.totalorder %s8, 1
    %p41 = por %p39, %p40
    %p42 = scmp.ne.s32.totalorder %s34, %s37
    %p43 = scmp.eq.s32.totalorder %s8, 0
    %p44 = por %p42, %p43
    %p45 = scmp.ne.s32.totalorder %s34, %s37
    %p46 = scmp.eq.s32.totalorder %s13, 1
    %p47 = por %p45, %p46
    %p48 = scmp.ne.s32.totalorder %s37, %s38
    %p49 = scmp.eq.s32.totalorder %s13, 0
    %p50 = por %p48, %p49
    %p51 = scmp.ne.s32.totalorder %s37, %s38
    %p52 = scmp.eq.s32.totalorder %s14, 1
    %p53 = por %p51, %p52
    %p55 = scmp.ne.s32.totalorder %s38, %s54
    %p56 = scmp.eq.s32.totalorder %s14, 0
    %p57 = por %p55, %p56
    %s59 = sadd.s32 %s58, 1
    %p62 = scmp.eq.s32.totalorder %s8, 1
    %p63 = scmp.ne.s32.totalorder %s58, %s60
    %p64 = scmp.eq.s32.totalorder %s8, 0
    %p65 = por %p63, %p64
    %p66 = scmp.ne.s32.totalorder %s58, %s60
    %p67 = scmp.eq.s32.totalorder %s13, 1
    %p68 = por %p66, %p67
    %p69 = scmp.ne.s32.totalorder %s60, %s61
    %p70 = scmp.eq.s32.totalorder %s13, 0
    %p71 = por %p69, %p70
    %p72 = scmp.ne.s32.totalorder %s60, %s61
    %p73 = scmp.eq.s32.totalorder %s14, 1
    %p74 = por %p72, %p73
    %p76 = scmp.ne.s32.totalorder %s61, %s75
    %p77 = scmp.eq.s32.totalorder %s14, 0
    %p78 = por %p76, %p77
    %s79 = smul.u32 %s15, %s16
    %s80 = smul.u32 %s27, %s23
    %s81 = ssub.s32 %s79, %s80
    %p82 = scmp.eq.s32.totalorder %s81, 0
    %s84 = sadd.s32 %s83, 1
    %s85 = scalar_select %p82, %s83, %s84
    %p88 = pneg %p82
    %p89 = scmp.eq.s32.totalorder %s8, 1
    %p90 = por %p88, %p89
    %p91 = scmp.ne.s32.totalorder %s83, %s86
    %p92 = scmp.eq.s32.totalorder %s8, 0
    %p93 = por %p91, %p92
    %p94 = scmp.ne.s32.totalorder %s83, %s86
    %p95 = scmp.eq.s32.totalorder %s13, 1
    %p96 = por %p94, %p95
    %p97 = scmp.ne.s32.totalorder %s86, %s87
    %p98 = scmp.eq.s32.totalorder %s13, 0
    %p99 = por %p97, %p98
    %p100 = scmp.ne.s32.totalorder %s86, %s87
    %p101 = scmp.eq.s32.totalorder %s14, 1
    %p102 = por %p100, %p101
    %p104 = scmp.ne.s32.totalorder %s87, %s103
    %p105 = scmp.eq.s32.totalorder %s14, 0
    %p106 = por %p104, %p105
    %p107 = scmp.le.s32.totalorder 1, %s8
    %p108 = scmp.lt.s32.totalorder %s8, 3
    %p109 = pnand %p107, %p108
    %p110 = pneg %p109
    // Predicated region
    $region9: #{discriminator_forward.6} parent=5 // pred_check
      _
    $region10: #{discriminator_forward.6} parent=5 // pred_check_branch
      %112 = sbr.rel (%p109) target = $region12
    $region11: #{discriminator_forward.6} parent=5 // pred_region
      %s113 = ssub.s32 %s8, 1
      // Predicated region
      $region13: #{discriminator_forward.6} parent=11 // pred_check
        %p114 = pneg %p71
      $region14: #{discriminator_forward.6} parent=11 // pred_check_branch
        %116 = sbr.rel (%p114) target = $region16
      $region15: #{discriminator_forward.6} parent=11 // pred_region
        _
      $region16: #{discriminator_forward.6} parent=11 // pred_fallthru
        _
    $region12: #{discriminator_forward.6} parent=5 // pred_fallthru
      _
    %p117 = scmp.lt.s32.totalorder %s8, 2
    // Predicated region
    $region17: #{discriminator_forward.6} parent=5 // pred_check
      %p118 = pneg %p117
    $region18: #{discriminator_forward.6} parent=5 // pred_check_branch
      %120 = sbr.rel (%p118) target = $region20
    $region19: #{discriminator_forward.6} parent=5 // pred_region
      // Predicated region
      $region21: #{discriminator_forward.6} parent=19 // pred_check
        %p121 = pneg %p44
      $region22: #{discriminator_forward.6} parent=19 // pred_check_branch
        %123 = sbr.rel (%p121) target = $region24
      $region23: #{discriminator_forward.6} parent=19 // pred_region
        %s124 = ssub.s32 1, %s15
        %s125 = smul.u32 %s124, %s16
        %s126 = smul.u32 4, %s125
        %p127 = scmp.lt.s32.totalorder %s126, 3
        %s128 = scalar_select %p127, %s126, 3
        %s129 = smul.addr %s128, 2
        %s130 = smul.addr %s129, 4
        %s131 = scalar_lea.vmem %s0, %s130
        %s132 = ssub.s32 1, %s15
        %s133 = smul.u32 %s132, %s16
        %s134 = smul.u32 4, %s133
      $region24: #{discriminator_forward.6} parent=19 // pred_fallthru
        _
    $region20: #{discriminator_forward.6} parent=5 // pred_fallthru
      _
    %p135 = scmp.le.s32.totalorder 1, %s8
    %p136 = scmp.lt.s32.totalorder %s8, 3
    %p137 = pnand %p135, %p136
    %p138 = pneg %p137
    // Predicated region
    $region25: #{discriminator_forward.6} parent=5 // pred_check
      _
    $region26: #{discriminator_forward.6} parent=5 // pred_check_branch
      %140 = sbr.rel (%p137) target = $region28
    $region27: #{discriminator_forward.6} parent=5 // pred_region
      %s141 = ssub.s32 %s8, 1
      %s142 = ssub.s32 1, %s17
      %s143 = smul.u32 %s142, %s18
      %s144 = smul.u32 4, %s143
      %p145 = scmp.lt.s32.totalorder %s144, 3
      %s146 = scalar_select %p145, %s144, 3
      %s147 = smul.addr %s146, 2
      %s148 = smul.addr %s147, 4
      %s149 = scalar_lea.vmem %s0, %s148
      %p150 = pneg %p50
      %p151 = pneg %p47
      %p152 = pneg %p71
      %p153 = pneg %p68
      %p154 = pneg %p99
      %p155 = pneg %p96
      %s156 = smul.u32 %s17, %s18
      %s157 = smul.u32 4, %s156
      %p158 = scmp.lt.s32.totalorder %s157, 3
      %s159 = scalar_select %p158, %s157, 3
      %s160 = smul.addr %s159, 4
      %s161 = scalar_lea.vmem %s2, %s160
      %s162 = ssub.s32 1, %s17
      %s163 = smul.u32 %s162, %s18
      %s164 = smul.u32 4, %s163
      %p165 = scmp.lt.s32.totalorder %s164, 3
      %s166 = scalar_select %p165, %s164, 3
      %s167 = smul.addr %s166, 2
      %s168 = smul.addr %s167, 4
      %s169 = scalar_lea.vmem %s0, %s168
      %s170 = ssub.s32 1, %s17
      %s171 = smul.u32 %s170, %s18
      %s172 = smul.u32 4, %s171
      %s173 = smul.u32 %s17, %s18
      %s174 = smul.u32 4, %s173
      %p175 = scmp.lt.s32.totalorder %s174, 3
      %s176 = scalar_select %p175, %s174, 3
      %s177 = smul.addr %s176, 4
      %s178 = scalar_lea.vmem %s2, %s177
      %s179 = smul.u32 %s17, %s18
      %s180 = smul.u32 4, %s179
      %p182 = scmp.eq.s32.totalorder %s17, 0
      // Predicated region
      $region29: #{discriminator_forward.6} parent=27 // pred_check
        %p183 = pneg %p182
      $region30: #{discriminator_forward.6} parent=27 // pred_check_branch
        %185 = sbr.rel (%p183) target = $region32
      $region31: #{discriminator_forward.6} parent=27 // pred_region
        %p186 = scmp.eq.s32.totalorder %s18, 0
        // Predicated region
        $region33: #{discriminator_forward.6} parent=31 // pred_check
          %p187 = pneg %p186
        $region34: #{discriminator_forward.6} parent=31 // pred_check_branch
          %189 = sbr.rel (%p187) target = $region36
        $region35: #{discriminator_forward.6} parent=31 // pred_region
          %vm190 = vcmask 253952
          %191 = vst.msk [vmem:[#allocation3] sm:$0x1] %vm190, 0.0
          %192 = vst.msk [vmem:[#allocation4] sm:$0x1] %vm190, 0.0
        $region36: #{discriminator_forward.6} parent=31 // pred_fallthru
          _
        %v193 = vld [vmem:[%s169] sm:$0xff]
        %v194 = vld [vmem:[%s169 + $0x8] sm:$0xff]
        %v195 = vld [vmem:[%s169 + $0x10] sm:$0xff]
        %v196 = vld [vmem:[%s169 + $0x18] sm:$0xff]
        %v197 = vld [vmem:[%s1] sm:$0xf]
        %v198 = vld [vmem:[%s1 + $0x4] sm:$0xf]
        %v199 = vld [vmem:[%s1 + $0x8] sm:$0xf]
        %v200 = vld [vmem:[%s1 + $0xc] sm:$0xf]
        %v201 = vld [vmem:[%s1 + $0x10] sm:$0xf]
        %v202 = vld [vmem:[%s1 + $0x14] sm:$0xf]
        %v203 = vld [vmem:[%s1 + $0x18] sm:$0xf]
        %v204 = vld [vmem:[%s1 + $0x1c] sm:$0xf]
        %v205 = vld [vmem:[%s1 + $0x20] sm:$0xf]
        %v206 = vld [vmem:[%s1 + $0x24] sm:$0xf]
        %v207 = vld [vmem:[%s1 + $0x28] sm:$0xf]
        %v208 = vld [vmem:[%s1 + $0x2c] sm:$0xf]
        %v209 = vld [vmem:[%s1 + $0x30] sm:$0xf]
        %v210 = vld [vmem:[%s1 + $0x34] sm:$0xf]
        %v211 = vld [vmem:[%s1 + $0x38] sm:$0xf]
        %v212 = vld [vmem:[%s1 + $0x3c] sm:$0xf]
        %v213 = vld [vmem:[%s1 + $0x40] sm:$0xf]
        %v214 = vld [vmem:[%s1 + $0x44] sm:$0xf]
        %v215 = vld [vmem:[%s1 + $0x48] sm:$0xf]
        %v216 = vld [vmem:[%s1 + $0x4c] sm:$0xf]
        %v217 = vld [vmem:[%s1 + $0x50] sm:$0xf]
        %v218 = vld [vmem:[%s1 + $0x54] sm:$0xf]
        %v219 = vld [vmem:[%s1 + $0x58] sm:$0xf]
        %v220 = vld [vmem:[%s1 + $0x5c] sm:$0xf]
        %v221 = vld [vmem:[%s1 + $0x60] sm:$0xf]
        %v222 = vld [vmem:[%s1 + $0x64] sm:$0xf]
        %v223 = vld [vmem:[%s1 + $0x68] sm:$0xf]
        %v224 = vld [vmem:[%s1 + $0x6c] sm:$0xf]
        %v225 = vld [vmem:[%s1 + $0x70] sm:$0xf]
        %v226 = vld [vmem:[%s1 + $0x74] sm:$0xf]
        %v227 = vld [vmem:[%s1 + $0x78] sm:$0xf]
        %v228 = vld [vmem:[%s1 + $0x7c] sm:$0xf]
        %v233 = vunpack.c.l.b16 %v193
        %v234 = vunpack.c.h.b16 %v193
        %v235 = vunpack.c.l.b16 %v194
        %v236 = vunpack.c.h.b16 %v194
        %v237 = vunpack.c.l.b16 %v195
        %v238 = vunpack.c.h.b16 %v195
        %v239 = vunpack.c.l.b16 %v196
        %v240 = vunpack.c.h.b16 %v196
        %v241 = vpack.c.b16 %v235, %v233
        %v242 = vpack.c.b16 %v236, %v234
        %v243 = vpack.c.b16 %v239, %v237
        %v244 = vpack.c.b16 %v240, %v238
        %v281 = vunpack.c.l.b16 %v197
        %v282 = vunpack.c.l.b16 %v198
        %v283 = vunpack.c.l.b16 %v199
        %v284 = vunpack.c.l.b16 %v200
        %v285 = vunpack.c.l.b16 %v201
        %v286 = vunpack.c.l.b16 %v202
        %v287 = vunpack.c.l.b16 %v203
        %v288 = vunpack.c.l.b16 %v204
        %v289 = vunpack.c.l.b16 %v205
        %v290 = vunpack.c.l.b16 %v206
        %v291 = vunpack.c.l.b16 %v207
        %v292 = vunpack.c.l.b16 %v208
        %v293 = vunpack.c.l.b16 %v209
        %v294 = vunpack.c.l.b16 %v210
        %v295 = vunpack.c.l.b16 %v211
        %v296 = vunpack.c.l.b16 %v212
        %v297 = vunpack.c.l.b16 %v213
        %v298 = vunpack.c.l.b16 %v214
        %v299 = vunpack.c.l.b16 %v215
        %v300 = vunpack.c.l.b16 %v216
        %v301 = vunpack.c.l.b16 %v217
        %v302 = vunpack.c.l.b16 %v218
        %v303 = vunpack.c.l.b16 %v219
        %v304 = vunpack.c.l.b16 %v220
        %v305 = vunpack.c.l.b16 %v221
        %v306 = vunpack.c.l.b16 %v222
        %v307 = vunpack.c.l.b16 %v223
        %v308 = vunpack.c.l.b16 %v224
        %v309 = vunpack.c.l.b16 %v225
        %v310 = vunpack.c.l.b16 %v226
        %v311 = vunpack.c.l.b16 %v227
        %v312 = vunpack.c.l.b16 %v228
        %v313 = vpack.c.b16 %v282, %v281
        %v314 = vpack.c.b16 %v284, %v283
        %v315 = vpack.c.b16 %v286, %v285
        %v316 = vpack.c.b16 %v288, %v287
        %v317 = vpack.c.b16 %v290, %v289
        %v318 = vpack.c.b16 %v292, %v291
        %v319 = vpack.c.b16 %v294, %v293
        %v320 = vpack.c.b16 %v296, %v295
        %v321 = vpack.c.b16 %v298, %v297
        %v322 = vpack.c.b16 %v300, %v299
        %v323 = vpack.c.b16 %v302, %v301
        %v324 = vpack.c.b16 %v304, %v303
        %v325 = vpack.c.b16 %v306, %v305
        %v326 = vpack.c.b16 %v308, %v307
        %v327 = vpack.c.b16 %v310, %v309
        %v328 = vpack.c.b16 %v312, %v311
        %345 = vmatprep.subr.bf16.mxu0 0
        %346 = vmatpush1.bf16.msra.mxu0 %v313
        %347 = vmatprep.subr.bf16.mxu0 0
        %348 = vmatpush1.bf16.msra.mxu0 %v314
        %349 = vmatprep.subr.bf16.mxu0 0
        %350 = vmatpush1.bf16.msra.mxu0 %v315
        %351 = vmatprep.subr.bf16.mxu0 0
        %352 = vmatpush1.bf16.msra.mxu0 %v316
        %353 = vmatprep.subr.bf16.mxu0 0
        %354 = vmatpush1.bf16.msra.mxu0 %v317
        %355 = vmatprep.subr.bf16.mxu0 0
        %356 = vmatpush1.bf16.msra.mxu0 %v318
        %357 = vmatprep.subr.bf16.mxu0 0
        %358 = vmatpush1.bf16.msra.mxu0 %v319
        %359 = vmatprep.subr.bf16.mxu0 0
        %360 = vmatpush1.bf16.msra.mxu0 %v320
        %361 = vmatprep.subr.bf16.mxu0 0
        %362 = vmatpush1.bf16.msra.mxu0 %v321
        %363 = vmatprep.subr.bf16.mxu0 0
        %364 = vmatpush1.bf16.msra.mxu0 %v322
        %365 = vmatprep.subr.bf16.mxu0 0
        %366 = vmatpush1.bf16.msra.mxu0 %v323
        %367 = vmatprep.subr.bf16.mxu0 0
        %368 = vmatpush1.bf16.msra.mxu0 %v324
        %369 = vmatprep.subr.bf16.mxu0 0
        %370 = vmatpush1.bf16.msra.mxu0 %v325
        %371 = vmatprep.subr.bf16.mxu0 0
        %372 = vmatpush1.bf16.msra.mxu0 %v326
        %373 = vmatprep.subr.bf16.mxu0 0
        %374 = vmatpush1.bf16.msra.mxu0 %v327
        %375 = vmatprep.subr.bf16.mxu0 0
        %376 = vmatpush1.bf16.msra.mxu0 %v328
        %377 = vmatprep.mubr.bf16.mxu0 %v242
        %378 = vmatmul.mubr.bf16.gmra.mrb[0].mxu0 %v241
        %v379 = vpop.f32.mrb[0].mxu0
        %v380 = vadd.f32 0.0, %v379
        %v381 = vpop.f32.mrb[0].mxu0
        %v382 = vpop.f32.mrb[0].mxu0
        %v383 = vadd.f32 0.0, %v382
        %v384 = vpop.f32.mrb[0].mxu0
        %385 = vmatprep.mubr.bf16.mxu0 %v244
        %386 = vmatmul.mubr.bf16.gmra.mrb[0].mxu0 %v243
        %v387 = vpop.f32.mrb[0].mxu0
        %v388 = vadd.f32 0.0, %v387
        %v389 = vpop.f32.mrb[0].mxu0
        %v390 = vpop.f32.mrb[0].mxu0
        %v391 = vadd.f32 0.0, %v390
        %v392 = vpop.f32.mrb[0].mxu0
        %393 = vdwg.mxu0
        %s394 = smul.u32 %s18, 32
        %s395 = scalar_lea.vmem [#allocation2], %s394
        %vm396 = vcmask 261120
        %397 = vst.msk [vmem:[%s395] sm:$0xff] %vm396, %v380
        %398 = vst.msk [vmem:[%s395 + $0x8] sm:$0xff] %vm396, %v383
        %399 = vst.msk [vmem:[%s395 + $0x10] sm:$0xff] %vm396, %v388
        %400 = vst.msk [vmem:[%s395 + $0x18] sm:$0xff] %vm396, %v391
        %v401 = vld [vmem:[#allocation3] sm:$0x1]
        %v402 = vsel %vm396, %v380, 0.0
        %v403 = vsel %vm396, %v383, 0.0
        %v404 = vadd.f32 %v402, %v403
        %v405 = vsel %vm396, %v388, 0.0
        %v406 = vadd.f32 %v404, %v405
        %v407 = vsel %vm396, %v391, 0.0
        %v408 = vadd.f32 %v406, %v407
        %v409 = vrot.slane %v408, 4
        %v410 = vadd.f32 %v408, %v409
        %v411 = vrot.slane %v410, 2
        %v412 = vadd.f32 %v410, %v411
        %v413 = vrot.slane %v412, 1
        %v414 = vadd.f32 %v412, %v413
        %v415 = vadd.f32 %v401, %v414
        %vm416 = vcmask 253952
        %417 = vst.msk [vmem:[#allocation3] sm:$0x1] %vm416, %v415
        %v418 = vld [vmem:[#allocation4] sm:$0x1]
        %v419 = vmul.f32 %v380, %v380
        %v420 = vmul.f32 %v383, %v383
        %v421 = vmul.f32 %v388, %v388
        %v422 = vmul.f32 %v391, %v391
        %v423 = vsel %vm396, %v419, 0.0
        %v424 = vsel %vm396, %v420, 0.0
        %v425 = vadd.f32 %v423, %v424
        %v426 = vsel %vm396, %v421, 0.0
        %v427 = vadd.f32 %v425, %v426
        %v428 = vsel %vm396, %v422, 0.0
        %v429 = vadd.f32 %v427, %v428
        %v430 = vrot.slane %v429, 4
        %v431 = vadd.f32 %v429, %v430
        %v432 = vrot.slane %v431, 2
        %v433 = vadd.f32 %v431, %v432
        %v434 = vrot.slane %v433, 1
        %v435 = vadd.f32 %v433, %v434
        %v436 = vadd.f32 %v418, %v435
        %437 = vst.msk [vmem:[#allocation4] sm:$0x1] %vm416, %v436
      $region32: #{discriminator_forward.6} parent=27 // pred_fallthru
        _
      %p438 = scmp.eq.s32.totalorder %s17, 1
      // Predicated region
      $region37: #{discriminator_forward.6} parent=27 // pred_check
        %p439 = pneg %p438
      $region38: #{discriminator_forward.6} parent=27 // pred_check_branch
        %441 = sbr.rel (%p439) target = $region40
      $region39: #{discriminator_forward.6} parent=27 // pred_region
        %s442 = smul.u32 %s18, 32
        %s443 = scalar_lea.vmem [#allocation2], %s442
        %v444 = vld [vmem:[%s443] sm:$0xff]
        %v445 = vld [vmem:[%s443 + $0x8] sm:$0xff]
        %v446 = vld [vmem:[%s443 + $0x10] sm:$0xff]
        %v447 = vld [vmem:[%s443 + $0x18] sm:$0xff]
        %v448 = vld [vmem:[#allocation3] sm:$0x1]
        %v449 = vmul.f32 %v448, 0.03125
        %v450 = vld [vmem:[#allocation4] sm:$0x1]
        %v451 = vmul.f32 %v450, 0.03125
        %v452 = vmul.f32 %v449, %v449
        %v453 = vsub.f32 %v451, %v452
        %v454 = vadd.f32 %v453, 1e-05
        %v455 = vrsqrt.pop %v454
        %v457 = vlaneseq
        %v458 = vshrl.u32 %v457, 7
        %v459 = vsub.s32 0, %v458
        %v460 = vrot.slane %v449, %v459
        %v462 = vsub.f32 %v444, %v460
        %v463 = vsub.f32 %v445, %v460
        %v464 = vsub.f32 %v446, %v460
        %v465 = vsub.f32 %v447, %v460
        %v467 = vlaneseq
        %v468 = vshrl.u32 %v467, 7
        %v469 = vsub.s32 0, %v468
        %v470 = vrot.slane %v455, %v469
        %v472 = vmul.f32 %v462, %v470
        %v473 = vmul.f32 %v463, %v470
        %v474 = vmul.f32 %v464, %v470
        %v475 = vmul.f32 %v465, %v470
        %vm476 = vcmp.gt.f32.partialorder %v472, 0.0
        %vm477 = vcmp.gt.f32.partialorder %v473, 0.0
        %vm478 = vcmp.gt.f32.partialorder %v474, 0.0
        %vm479 = vcmp.gt.f32.partialorder %v475, 0.0
        %v480 = vmul.f32 %v472, 0.2
        %v481 = vmul.f32 %v473, 0.2
        %v482 = vmul.f32 %v474, 0.2
        %v483 = vmul.f32 %v475, 0.2
        %v484 = vsel %vm476, %v472, %v480
        %v485 = vsel %vm477, %v473, %v481
        %v486 = vsel %vm478, %v474, %v482
        %v487 = vsel %vm479, %v475, %v483
        %v488 = vpack.c.bf16 %v485, %v484
        %v489 = vpack.c.bf16 %v487, %v486
        %v492 = vunpack.c.l.b16 %v488
        %v493 = vunpack.c.h.b16 %v488
        %v494 = vunpack.c.l.b16 %v489
        %v495 = vunpack.c.h.b16 %v489
        %v496 = vpack.c.b16 %v492, %v492
        %v497 = vpack.c.b16 %v493, %v493
        %v498 = vpack.c.b16 %v494, %v494
        %v499 = vpack.c.b16 %v495, %v495
        %vm504 = vcmask 257024
        %505 = vst.msk [vmem:[%s178] sm:$0xf] %vm504, %v496
        %506 = vst.msk [vmem:[%s178 + $0x4] sm:$0xf] %vm504, %v497
        %507 = vst.msk [vmem:[%s178 + $0x8] sm:$0xf] %vm504, %v498
        %508 = vst.msk [vmem:[%s178 + $0xc] sm:$0xf] %vm504, %v499
      $region40: #{discriminator_forward.6} parent=27 // pred_fallthru
        _
      %s509 = smul.u32 %s17, %s18
      %s510 = smul.u32 4, %s509
      %p511 = scmp.lt.s32.totalorder %s510, 3
      %s512 = scalar_select %p511, %s510, 3
      %s513 = smul.addr %s512, 4
      %s514 = scalar_lea.vmem %s2, %s513
      // Predicated region
      $region41: #{discriminator_forward.6} parent=27 // pred_check
        %p515 = pneg %p96
      $region42: #{discriminator_forward.6} parent=27 // pred_check_branch
        %517 = sbr.rel (%p515) target = $region44
      $region43: #{discriminator_forward.6} parent=27 // pred_region
        %s518 = smul.u32 %s17, %s18
        %s519 = smul.u32 4, %s518
      $region44: #{discriminator_forward.6} parent=27 // pred_fallthru
        _
    $region28: #{discriminator_forward.6} parent=5 // pred_fallthru
      _
    %p520 = scmp.le.s32.totalorder 2, %s8
    // Predicated region
    $region45: #{discriminator_forward.6} parent=5 // pred_check
      %p521 = pneg %p520
    $region46: #{discriminator_forward.6} parent=5 // pred_check_branch
      %523 = sbr.rel (%p521) target = $region48
    $region47: #{discriminator_forward.6} parent=5 // pred_region
      %s524 = ssub.s32 %s8, 2
      // Predicated region
      $region49: #{discriminator_forward.6} parent=47 // pred_check
        %p525 = pneg %p102
      $region50: #{discriminator_forward.6} parent=47 // pred_check_branch
        %527 = sbr.rel (%p525) target = $region52
      $region51: #{discriminator_forward.6} parent=47 // pred_region
        %s528 = smul.u32 %s19, %s20
        %s529 = smul.u32 4, %s528
        %p530 = scmp.lt.s32.totalorder %s529, 3
        %s531 = scalar_select %p530, %s529, 3
        %s532 = smul.addr %s531, 4
        %s533 = scalar_lea.vmem %s2, %s532
      $region52: #{discriminator_forward.6} parent=47 // pred_fallthru
        _
    $region48: #{discriminator_forward.6} parent=5 // pred_fallthru
      _
  $region6: #{discriminator_forward.6} parent=0 // loop_footer
    %s12 = sadd.s32 1, %s8
  $region7: #{discriminator_forward.6} parent=0 // loop_footer_branch
    %7 = sbr.rel target = $region3
  $region8: #{discriminator_forward.6} parent=0 // loop_exit
    _

// kernel: discriminator_forward.7
$region0: #{discriminator_forward.7}
  #allocation0 [shape = 'u32[]', space=smem, size = 0x4, offset = 0x4, fixed_abs, tag = 'smem constant byte address 0x4 - core index']
  #allocation1 [shape = 'u32[144,128]{1,0:T(1,128)}', space=vmem, size = 0x12000, scoped, tag = 'internal scratch']
  %s0 = inlined_call_operand.vmem [shape: bf16[8,512], index: 0, kind: input, shape index: {}]
  %s1 = inlined_call_operand.vmem [shape: bf16[512,64], index: 1, kind: input, shape index: {}]
  %s2 = inlined_call_operand.vmem [shape: f32[8,64], index: 2, kind: input, shape index: {}]
  %s3 = inlined_call_operand.vmem [shape: f32[2,8], index: 3, kind: input, shape index: {}]
  %s4 = inlined_call_operand.vmem [shape: f32[2,1], index: 4, kind: output, shape index: {}]
  %s5 = sld [smem:[#allocation0]]
  $region26: #{discriminator_forward.7} parent=0
    _
  %s7 = ssub.s32 1, %s5
  %s8 = scalar_select 0, %s7, %s5
  // Predicated region
  $region2: #{discriminator_forward.7} parent=0 // pred_check
    _
  $region3: #{discriminator_forward.7} parent=0 // pred_check_branch
    %10 = sbr.rel (0) target = $region5
  $region4: #{discriminator_forward.7} parent=0 // pred_region
    _
  $region5: #{discriminator_forward.7} parent=0 // pred_fallthru
    _
  // Predicated region
  $region6: #{discriminator_forward.7} parent=0 // pred_check
    _
  $region7: #{discriminator_forward.7} parent=0 // pred_check_branch
    %12 = sbr.rel (0) target = $region9
  $region8: #{discriminator_forward.7} parent=0 // pred_region
    _
  $region9: #{discriminator_forward.7} parent=0 // pred_fallthru
    _
  // Predicated region
  $region10: #{discriminator_forward.7} parent=0 // pred_check
    _
  $region11: #{discriminator_forward.7} parent=0 // pred_check_branch
    %14 = sbr.rel (0) target = $region13
  $region12: #{discriminator_forward.7} parent=0 // pred_region
    _
  $region13: #{discriminator_forward.7} parent=0 // pred_fallthru
    _
  // Predicated region
  $region14: #{discriminator_forward.7} parent=0 // pred_check
    _
  $region15: #{discriminator_forward.7} parent=0 // pred_check_branch
    %16 = sbr.rel (0) target = $region17
  $region16: #{discriminator_forward.7} parent=0 // pred_region
    _
  $region17: #{discriminator_forward.7} parent=0 // pred_fallthru
    _
  %v18 = vld [vmem:[%s0] sm:$0xff]
  %v19 = vld [vmem:[%s0 + $0x8] sm:$0xff]
  %v20 = vld [vmem:[%s1] sm:$0xf]
  %v21 = vld [vmem:[%s1 + $0x4] sm:$0xf]
  %v22 = vld [vmem:[%s1 + $0x8] sm:$0xf]
  %v23 = vld [vmem:[%s1 + $0xc] sm:$0xf]
  %v24 = vld [vmem:[%s1 + $0x10] sm:$0xf]
  %v25 = vld [vmem:[%s1 + $0x14] sm:$0xf]
  %v26 = vld [vmem:[%s1 + $0x18] sm:$0xf]
  %v27 = vld [vmem:[%s1 + $0x1c] sm:$0xf]
  %v28 = vld [vmem:[%s1 + $0x20] sm:$0xf]
  %v29 = vld [vmem:[%s1 + $0x24] sm:$0xf]
  %v30 = vld [vmem:[%s1 + $0x28] sm:$0xf]
  %v31 = vld [vmem:[%s1 + $0x2c] sm:$0xf]
  %v32 = vld [vmem:[%s1 + $0x30] sm:$0xf]
  %v33 = vld [vmem:[%s1 + $0x34] sm:$0xf]
  %v34 = vld [vmem:[%s1 + $0x38] sm:$0xf]
  %v35 = vld [vmem:[%s1 + $0x3c] sm:$0xf]
  %v36 = vld [vmem:[%s1 + $0x40] sm:$0xf]
  %v37 = vld [vmem:[%s1 + $0x44] sm:$0xf]
  %v38 = vld [vmem:[%s1 + $0x48] sm:$0xf]
  %v39 = vld [vmem:[%s1 + $0x4c] sm:$0xf]
  %v40 = vld [vmem:[%s1 + $0x50] sm:$0xf]
  %v41 = vld [vmem:[%s1 + $0x54] sm:$0xf]
  %v42 = vld [vmem:[%s1 + $0x58] sm:$0xf]
  %v43 = vld [vmem:[%s1 + $0x5c] sm:$0xf]
  %v44 = vld [vmem:[%s1 + $0x60] sm:$0xf]
  %v45 = vld [vmem:[%s1 + $0x64] sm:$0xf]
  %v46 = vld [vmem:[%s1 + $0x68] sm:$0xf]
  %v47 = vld [vmem:[%s1 + $0x6c] sm:$0xf]
  %v48 = vld [vmem:[%s1 + $0x70] sm:$0xf]
  %v49 = vld [vmem:[%s1 + $0x74] sm:$0xf]
  %v50 = vld [vmem:[%s1 + $0x78] sm:$0xf]
  %v51 = vld [vmem:[%s1 + $0x7c] sm:$0xf]
  %v52 = vld [vmem:[%s1 + $0x80] sm:$0xf]
  %v53 = vld [vmem:[%s1 + $0x84] sm:$0xf]
  %v54 = vld [vmem:[%s1 + $0x88] sm:$0xf]
  %v55 = vld [vmem:[%s1 + $0x8c] sm:$0xf]
  %v56 = vld [vmem:[%s1 + $0x90] sm:$0xf]
  %v57 = vld [vmem:[%s1 + $0x94] sm:$0xf]
  %v58 = vld [vmem:[%s1 + $0x98] sm:$0xf]
  %v59 = vld [vmem:[%s1 + $0x9c] sm:$0xf]
  %v60 = vld [vmem:[%s1 + $0xa0] sm:$0xf]
  %v61 = vld [vmem:[%s1 + $0xa4] sm:$0xf]
  %v62 = vld [vmem:[%s1 + $0xa8] sm:$0xf]
  %v63 = vld [vmem:[%s1 + $0xac] sm:$0xf]
  %v64 = vld [vmem:[%s1 + $0xb0] sm:$0xf]
  %v65 = vld [vmem:[%s1 + $0xb4] sm:$0xf]
  %v66 = vld [vmem:[%s1 + $0xb8] sm:$0xf]
  %v67 = vld [vmem:[%s1 + $0xbc] sm:$0xf]
  %v68 = vld [vmem:[%s1 + $0xc0] sm:$0xf]
  %v69 = vld [vmem:[%s1 + $0xc4] sm:$0xf]
  %v70 = vld [vmem:[%s1 + $0xc8] sm:$0xf]
  %v71 = vld [vmem:[%s1 + $0xcc] sm:$0xf]
  %v72 = vld [vmem:[%s1 + $0xd0] sm:$0xf]
  %v73 = vld [vmem:[%s1 + $0xd4] sm:$0xf]
  %v74 = vld [vmem:[%s1 + $0xd8] sm:$0xf]
  %v75 = vld [vmem:[%s1 + $0xdc] sm:$0xf]
  %v76 = vld [vmem:[%s1 + $0xe0] sm:$0xf]
  %v77 = vld [vmem:[%s1 + $0xe4] sm:$0xf]
  %v78 = vld [vmem:[%s1 + $0xe8] sm:$0xf]
  %v79 = vld [vmem:[%s1 + $0xec] sm:$0xf]
  %v80 = vld [vmem:[%s1 + $0xf0] sm:$0xf]
  %v81 = vld [vmem:[%s1 + $0xf4] sm:$0xf]
  %v82 = vld [vmem:[%s1 + $0xf8] sm:$0xf]
  %v83 = vld [vmem:[%s1 + $0xfc] sm:$0xf]
  %v86 = vunpack.c.l.b16 %v18
  %v87 = vunpack.c.h.b16 %v18
  %v88 = vunpack.c.l.b16 %v19
  %v89 = vunpack.c.h.b16 %v19
  %v90 = vpack.c.b16 %v86, %v86
  %v91 = vpack.c.b16 %v87, %v87
  %v92 = vpack.c.b16 %v88, %v88
  %v93 = vpack.c.b16 %v89, %v89
  %v162 = vunpack.c.l.b16 %v20
  %v163 = vunpack.c.l.b16 %v21
  %v164 = vunpack.c.l.b16 %v22
  %v165 = vunpack.c.l.b16 %v23
  %v166 = vunpack.c.l.b16 %v24
  %v167 = vunpack.c.l.b16 %v25
  %v168 = vunpack.c.l.b16 %v26
  %v169 = vunpack.c.l.b16 %v27
  %v170 = vunpack.c.l.b16 %v28
  %v171 = vunpack.c.l.b16 %v29
  %v172 = vunpack.c.l.b16 %v30
  %v173 = vunpack.c.l.b16 %v31
  %v174 = vunpack.c.l.b16 %v32
  %v175 = vunpack.c.l.b16 %v33
  %v176 = vunpack.c.l.b16 %v34
  %v177 = vunpack.c.l.b16 %v35
  %v178 = vunpack.c.l.b16 %v36
  %v179 = vunpack.c.l.b16 %v37
  %v180 = vunpack.c.l.b16 %v38
  %v181 = vunpack.c.l.b16 %v39
  %v182 = vunpack.c.l.b16 %v40
  %v183 = vunpack.c.l.b16 %v41
  %v184 = vunpack.c.l.b16 %v42
  %v185 = vunpack.c.l.b16 %v43
  %v186 = vunpack.c.l.b16 %v44
  %v187 = vunpack.c.l.b16 %v45
  %v188 = vunpack.c.l.b16 %v46
  %v189 = vunpack.c.l.b16 %v47
  %v190 = vunpack.c.l.b16 %v48
  %v191 = vunpack.c.l.b16 %v49
  %v192 = vunpack.c.l.b16 %v50
  %v193 = vunpack.c.l.b16 %v51
  %v194 = vunpack.c.l.b16 %v52
  %v195 = vunpack.c.l.b16 %v53
  %v196 = vunpack.c.l.b16 %v54
  %v197 = vunpack.c.l.b16 %v55
  %v198 = vunpack.c.l.b16 %v56
  %v199 = vunpack.c.l.b16 %v57
  %v200 = vunpack.c.l.b16 %v58
  %v201 = vunpack.c.l.b16 %v59
  %v202 = vunpack.c.l.b16 %v60
  %v203 = vunpack.c.l.b16 %v61
  %v204 = vunpack.c.l.b16 %v62
  %v205 = vunpack.c.l.b16 %v63
  %v206 = vunpack.c.l.b16 %v64
  %v207 = vunpack.c.l.b16 %v65
  %v208 = vunpack.c.l.b16 %v66
  %v209 = vunpack.c.l.b16 %v67
  %v210 = vunpack.c.l.b16 %v68
  %v211 = vunpack.c.l.b16 %v69
  %v212 = vunpack.c.l.b16 %v70
  %v213 = vunpack.c.l.b16 %v71
  %v214 = vunpack.c.l.b16 %v72
  %v215 = vunpack.c.l.b16 %v73
  %v216 = vunpack.c.l.b16 %v74
  %v217 = vunpack.c.l.b16 %v75
  %v218 = vunpack.c.l.b16 %v76
  %v219 = vunpack.c.l.b16 %v77
  %v220 = vunpack.c.l.b16 %v78
  %v221 = vunpack.c.l.b16 %v79
  %v222 = vunpack.c.l.b16 %v80
  %v223 = vunpack.c.l.b16 %v81
  %v224 = vunpack.c.l.b16 %v82
  %v225 = vunpack.c.l.b16 %v83
  %v226 = vpack.c.b16 %v163, %v162
  %v227 = vpack.c.b16 %v165, %v164
  %v228 = vpack.c.b16 %v167, %v166
  %v229 = vpack.c.b16 %v169, %v168
  %v230 = vpack.c.b16 %v171, %v170
  %v231 = vpack.c.b16 %v173, %v172
  %v232 = vpack.c.b16 %v175, %v174
  %v233 = vpack.c.b16 %v177, %v176
  %v234 = vpack.c.b16 %v179, %v178
  %v235 = vpack.c.b16 %v181, %v180
  %v236 = vpack.c.b16 %v183, %v182
  %v237 = vpack.c.b16 %v185, %v184
  %v238 = vpack.c.b16 %v187, %v186
  %v239 = vpack.c.b16 %v189, %v188
  %v240 = vpack.c.b16 %v191, %v190
  %v241 = vpack.c.b16 %v193, %v192
  %v242 = vpack.c.b16 %v195, %v194
  %v243 = vpack.c.b16 %v197, %v196
  %v244 = vpack.c.b16 %v199, %v198
  %v245 = vpack.c.b16 %v201, %v200
  %v246 = vpack.c.b16 %v203, %v202
  %v247 = vpack.c.b16 %v205, %v204
  %v248 = vpack.c.b16 %v207, %v206
  %v249 = vpack.c.b16 %v209, %v208
  %v250 = vpack.c.b16 %v211, %v210
  %v251 = vpack.c.b16 %v213, %v212
  %v252 = vpack.c.b16 %v215, %v214
  %v253 = vpack.c.b16 %v217, %v216
  %v254 = vpack.c.b16 %v219, %v218
  %v255 = vpack.c.b16 %v221, %v220
  %v256 = vpack.c.b16 %v223, %v222
  %v257 = vpack.c.b16 %v225, %v224
  %290 = vmatprep.subr.bf16.mxu0 0
  %291 = vmatpush1.bf16.msra.mxu0 %v226
  %292 = vmatprep.subr.bf16.mxu0 0
  %293 = vmatpush1.bf16.msra.mxu0 %v227
  %294 = vmatprep.subr.bf16.mxu0 0
  %295 = vmatpush1.bf16.msra.mxu0 %v228
  %296 = vmatprep.subr.bf16.mxu0 0
  %297 = vmatpush1.bf16.msra.mxu0 %v229
  %298 = vmatprep.subr.bf16.mxu0 0
  %299 = vmatpush1.bf16.msra.mxu0 %v230
  %300 = vmatprep.subr.bf16.mxu0 0
  %301 = vmatpush1.bf16.msra.mxu0 %v231
  %302 = vmatprep.subr.bf16.mxu0 0
  %303 = vmatpush1.bf16.msra.mxu0 %v232
  %304 = vmatprep.subr.bf16.mxu0 0
  %305 = vmatpush1.bf16.msra.mxu0 %v233
  %306 = vmatprep.subr.bf16.mxu0 0
  %307 = vmatpush1.bf16.msra.mxu0 %v234
  %308 = vmatprep.subr.bf16.mxu0 0
  %309 = vmatpush1.bf16.msra.mxu0 %v235
  %310 = vmatprep.subr.bf16.mxu0 0
  %311 = vmatpush1.bf16.msra.mxu0 %v236
  %312 = vmatprep.subr.bf16.mxu0 0
  %313 = vmatpush1.bf16.msra.mxu0 %v237
  %314 = vmatprep.subr.bf16.mxu0 0
  %315 = vmatpush1.bf16.msra.mxu0 %v238
  %316 = vmatprep.subr.bf16.mxu0 0
  %317 = vmatpush1.bf16.msra.mxu0 %v239
  %318 = vmatprep.subr.bf16.mxu0 0
  %319 = vmatpush1.bf16.msra.mxu0 %v240
  %320 = vmatprep.subr.bf16.mxu0 0
  %321 = vmatpush1.bf16.msra.mxu0 %v241
  %322 = vmatprep.mubr.bf16.mxu0 %v91
  %323 = vmatmul.mubr.bf16.gmra.mrb[0].mxu0 %v90
  %v324 = vpop.f32.mrb[0].mxu0
  %v325 = vadd.f32 0.0, %v324
  %v326 = vpop.f32.mrb[0].mxu0
  %v327 = vpop.f32.mrb[0].mxu0
  %v328 = vpop.f32.mrb[0].mxu0
  %329 = vdwg.mxu0
  %330 = vmatprep.subr.bf16.mxu0 0
  %331 = vmatpush1.bf16.msra.mxu0 %v242
  %332 = vmatprep.subr.bf16.mxu0 0
  %333 = vmatpush1.bf16.msra.mxu0 %v243
  %334 = vmatprep.subr.bf16.mxu0 0
  %335 = vmatpush1.bf16.msra.mxu0 %v244
  %336 = vmatprep.subr.bf16.mxu0 0
  %337 = vmatpush1.bf16.msra.mxu0 %v245
  %338 = vmatprep.subr.bf16.mxu0 0
  %339 = vmatpush1.bf16.msra.mxu0 %v246
  %340 = vmatprep.subr.bf16.mxu0 0
  %341 = vmatpush1.bf16.msra.mxu0 %v247
  %342 = vmatprep.subr.bf16.mxu0 0
  %343 = vmatpush1.bf16.msra.mxu0 %v248
  %344 = vmatprep.subr.bf16.mxu0 0
  %345 = vmatpush1.bf16.msra.mxu0 %v249
  %346 = vmatprep.subr.bf16.mxu0 0
  %347 = vmatpush1.bf16.msra.mxu0 %v250
  %348 = vmatprep.subr.bf16.mxu0 0
  %349 = vmatpush1.bf16.msra.mxu0 %v251
  %350 = vmatprep.subr.bf16.mxu0 0
  %351 = vmatpush1.bf16.msra.mxu0 %v252
  %352 = vmatprep.subr.bf16.mxu0 0
  %353 = vmatpush1.bf16.msra.mxu0 %v253
  %354 = vmatprep.subr.bf16.mxu0 0
  %355 = vmatpush1.bf16.msra.mxu0 %v254
  %356 = vmatprep.subr.bf16.mxu0 0
  %357 = vmatpush1.bf16.msra.mxu0 %v255
  %358 = vmatprep.subr.bf16.mxu0 0
  %359 = vmatpush1.bf16.msra.mxu0 %v256
  %360 = vmatprep.subr.bf16.mxu0 0
  %361 = vmatpush1.bf16.msra.mxu0 %v257
  %362 = vmatprep.mubr.bf16.mxu0 %v93
  %363 = vmatmul.mubr.bf16.gmra.mrb[0].mxu0 %v92
  %v364 = vpop.f32.mrb[0].mxu0
  %v365 = vadd.f32 %v325, %v364
  %v366 = vpop.f32.mrb[0].mxu0
  %v367 = vpop.f32.mrb[0].mxu0
  %v368 = vpop.f32.mrb[0].mxu0
  %369 = vdwg.mxu0
  %vm370 = vcmask 523264
  %v371 = vsel %vm370, %v365, 0.0
  %v372 = vrot.slane %v371, 4
  %v373 = vadd.f32 %v371, %v372
  %v374 = vrot.slane %v373, 2
  %v375 = vadd.f32 %v373, %v374
  %v376 = vrot.slane %v375, 1
  %v377 = vadd.f32 %v375, %v376
  %v378 = vmul.f32 %v377, 0.125
  %v379 = vmul.f32 %v365, %v365
  %v380 = vsel %vm370, %v379, 0.0
  %v381 = vrot.slane %v380, 4
  %v382 = vadd.f32 %v380, %v381
  %v383 = vrot.slane %v382, 2
  %v384 = vadd.f32 %v382, %v383
  %v385 = vrot.slane %v384, 1
  %v386 = vadd.f32 %v384, %v385
  %v387 = vmul.f32 %v386, 0.125
  %v388 = vmul.f32 %v378, %v378
  %v389 = vsub.f32 %v387, %v388
  %v390 = vsub.f32 %v365, %v378
  %v391 = vadd.f32 %v389, 1e-05
  %v392 = vrsqrt.pop %v391
  %v393 = vmul.f32 %v390, %v392
  %vm394 = vcmp.gt.f32.partialorder %v393, 0.0
  %v395 = vmul.f32 %v393, 0.2
  %v396 = vsel %vm394, %v393, %v395
  %v397 = vld [vmem:[%s3] sm:$0x3]
  %v398 = vld [vmem:[%s2] sm:$0xff]
  %v399 = vmul.f32 %v396, %v398
  %vm400 = vcmask 64512
  %v402 = vsel %vm400, %v397, 0
  %404 = vmatprep.subr.mxu0 0.0
  %405 = vmatpush1.msra.mxu0 %v399
  %406 = vmatprep.subr.mxu0 0.0
  %407 = vmatpush1.msra.mxu0 0.0
  %408 = vmatprep.subr.mxu0 0.0
  %409 = vmatpush1.msra.mxu0 0.0
  %410 = vmatprep.subr.mxu0 0.0
  %411 = vmatpush1.msra.mxu0 0.0
  %412 = vmatprep.subr.mxu0 0.0
  %413 = vmatpush1.msra.mxu0 0.0
  %414 = vmatprep.subr.mxu0 0.0
  %415 = vmatpush1.msra.mxu0 0.0
  %416 = vmatprep.subr.mxu0 0.0
  %417 = vmatpush1.msra.mxu0 0.0
  %418 = vmatprep.subr.mxu0 0.0
  %419 = vmatpush1.msra.mxu0 0.0
  %420 = vmatprep.subr.mxu0 0.0
  %421 = vmatpush1.msra.mxu0 0.0
  %422 = vmatprep.subr.mxu0 0.0
  %423 = vmatpush1.msra.mxu0 0.0
  %424 = vmatprep.subr.mxu0 0.0
  %425 = vmatpush1.msra.mxu0 0.0
  %426 = vmatprep.subr.mxu0 0.0
  %427 = vmatpush1.msra.mxu0 0.0
  %428 = vmatprep.subr.mxu0 0.0
  %429 = vmatpush1.msra.mxu0 0.0
  %430 = vmatprep.subr.mxu0 0.0
  %431 = vmatpush1.msra.mxu0 0.0
  %432 = vmatprep.subr.mxu0 0.0
  %433 = vmatpush1.msra.mxu0 0.0
  %434 = vmatprep.subr.mxu0 0.0
  %435 = vmatpush1.msra.mxu0 0.0
  %436 = vmatprep.subr.mxu0 0.0
  %437 = vmatpush1.msra.mxu0 0.0
  %438 = vmatprep.subr.mxu0 0.0
  %439 = vmatpush1.msra.mxu0 0.0
  %440 = vmatprep.subr.mxu0 0.0
  %441 = vmatpush1.msra.mxu0 0.0
  %442 = vmatprep.subr.mxu0 0.0
  %443 = vmatpush1.msra.mxu0 0.0
  %444 = vmatprep.subr.mxu0 0.0
  %445 = vmatpush1.msra.mxu0 0.0
  %446 = vmatprep.subr.mxu0 0.0
  %447 = vmatpush1.msra.mxu0 0.0
  %448 = vmatprep.subr.mxu0 0.0
  %449 = vmatpush1.msra.mxu0 0.0
  %450 = vmatprep.subr.mxu0 0.0
  %451 = vmatpush1.msra.mxu0 0.0
  %452 = vmatprep.subr.mxu0 0.0
  %453 = vmatpush1.msra.mxu0 0.0
  %454 = vmatprep.subr.mxu0 0.0
  %455 = vmatpush1.msra.mxu0 0.0
  %456 = vmatprep.subr.mxu0 0.0
  %457 = vmatpush1.msra.mxu0 0.0
  %458 = vmatprep.subr.mxu0 0.0
  %459 = vmatpush1.msra.mxu0 0.0
  %460 = vmatprep.subr.mxu0 0.0
  %461 = vmatpush1.msra.mxu0 0.0
  %462 = vmatprep.subr.mxu0 0.0
  %463 = vmatpush1.msra.mxu0 0.0
  %464 = vmatprep.subr.mxu0 0.0
  %465 = vmatpush1.msra.mxu0 0.0
  %466 = vmatprep.subr.mxu0 0.0
  %467 = vmatpush1.msra.mxu0 0.0
  %468 = vmatprep.mubr.f32.mxu0 0.0
  %469 = vmatmul.mubr.f32.gmra.mrb[0].mxu0 %v402
  %v470 = vpop.f32.mrb[0].mxu0
  %v471 = vadd.f32 0.0, %v470
  %v472 = vpop.f32.mrb[0].mxu0
  %473 = vdwg.mxu0
  %vm474 = vcmask 517120
  %v475 = vsel %vm474, %v471, 0.0
  %476 = vadd.xlane.f32.xlu0 %v475
  %v477 = vpop.xlane.xlu0 %476
  %v478 = vmul.f32 %v477, 0.5
  %v479 = vtanh.pop %v478
  %v480 = vadd.f32 %v479, 1.0
  %v481 = vmul.f32 %v480, 0.5
  %vm482 = vcmask 1024
  %483 = vst.msk [vmem:[%s4] sm:$0x3] %vm482, %v481
  // Predicated region
  $region18: #{discriminator_forward.7} parent=0 // pred_check
    _
  $region19: #{discriminator_forward.7} parent=0 // pred_check_branch
    %485 = sbr.rel (0) target = $region21
  $region20: #{discriminator_forward.7} parent=0 // pred_region
    _
  $region21: #{discriminator_forward.7} parent=0 // pred_fallthru
    _
  // Predicated region
  $region22: #{discriminator_forward.7} parent=0 // pred_check
    _
  $region23: #{discriminator_forward.7} parent=0 // pred_check_branch
    %487 = sbr.rel (0) target = $region25
  $region24: #{discriminator_forward.7} parent=0 // pred_region
    _
  $region25: #{discriminator_forward.7} parent=0 // pred_fallthru
    _

</llo_original>
